<compile_context>
chip_gen: v7x
topology: tpu7x:2x2x1
jax: 0.10.0
libtpu: 0.0.40
codegen_flags: <defaults>
</compile_context>

<pallas_src>
import functools

import jax
import jax.numpy as jnp
from jax.experimental import pallas as pl
from jax.experimental.pallas import tpu as pltpu


def _round_up(x, m):
    return ((x + m - 1) // m) * m


# ----------------------------------------------------------------------------
# Fused kernel: [conv(3x3)+BN+ReLU] * n_blocks  +  1x1 regressor, one image
# per grid step.  All inter-block activations live in VMEM scratch.
# ----------------------------------------------------------------------------
def _fused_kernel(*refs, n_blocks, starts, louts, offs):
    """Ref layout:
       inputs  : p0 (Lout0, K0) bf16,
                 [w_i (K_i, C_i) bf16, shift_i (1, C_i) f32] * n_blocks,
                 mask_i (Lout_i, 1) f32  for i < n_blocks-1,
                 wr (C_last, NR) bf16, br (1, NR) f32
       outputs : o (Lout_last, NR) bf16
       scratch : x_{i+1} (Lin_{i+1}, C_i) f32  for i < n_blocks-1
    """
    pos = 0
    p0_ref = refs[pos]; pos += 1
    wb = refs[pos: pos + 2 * n_blocks]; pos += 2 * n_blocks
    mask_refs = refs[pos: pos + n_blocks - 1]; pos += n_blocks - 1
    wr_ref = refs[pos]
    br_ref = refs[pos + 1]
    o_ref = refs[pos + 2]
    scratch_refs = refs[pos + 3:]

    for i in range(n_blocks):
        w_ref, s_ref = wb[2 * i], wb[2 * i + 1]

        if i == 0:
            # Block-0 patches were pre-assembled on the (tiny) raw input.
            patches = p0_ref[...]                              # (L0, K0) bf16
        else:
            # Assemble (Lout, kh*kw*Cin) patches from static shifted slices of
            # the padded activation scratch; one big-K matmul follows.
            src = scratch_refs[i - 1]
            patches = jnp.concatenate(
                [src[pl.ds(st, louts[i]), :].astype(jnp.bfloat16)
                 for st in starts[i]],
                axis=-1)                                       # (L_i, K_i) bf16

        y = jnp.dot(patches, w_ref[...],
                    preferred_element_type=jnp.float32)        # single MXU matmul
        y = jnp.maximum(y + s_ref[...], 0.0)                   # BN shift + ReLU

        if i + 1 < n_blocks:
            # Zero the next block's padded input scratch, then drop this
            # block's garbage flat columns and write the valid data at the
            # halo offset.  (Uniform Wp makes this a single shifted store.)
            dst = scratch_refs[i]
            dst[...] = jnp.zeros_like(dst)
            dst[pl.ds(offs[i], louts[i]), :] = y * mask_refs[i][...]
        else:
            # Fused 1x1 regressor epilogue (lane-padded to NR=128 for dense
            # stores); bf16 writeback, wrapper slices to n_keypoints.
            out = jnp.dot(y.astype(jnp.bfloat16), wr_ref[...],
                          preferred_element_type=jnp.float32) + br_ref[...]
            o_ref[...] = out.astype(o_ref.dtype)


# ----------------------------------------------------------------------------
# Parameter preparation (constant folds, done once per forward trace)
# ----------------------------------------------------------------------------
def prep_block_params(blk, eps=1e-5):
    w = blk["w"]                                   # (Cout, Cin, kh, kw) torch layout
    Cout, Cin, kh, kw = w.shape
    scale = blk["gamma"] / jnp.sqrt(blk["var"] + eps)            # (Cout,)
    shift = (blk["b"] - blk["mean"]) * scale + blk["beta"]       # (Cout,)
    # (kh*kw*Cin, Cout) with the BN scale folded in, bf16 for the MXU.
    wt = jnp.transpose(w, (2, 3, 1, 0)).reshape(kh * kw * Cin, Cout)
    wt = (wt * scale[None, :]).astype(jnp.bfloat16)
    return wt, shift.reshape(1, Cout).astype(jnp.float32)


def prep_regressor_params(reg_w, reg_b):
    n_k, cin = reg_w.shape[0], reg_w.shape[1]
    nr = _round_up(max(n_k, 1), 128)               # lane-dense padded width
    wr = jnp.transpose(reg_w.reshape(n_k, cin), (1, 0))          # (cin, n_k)
    wr = jnp.pad(wr, ((0, 0), (0, nr - n_k))).astype(jnp.bfloat16)
    br = jnp.pad(reg_b, (0, nr - n_k)).reshape(1, nr).astype(jnp.float32)
    return wr, br, n_k, nr


# ----------------------------------------------------------------------------
# Full forward pass: one fused pallas_call for the whole network
# ----------------------------------------------------------------------------
def pose_regressor_forward(x_nchw, params, config):
    ksizes = config["filter_size"]
    strides = config["stride"]
    pads = config["padding"]
    filters = config["no_filters"]
    n_blocks = len(filters)
    # TODO(synk): stride>1 not supported by the fused flat-layout kernel.
    assert all(s == 1 for s in strides), "fused kernel supports stride 1 only"

    N, C0, H0, W0 = x_nchw.shape

    # Spatial sizes at each block boundary (stride 1).
    Hs, Ws = [H0], [W0]
    for k, p in zip(ksizes, pads):
        Hs.append(Hs[-1] + 2 * p - k + 1)
        Ws.append(Ws[-1] + 2 * p - k + 1)

    # One flat row width for the whole chain, padded to a sublane multiple so
    # the di*Wp tap offsets are aligned.
    Wp = max(_round_up(Ws[i] + 2 * pads[i], 8) for i in range(n_blocks))

    louts = tuple(Hs[i + 1] * Wp for i in range(n_blocks))             # out rows
    lins = tuple((Hs[i] + 2 * pads[i] + 1) * Wp for i in range(n_blocks))
    starts = tuple(tuple(di * Wp + dj
                         for di in range(ksizes[i]) for dj in range(ksizes[i]))
                   for i in range(n_blocks))
    offs = tuple(pads[i + 1] * (Wp + 1) for i in range(n_blocks - 1))

    # ---- fold BN into conv weights, prep regressor -------------------------
    w_list, s_list = [], []
    for blk in params["blocks"]:
        wt, sh = prep_block_params(blk)
        w_list.append(wt)
        s_list.append(sh)
    wr, br, n_k, nr = prep_regressor_params(params["reg_w"], params["reg_b"])

    # ---- block-0 patches assembled by XLA on the tiny raw input ------------
    x = jnp.transpose(x_nchw, (0, 2, 3, 1)).astype(jnp.float32)        # NHWC
    p0 = pads[0]
    xp = jnp.pad(x, ((0, 0), (p0, p0 + 1), (p0, Wp - W0 - p0), (0, 0)))
    xf = xp.reshape(N, -1, C0)
    patches0 = jnp.concatenate([xf[:, s:s + louts[0], :] for s in starts[0]],
                               axis=-1).astype(jnp.bfloat16)           # (N,L0,K0)

    # ---- flat-column validity masks for non-final blocks -------------------
    masks = [((jnp.arange(louts[i]) % Wp) < Ws[i + 1])
             .astype(jnp.float32).reshape(-1, 1)
             for i in range(n_blocks - 1)]

    kernel = functools.partial(_fused_kernel, n_blocks=n_blocks,
                               starts=starts, louts=louts, offs=offs)

    in_specs = [pl.BlockSpec((None, louts[0], patches0.shape[-1]),
                             lambda n: (n, 0, 0))]
    args = [patches0]
    for i in range(n_blocks):
        in_specs.append(pl.BlockSpec(w_list[i].shape, lambda n: (0, 0)))
        in_specs.append(pl.BlockSpec(s_list[i].shape, lambda n: (0, 0)))
        args.extend([w_list[i], s_list[i]])
    for m in masks:
        in_specs.append(pl.BlockSpec(m.shape, lambda n: (0, 0)))
        args.append(m)
    in_specs.append(pl.BlockSpec(wr.shape, lambda n: (0, 0)))
    in_specs.append(pl.BlockSpec(br.shape, lambda n: (0, 0)))
    args.extend([wr, br])

    # Padded-input scratch for every block after the first (f32: unaligned
    # sublane stores of the halo-shifted activation are simplest in 32-bit).
    scratch_shapes = [pltpu.VMEM((lins[i + 1], filters[i]), jnp.float32)
                      for i in range(n_blocks - 1)]

    out_flat = pl.pallas_call(
        kernel,
        out_shape=jax.ShapeDtypeStruct((N, louts[-1], nr), jnp.bfloat16),
        grid=(N,),
        in_specs=in_specs,
        out_specs=pl.BlockSpec((None, louts[-1], nr), lambda n: (n, 0, 0)),
        scratch_shapes=scratch_shapes,
        compiler_params=pltpu.CompilerParams(
            dimension_semantics=("parallel",)),
    )(*args)

    # Drop the flat-layout garbage columns and the regressor lane padding.
    out = out_flat.reshape(N, Hs[-1], Wp, nr)[:, :, :Ws[-1], :n_k]
    return jnp.transpose(out, (0, 3, 1, 2)).astype(jnp.float32)        # NCHW


# ----------------------------------------------------------------------------
# Pure-JAX f32 reference (for validation)
# ----------------------------------------------------------------------------
def reference_forward(x_nchw, params, config, eps=1e-5):
    x = x_nchw.astype(jnp.float32)
    for blk, s, p in zip(params["blocks"], config["stride"], config["padding"]):
        y = jax.lax.conv_general_dilated(
            x, blk["w"], (s, s), [(p, p), (p, p)],
            dimension_numbers=("NCHW", "OIHW", "NCHW"),
            precision=jax.lax.Precision.HIGHEST)
        y = y + blk["b"][None, :, None, None]
        scale = blk["gamma"] / jnp.sqrt(blk["var"] + eps)
        y = ((y - blk["mean"][None, :, None, None]) * scale[None, :, None, None]
             + blk["beta"][None, :, None, None])
        x = jnp.maximum(y, 0.0)
    y = jax.lax.conv_general_dilated(
        x, params["reg_w"], (1, 1), [(0, 0), (0, 0)],
        dimension_numbers=("NCHW", "OIHW", "NCHW"),
        precision=jax.lax.Precision.HIGHEST)
    return y + params["reg_b"][None, :, None, None]


# ----------------------------------------------------------------------------
# Parameter construction (deterministic, synthetic)
# ----------------------------------------------------------------------------
def make_block_params(key, cin, cout, ksz):
    k0, k1, k2, k3, k4, k5 = jax.random.split(key, 6)
    fan_in = cin * ksz * ksz
    bound = 1.0 / jnp.sqrt(fan_in)
    return {
        "w": jax.random.uniform(k0, (cout, cin, ksz, ksz), jnp.float32, -bound, bound),
        "b": jax.random.uniform(k1, (cout,), jnp.float32, -bound, bound),
        "gamma": 1.0 + 0.1 * jax.random.normal(k2, (cout,), jnp.float32),
        "beta": 0.1 * jax.random.normal(k3, (cout,), jnp.float32),
        "mean": 0.1 * jax.random.normal(k4, (cout,), jnp.float32),
        "var": 1.0 + 0.1 * jax.random.uniform(k5, (cout,), jnp.float32),
    }


if __name__ == "__main__":
    # Forward-consistent config: last block has 128 filters because the
    # regressor conv expects 128 input channels.
    config = {
        "no_filters": [32, 128],
        "stride": [1, 1],
        "filter_size": [3, 3],
        "padding": [1, 1],
    }
    in_channels = 4
    n_keypoints = 1
    N, H, W = 2, 16, 16

    root = jax.random.PRNGKey(0)
    keys = jax.random.split(root, len(config["no_filters"]) + 2)

    blocks = []
    cin = in_channels
    for i, (f, k) in enumerate(zip(config["no_filters"], config["filter_size"])):
        blocks.append(make_block_params(keys[i], cin, f, k))
        cin = f
    kr = keys[-2]
    bound = 1.0 / jnp.sqrt(128.0)
    params = {
        "blocks": blocks,
        "reg_w": jax.random.uniform(kr, (n_keypoints, 128, 1, 1),
                                    jnp.float32, -bound, bound),
        "reg_b": jax.random.uniform(jax.random.fold_in(kr, 1), (n_keypoints,),
                                    jnp.float32, -bound, bound),
    }

    x = jax.random.normal(keys[-1], (N, in_channels, H, W), jnp.float32)

    fwd = jax.jit(lambda xx, pp: pose_regressor_forward(xx, pp, config))
    y = jax.block_until_ready(fwd(x, params))
    assert y.shape == (N, n_keypoints, H, W), y.shape
    assert bool(jnp.all(jnp.isfinite(y)))

    # Validate against a pure-JAX f32 reference (relaxed tolerance: bf16 MXU
    # operands with f32 accumulation, bf16 output writeback).
    ref = jax.block_until_ready(reference_forward(x, params, config))
    err = float(jnp.max(jnp.abs(y - ref)))
    scale = float(jnp.max(jnp.abs(ref)))
    assert err <= 5e-2 * max(1.0, scale), (err, scale)

    print("KERNEL_OK")
</pallas_src>

<mosaic_0001>
module attributes {stable_mosaic.version = 11 : i64} {
  func.func @_fused_kernel(%arg0: i32, %arg1: memref<1x384x36xbf16, #tpu.memory_space<vmem>>, %arg2: memref<36x32xbf16, #tpu.memory_space<vmem>>, %arg3: memref<1x32xf32, #tpu.memory_space<vmem>>, %arg4: memref<288x128xbf16, #tpu.memory_space<vmem>>, %arg5: memref<1x128xf32, #tpu.memory_space<vmem>>, %arg6: memref<384x1xf32, #tpu.memory_space<vmem>>, %arg7: memref<128x128xbf16, #tpu.memory_space<vmem>>, %arg8: memref<1x128xf32, #tpu.memory_space<vmem>>, %arg9: memref<1x384x128xbf16, #tpu.memory_space<vmem>>, %arg10: memref<456x32xf32, #tpu.memory_space<vmem>>) attributes {dimension_semantics = [#tpu.dimension_semantics<parallel>], iteration_bounds = array<i64: 2>, scalar_prefetch = 0 : i64, scratch_operands = 1 : i64, tpu.core_type = #tpu.core_type<tc>, window_params = [{transform_indices = @transform_0, window_bounds = array<i64: 1, 384, 36>}, {pipeline_mode = #tpu.pipeline_mode<synchronous>, transform_indices = @transform_1, window_bounds = array<i64: 36, 32>}, {pipeline_mode = #tpu.pipeline_mode<synchronous>, transform_indices = @transform_2, window_bounds = array<i64: 1, 32>}, {pipeline_mode = #tpu.pipeline_mode<synchronous>, transform_indices = @transform_3, window_bounds = array<i64: 288, 128>}, {pipeline_mode = #tpu.pipeline_mode<synchronous>, transform_indices = @transform_4, window_bounds = array<i64: 1, 128>}, {pipeline_mode = #tpu.pipeline_mode<synchronous>, transform_indices = @transform_5, window_bounds = array<i64: 384, 1>}, {pipeline_mode = #tpu.pipeline_mode<synchronous>, transform_indices = @transform_6, window_bounds = array<i64: 128, 128>}, {pipeline_mode = #tpu.pipeline_mode<synchronous>, transform_indices = @transform_7, window_bounds = array<i64: 1, 128>}, {transform_indices = @transform_8, window_bounds = array<i64: 1, 384, 128>}]} {
    %c0 = arith.constant 0 : index
    %c0_0 = arith.constant 0 : index
    %c0_1 = arith.constant 0 : index
    %0 = vector.load %arg1[%c0, %c0_0, %c0_1] : memref<1x384x36xbf16, #tpu.memory_space<vmem>>, vector<1x384x36xbf16>
    %1 = vector.shape_cast %0 : vector<1x384x36xbf16> to vector<384x36xbf16>
    %c0_2 = arith.constant 0 : index
    %c0_3 = arith.constant 0 : index
    %2 = vector.load %arg2[%c0_2, %c0_3] : memref<36x32xbf16, #tpu.memory_space<vmem>>, vector<36x32xbf16>
    %cst = arith.constant dense<0.000000e+00> : vector<384x32xf32>
    %3 = tpu.matmul %1, %2, %cst {dimension_numbers = #tpu.dot_dimension_numbers<[1], [0], [0], [1], [0, 0, 1, 1], [], []>} : vector<384x36xbf16>, vector<36x32xbf16>, vector<384x32xf32> -> vector<384x32xf32>
    %c0_4 = arith.constant 0 : index
    %c0_5 = arith.constant 0 : index
    %4 = vector.load %arg3[%c0_4, %c0_5] : memref<1x32xf32, #tpu.memory_space<vmem>>, vector<1x32xf32>
    %5 = vector.broadcast %4 : vector<1x32xf32> to vector<384x32xf32>
    %6 = arith.addf %3, %5 : vector<384x32xf32>
    %cst_6 = arith.constant 0.000000e+00 : f32
    %7 = vector.broadcast %cst_6 : f32 to vector<384x32xf32>
    %8 = arith.maximumf %6, %7 : vector<384x32xf32>
    %cst_7 = arith.constant 0.000000e+00 : f32
    %9 = vector.broadcast %cst_7 : f32 to vector<456x32xf32>
    %c0_8 = arith.constant 0 : index
    %c0_9 = arith.constant 0 : index
    %10 = vector.load %arg10[%c0_8, %c0_9] : memref<456x32xf32, #tpu.memory_space<vmem>>, vector<456x32xf32>
    tpu.vector_store %arg10[%c0_8, %c0_9], %9 {strides = array<i32>} : memref<456x32xf32, #tpu.memory_space<vmem>>, vector<456x32xf32>,
    %c0_10 = arith.constant 0 : index
    %c0_11 = arith.constant 0 : index
    %11 = vector.load %arg6[%c0_10, %c0_11] : memref<384x1xf32, #tpu.memory_space<vmem>>, vector<384x1xf32>
    %12 = vector.broadcast %11 : vector<384x1xf32> to vector<384x32xf32>
    %13 = arith.mulf %8, %12 : vector<384x32xf32>
    %c25 = arith.constant 25 : index
    %c0_12 = arith.constant 0 : index
    %14 = vector.load %arg10[%c25, %c0_12] : memref<456x32xf32, #tpu.memory_space<vmem>>, vector<384x32xf32>
    tpu.vector_store %arg10[%c25, %c0_12], %13 {strides = array<i32>} : memref<456x32xf32, #tpu.memory_space<vmem>>, vector<384x32xf32>,
    %c0_13 = arith.constant 0 : index
    %c0_14 = arith.constant 0 : index
    %15 = vector.load %arg10[%c0_13, %c0_14] : memref<456x32xf32, #tpu.memory_space<vmem>>, vector<384x32xf32>
    %16 = arith.truncf %15 : vector<384x32xf32> to vector<384x32xbf16>
    %c1 = arith.constant 1 : index
    %c0_15 = arith.constant 0 : index
    %17 = vector.load %arg10[%c1, %c0_15] : memref<456x32xf32, #tpu.memory_space<vmem>>, vector<384x32xf32>
    %18 = arith.truncf %17 : vector<384x32xf32> to vector<384x32xbf16>
    %c2 = arith.constant 2 : index
    %c0_16 = arith.constant 0 : index
    %19 = vector.load %arg10[%c2, %c0_16] : memref<456x32xf32, #tpu.memory_space<vmem>>, vector<384x32xf32>
    %20 = arith.truncf %19 : vector<384x32xf32> to vector<384x32xbf16>
    %c24 = arith.constant 24 : index
    %c0_17 = arith.constant 0 : index
    %21 = vector.load %arg10[%c24, %c0_17] : memref<456x32xf32, #tpu.memory_space<vmem>>, vector<384x32xf32>
    %22 = arith.truncf %21 : vector<384x32xf32> to vector<384x32xbf16>
    %c25_18 = arith.constant 25 : index
    %c0_19 = arith.constant 0 : index
    %23 = vector.load %arg10[%c25_18, %c0_19] : memref<456x32xf32, #tpu.memory_space<vmem>>, vector<384x32xf32>
    %24 = arith.truncf %23 : vector<384x32xf32> to vector<384x32xbf16>
    %c26 = arith.constant 26 : index
    %c0_20 = arith.constant 0 : index
    %25 = vector.load %arg10[%c26, %c0_20] : memref<456x32xf32, #tpu.memory_space<vmem>>, vector<384x32xf32>
    %26 = arith.truncf %25 : vector<384x32xf32> to vector<384x32xbf16>
    %c48 = arith.constant 48 : index
    %c0_21 = arith.constant 0 : index
    %27 = vector.load %arg10[%c48, %c0_21] : memref<456x32xf32, #tpu.memory_space<vmem>>, vector<384x32xf32>
    %28 = arith.truncf %27 : vector<384x32xf32> to vector<384x32xbf16>
    %c49 = arith.constant 49 : index
    %c0_22 = arith.constant 0 : index
    %29 = vector.load %arg10[%c49, %c0_22] : memref<456x32xf32, #tpu.memory_space<vmem>>, vector<384x32xf32>
    %30 = arith.truncf %29 : vector<384x32xf32> to vector<384x32xbf16>
    %c50 = arith.constant 50 : index
    %c0_23 = arith.constant 0 : index
    %31 = vector.load %arg10[%c50, %c0_23] : memref<456x32xf32, #tpu.memory_space<vmem>>, vector<384x32xf32>
    %32 = arith.truncf %31 : vector<384x32xf32> to vector<384x32xbf16>
    %33 = tpu.concatenate %16, %18, %20, %22, %24, %26, %28, %30, %32 in 1 : vector<384x32xbf16>, vector<384x32xbf16>, vector<384x32xbf16>, vector<384x32xbf16>, vector<384x32xbf16>, vector<384x32xbf16>, vector<384x32xbf16>, vector<384x32xbf16>, vector<384x32xbf16> -> vector<384x288xbf16>
    %c0_24 = arith.constant 0 : index
    %c0_25 = arith.constant 0 : index
    %34 = vector.load %arg4[%c0_24, %c0_25] : memref<288x128xbf16, #tpu.memory_space<vmem>>, vector<288x128xbf16>
    %cst_26 = arith.constant dense<0.000000e+00> : vector<384x128xf32>
    %35 = tpu.matmul %33, %34, %cst_26 {dimension_numbers = #tpu.dot_dimension_numbers<[1], [0], [0], [1], [0, 0, 1, 1], [], []>} : vector<384x288xbf16>, vector<288x128xbf16>, vector<384x128xf32> -> vector<384x128xf32>
    %c0_27 = arith.constant 0 : index
    %c0_28 = arith.constant 0 : index
    %36 = vector.load %arg5[%c0_27, %c0_28] : memref<1x128xf32, #tpu.memory_space<vmem>>, vector<1x128xf32>
    %37 = vector.broadcast %36 : vector<1x128xf32> to vector<384x128xf32>
    %38 = arith.addf %35, %37 : vector<384x128xf32>
    %cst_29 = arith.constant 0.000000e+00 : f32
    %39 = vector.broadcast %cst_29 : f32 to vector<384x128xf32>
    %40 = arith.maximumf %38, %39 : vector<384x128xf32>
    %41 = arith.truncf %40 : vector<384x128xf32> to vector<384x128xbf16>
    %c0_30 = arith.constant 0 : index
    %c0_31 = arith.constant 0 : index
    %42 = vector.load %arg7[%c0_30, %c0_31] : memref<128x128xbf16, #tpu.memory_space<vmem>>, vector<128x128xbf16>
    %cst_32 = arith.constant dense<0.000000e+00> : vector<384x128xf32>
    %43 = tpu.matmul %41, %42, %cst_32 {dimension_numbers = #tpu.dot_dimension_numbers<[1], [0], [0], [1], [0, 0, 1, 1], [], []>} : vector<384x128xbf16>, vector<128x128xbf16>, vector<384x128xf32> -> vector<384x128xf32>
    %c0_33 = arith.constant 0 : index
    %c0_34 = arith.constant 0 : index
    %44 = vector.load %arg8[%c0_33, %c0_34] : memref<1x128xf32, #tpu.memory_space<vmem>>, vector<1x128xf32>
    %45 = vector.broadcast %44 : vector<1x128xf32> to vector<384x128xf32>
    %46 = arith.addf %43, %45 : vector<384x128xf32>
    %47 = arith.truncf %46 : vector<384x128xf32> to vector<384x128xbf16>
    %c0_35 = arith.constant 0 : index
    %c0_36 = arith.constant 0 : index
    %c0_37 = arith.constant 0 : index
    %48 = vector.load %arg9[%c0_35, %c0_36, %c0_37] : memref<1x384x128xbf16, #tpu.memory_space<vmem>>, vector<1x384x128xbf16>
    %49 = vector.shape_cast %48 : vector<1x384x128xbf16> to vector<384x128xbf16>
    %50 = vector.shape_cast %47 : vector<384x128xbf16> to vector<1x384x128xbf16>
    tpu.vector_store %arg9[%c0_35, %c0_36, %c0_37], %50 {strides = array<i32>} : memref<1x384x128xbf16, #tpu.memory_space<vmem>>, vector<1x384x128xbf16>,
    return
  }
  func.func @transform_0(%arg0: i32) -> (i32, i32, i32) {
    %c0_i32 = arith.constant 0 : i32
    %c0_i32_0 = arith.constant 0 : i32
    %c0_i32_1 = arith.constant 0 : i32
    return %arg0, %c0_i32, %c0_i32_0 : i32, i32, i32
  }
  func.func @transform_1(%arg0: i32) -> (i32, i32) {
    %c0_i32 = arith.constant 0 : i32
    %c0_i32_0 = arith.constant 0 : i32
    %c0_i32_1 = arith.constant 0 : i32
    return %c0_i32, %c0_i32_0 : i32, i32
  }
  func.func @transform_2(%arg0: i32) -> (i32, i32) {
    %c0_i32 = arith.constant 0 : i32
    %c0_i32_0 = arith.constant 0 : i32
    %c0_i32_1 = arith.constant 0 : i32
    return %c0_i32, %c0_i32_0 : i32, i32
  }
  func.func @transform_3(%arg0: i32) -> (i32, i32) {
    %c0_i32 = arith.constant 0 : i32
    %c0_i32_0 = arith.constant 0 : i32
    %c0_i32_1 = arith.constant 0 : i32
    return %c0_i32, %c0_i32_0 : i32, i32
  }
  func.func @transform_4(%arg0: i32) -> (i32, i32) {
    %c0_i32 = arith.constant 0 : i32
    %c0_i32_0 = arith.constant 0 : i32
    %c0_i32_1 = arith.constant 0 : i32
    return %c0_i32, %c0_i32_0 : i32, i32
  }
  func.func @transform_5(%arg0: i32) -> (i32, i32) {
    %c0_i32 = arith.constant 0 : i32
    %c0_i32_0 = arith.constant 0 : i32
    %c0_i32_1 = arith.constant 0 : i32
    return %c0_i32, %c0_i32_0 : i32, i32
  }
  func.func @transform_6(%arg0: i32) -> (i32, i32) {
    %c0_i32 = arith.constant 0 : i32
    %c0_i32_0 = arith.constant 0 : i32
    %c0_i32_1 = arith.constant 0 : i32
    return %c0_i32, %c0_i32_0 : i32, i32
  }
  func.func @transform_7(%arg0: i32) -> (i32, i32) {
    %c0_i32 = arith.constant 0 : i32
    %c0_i32_0 = arith.constant 0 : i32
    %c0_i32_1 = arith.constant 0 : i32
    return %c0_i32, %c0_i32_0 : i32, i32
  }
  func.func @transform_8(%arg0: i32) -> (i32, i32, i32) {
    %c0_i32 = arith.constant 0 : i32
    %c0_i32_0 = arith.constant 0 : i32
    %c0_i32_1 = arith.constant 0 : i32
    return %arg0, %c0_i32, %c0_i32_0 : i32, i32, i32
  }
}

</mosaic_0001>

<llo_original>
// kernel: _lambda_.1
$region0: #{_lambda_.1}
  #allocation0 [shape = 'u32[]', space=smem, size = 0x4, offset = 0x4, fixed_abs, tag = 'smem constant byte address 0x4 - core index']
  #allocation1 [shape = 'u32[144,128]{1,0:T(1,128)}', space=vmem, size = 0x12000, scoped, tag = 'internal scratch']
  #allocation2 [shape = 'f32[456,32]{1,0:T(8,128)}', space=vmem, size = 0x39000, scoped, tag = 'scratch operand']
  %s0 = inlined_call_operand.vmem [shape: bf16[2,384,36], index: 0, kind: input, shape index: {}]
  %s1 = inlined_call_operand.vmem [shape: bf16[36,32], index: 1, kind: input, shape index: {}]
  %s2 = inlined_call_operand.vmem [shape: f32[1,32], index: 2, kind: input, shape index: {}]
  %s3 = inlined_call_operand.vmem [shape: bf16[288,128], index: 3, kind: input, shape index: {}]
  %s4 = inlined_call_operand.vmem [shape: f32[1,128], index: 4, kind: input, shape index: {}]
  %s5 = inlined_call_operand.vmem [shape: f32[384,1], index: 5, kind: input, shape index: {}]
  %s6 = inlined_call_operand.vmem [shape: bf16[128,128], index: 6, kind: input, shape index: {}]
  %s7 = inlined_call_operand.vmem [shape: f32[1,128], index: 7, kind: input, shape index: {}]
  %s8 = inlined_call_operand.vmem [shape: bf16[2,384,128], index: 8, kind: output, shape index: {}]
  %s9 = sld [smem:[#allocation0]]
  $region65: #{_lambda_.1} parent=0
    _
  %s11 = ssub.s32 1, %s9
  %s12 = scalar_select 0, %s11, %s9
  loop: start=0, step=1, limit=4
  $region2: #{_lambda_.1} parent=0 // loop_pre_header
    _
  $region3: #{_lambda_.1} parent=0 // loop_header
    %s14 = sphi 0, %s18
    %p15 = scmp.ge.s32.totalorder %s14, 4
    %s24 = sphi 0, %s26
    %s27 = sphi 0, %s24
    %s28 = sphi 0, %s27
    %s44 = sphi 0, %s28
    %s48 = sphi 0, %s48
    %s50 = sphi 0, %s48
    %s51 = sphi 0, %s50
    %s65 = sphi 0, %s51
    %s69 = sphi 0, %s69
    %s71 = sphi 0, %s69
    %s72 = sphi 0, %s71
    %s86 = sphi 0, %s72
    %s90 = sphi 0, %s90
    %s92 = sphi 0, %s90
    %s93 = sphi 0, %s92
    %s107 = sphi 0, %s93
    %s111 = sphi 0, %s111
    %s113 = sphi 0, %s111
    %s114 = sphi 0, %s113
    %s128 = sphi 0, %s114
    %s132 = sphi 0, %s132
    %s134 = sphi 0, %s132
    %s135 = sphi 0, %s134
    %s149 = sphi 0, %s135
    %s153 = sphi 0, %s153
    %s155 = sphi 0, %s153
    %s156 = sphi 0, %s155
    %s170 = sphi 0, %s156
    %s174 = sphi 0, %s174
    %s176 = sphi 0, %s174
    %s177 = sphi 0, %s176
    %s191 = sphi 0, %s177
    %s197 = sphi 0, %s199
    %s200 = sphi 0, %s197
    %s201 = sphi 0, %s200
    %s217 = sphi 0, %s201
  $region4: #{_lambda_.1} parent=0 // loop_header_branch
    %17 = sbr.rel (%p15) target = $region8
  $region5: #{_lambda_.1} parent=0 // loop_body
    %s19 = ssub.s32 %s14, 1
    %s20 = ssub.s32 %s14, 2
    %s21 = sadd.s32 %s14, 1
    %s22 = ssub.s32 %s14, %s21
    %p23 = scmp.eq.s32.totalorder %s22, 0
    %s25 = sadd.s32 %s24, 1
    %s26 = scalar_select %p23, %s24, %s25
    %p29 = pneg %p23
    %p30 = scmp.eq.s32.totalorder %s14, 1
    %p31 = por %p29, %p30
    %p32 = scmp.ne.s32.totalorder %s24, %s27
    %p33 = scmp.eq.s32.totalorder %s14, 0
    %p34 = por %p32, %p33
    %p35 = scmp.ne.s32.totalorder %s24, %s27
    %p36 = scmp.eq.s32.totalorder %s19, 1
    %p37 = por %p35, %p36
    %p38 = scmp.ne.s32.totalorder %s27, %s28
    %p39 = scmp.eq.s32.totalorder %s19, 0
    %p40 = por %p38, %p39
    %p41 = scmp.ne.s32.totalorder %s27, %s28
    %p42 = scmp.eq.s32.totalorder %s20, 1
    %p43 = por %p41, %p42
    %p45 = scmp.ne.s32.totalorder %s28, %s44
    %p46 = scmp.eq.s32.totalorder %s20, 0
    %p47 = por %p45, %p46
    %s49 = sadd.s32 %s48, 1
    %p52 = scmp.eq.s32.totalorder %s14, 1
    %p53 = scmp.ne.s32.totalorder %s48, %s50
    %p54 = scmp.eq.s32.totalorder %s14, 0
    %p55 = por %p53, %p54
    %p56 = scmp.ne.s32.totalorder %s48, %s50
    %p57 = scmp.eq.s32.totalorder %s19, 1
    %p58 = por %p56, %p57
    %p59 = scmp.ne.s32.totalorder %s50, %s51
    %p60 = scmp.eq.s32.totalorder %s19, 0
    %p61 = por %p59, %p60
    %p62 = scmp.ne.s32.totalorder %s50, %s51
    %p63 = scmp.eq.s32.totalorder %s20, 1
    %p64 = por %p62, %p63
    %p66 = scmp.ne.s32.totalorder %s51, %s65
    %p67 = scmp.eq.s32.totalorder %s20, 0
    %p68 = por %p66, %p67
    %s70 = sadd.s32 %s69, 1
    %p73 = scmp.eq.s32.totalorder %s14, 1
    %p74 = scmp.ne.s32.totalorder %s69, %s71
    %p75 = scmp.eq.s32.totalorder %s14, 0
    %p76 = por %p74, %p75
    %p77 = scmp.ne.s32.totalorder %s69, %s71
    %p78 = scmp.eq.s32.totalorder %s19, 1
    %p79 = por %p77, %p78
    %p80 = scmp.ne.s32.totalorder %s71, %s72
    %p81 = scmp.eq.s32.totalorder %s19, 0
    %p82 = por %p80, %p81
    %p83 = scmp.ne.s32.totalorder %s71, %s72
    %p84 = scmp.eq.s32.totalorder %s20, 1
    %p85 = por %p83, %p84
    %p87 = scmp.ne.s32.totalorder %s72, %s86
    %p88 = scmp.eq.s32.totalorder %s20, 0
    %p89 = por %p87, %p88
    %s91 = sadd.s32 %s90, 1
    %p94 = scmp.eq.s32.totalorder %s14, 1
    %p95 = scmp.ne.s32.totalorder %s90, %s92
    %p96 = scmp.eq.s32.totalorder %s14, 0
    %p97 = por %p95, %p96
    %p98 = scmp.ne.s32.totalorder %s90, %s92
    %p99 = scmp.eq.s32.totalorder %s19, 1
    %p100 = por %p98, %p99
    %p101 = scmp.ne.s32.totalorder %s92, %s93
    %p102 = scmp.eq.s32.totalorder %s19, 0
    %p103 = por %p101, %p102
    %p104 = scmp.ne.s32.totalorder %s92, %s93
    %p105 = scmp.eq.s32.totalorder %s20, 1
    %p106 = por %p104, %p105
    %p108 = scmp.ne.s32.totalorder %s93, %s107
    %p109 = scmp.eq.s32.totalorder %s20, 0
    %p110 = por %p108, %p109
    %s112 = sadd.s32 %s111, 1
    %p115 = scmp.eq.s32.totalorder %s14, 1
    %p116 = scmp.ne.s32.totalorder %s111, %s113
    %p117 = scmp.eq.s32.totalorder %s14, 0
    %p118 = por %p116, %p117
    %p119 = scmp.ne.s32.totalorder %s111, %s113
    %p120 = scmp.eq.s32.totalorder %s19, 1
    %p121 = por %p119, %p120
    %p122 = scmp.ne.s32.totalorder %s113, %s114
    %p123 = scmp.eq.s32.totalorder %s19, 0
    %p124 = por %p122, %p123
    %p125 = scmp.ne.s32.totalorder %s113, %s114
    %p126 = scmp.eq.s32.totalorder %s20, 1
    %p127 = por %p125, %p126
    %p129 = scmp.ne.s32.totalorder %s114, %s128
    %p130 = scmp.eq.s32.totalorder %s20, 0
    %p131 = por %p129, %p130
    %s133 = sadd.s32 %s132, 1
    %p136 = scmp.eq.s32.totalorder %s14, 1
    %p137 = scmp.ne.s32.totalorder %s132, %s134
    %p138 = scmp.eq.s32.totalorder %s14, 0
    %p139 = por %p137, %p138
    %p140 = scmp.ne.s32.totalorder %s132, %s134
    %p141 = scmp.eq.s32.totalorder %s19, 1
    %p142 = por %p140, %p141
    %p143 = scmp.ne.s32.totalorder %s134, %s135
    %p144 = scmp.eq.s32.totalorder %s19, 0
    %p145 = por %p143, %p144
    %p146 = scmp.ne.s32.totalorder %s134, %s135
    %p147 = scmp.eq.s32.totalorder %s20, 1
    %p148 = por %p146, %p147
    %p150 = scmp.ne.s32.totalorder %s135, %s149
    %p151 = scmp.eq.s32.totalorder %s20, 0
    %p152 = por %p150, %p151
    %s154 = sadd.s32 %s153, 1
    %p157 = scmp.eq.s32.totalorder %s14, 1
    %p158 = scmp.ne.s32.totalorder %s153, %s155
    %p159 = scmp.eq.s32.totalorder %s14, 0
    %p160 = por %p158, %p159
    %p161 = scmp.ne.s32.totalorder %s153, %s155
    %p162 = scmp.eq.s32.totalorder %s19, 1
    %p163 = por %p161, %p162
    %p164 = scmp.ne.s32.totalorder %s155, %s156
    %p165 = scmp.eq.s32.totalorder %s19, 0
    %p166 = por %p164, %p165
    %p167 = scmp.ne.s32.totalorder %s155, %s156
    %p168 = scmp.eq.s32.totalorder %s20, 1
    %p169 = por %p167, %p168
    %p171 = scmp.ne.s32.totalorder %s156, %s170
    %p172 = scmp.eq.s32.totalorder %s20, 0
    %p173 = por %p171, %p172
    %s175 = sadd.s32 %s174, 1
    %p178 = scmp.eq.s32.totalorder %s14, 1
    %p179 = scmp.ne.s32.totalorder %s174, %s176
    %p180 = scmp.eq.s32.totalorder %s14, 0
    %p181 = por %p179, %p180
    %p182 = scmp.ne.s32.totalorder %s174, %s176
    %p183 = scmp.eq.s32.totalorder %s19, 1
    %p184 = por %p182, %p183
    %p185 = scmp.ne.s32.totalorder %s176, %s177
    %p186 = scmp.eq.s32.totalorder %s19, 0
    %p187 = por %p185, %p186
    %p188 = scmp.ne.s32.totalorder %s176, %s177
    %p189 = scmp.eq.s32.totalorder %s20, 1
    %p190 = por %p188, %p189
    %p192 = scmp.ne.s32.totalorder %s177, %s191
    %p193 = scmp.eq.s32.totalorder %s20, 0
    %p194 = por %p192, %p193
    %s195 = ssub.s32 %s14, %s21
    %p196 = scmp.eq.s32.totalorder %s195, 0
    %s198 = sadd.s32 %s197, 1
    %s199 = scalar_select %p196, %s197, %s198
    %p202 = pneg %p196
    %p203 = scmp.eq.s32.totalorder %s14, 1
    %p204 = por %p202, %p203
    %p205 = scmp.ne.s32.totalorder %s197, %s200
    %p206 = scmp.eq.s32.totalorder %s14, 0
    %p207 = por %p205, %p206
    %p208 = scmp.ne.s32.totalorder %s197, %s200
    %p209 = scmp.eq.s32.totalorder %s19, 1
    %p210 = por %p208, %p209
    %p211 = scmp.ne.s32.totalorder %s200, %s201
    %p212 = scmp.eq.s32.totalorder %s19, 0
    %p213 = por %p211, %p212
    %p214 = scmp.ne.s32.totalorder %s200, %s201
    %p215 = scmp.eq.s32.totalorder %s20, 1
    %p216 = por %p214, %p215
    %p218 = scmp.ne.s32.totalorder %s201, %s217
    %p219 = scmp.eq.s32.totalorder %s20, 0
    %p220 = por %p218, %p219
    %p221 = scmp.le.s32.totalorder 1, %s14
    %p222 = scmp.lt.s32.totalorder %s14, 3
    %p223 = pnand %p221, %p222
    %p224 = pneg %p223
    // Predicated region
    $region9: #{_lambda_.1} parent=5 // pred_check
      _
    $region10: #{_lambda_.1} parent=5 // pred_check_branch
      %226 = sbr.rel (%p223) target = $region12
    $region11: #{_lambda_.1} parent=5 // pred_region
      %s227 = ssub.s32 %s14, 1
      // Predicated region
      $region13: #{_lambda_.1} parent=11 // pred_check
        %p228 = pneg %p61
      $region14: #{_lambda_.1} parent=11 // pred_check_branch
        %230 = sbr.rel (%p228) target = $region16
      $region15: #{_lambda_.1} parent=11 // pred_region
        _
      $region16: #{_lambda_.1} parent=11 // pred_fallthru
        _
      // Predicated region
      $region17: #{_lambda_.1} parent=11 // pred_check
        %p231 = pneg %p82
      $region18: #{_lambda_.1} parent=11 // pred_check_branch
        %233 = sbr.rel (%p231) target = $region20
      $region19: #{_lambda_.1} parent=11 // pred_region
        _
      $region20: #{_lambda_.1} parent=11 // pred_fallthru
        _
      // Predicated region
      $region21: #{_lambda_.1} parent=11 // pred_check
        %p234 = pneg %p103
      $region22: #{_lambda_.1} parent=11 // pred_check_branch
        %236 = sbr.rel (%p234) target = $region24
      $region23: #{_lambda_.1} parent=11 // pred_region
        _
      $region24: #{_lambda_.1} parent=11 // pred_fallthru
        _
      // Predicated region
      $region25: #{_lambda_.1} parent=11 // pred_check
        %p237 = pneg %p124
      $region26: #{_lambda_.1} parent=11 // pred_check_branch
        %239 = sbr.rel (%p237) target = $region28
      $region27: #{_lambda_.1} parent=11 // pred_region
        _
      $region28: #{_lambda_.1} parent=11 // pred_fallthru
        _
      // Predicated region
      $region29: #{_lambda_.1} parent=11 // pred_check
        %p240 = pneg %p145
      $region30: #{_lambda_.1} parent=11 // pred_check_branch
        %242 = sbr.rel (%p240) target = $region32
      $region31: #{_lambda_.1} parent=11 // pred_region
        _
      $region32: #{_lambda_.1} parent=11 // pred_fallthru
        _
      // Predicated region
      $region33: #{_lambda_.1} parent=11 // pred_check
        %p243 = pneg %p166
      $region34: #{_lambda_.1} parent=11 // pred_check_branch
        %245 = sbr.rel (%p243) target = $region36
      $region35: #{_lambda_.1} parent=11 // pred_region
        _
      $region36: #{_lambda_.1} parent=11 // pred_fallthru
        _
      // Predicated region
      $region37: #{_lambda_.1} parent=11 // pred_check
        %p246 = pneg %p187
      $region38: #{_lambda_.1} parent=11 // pred_check_branch
        %248 = sbr.rel (%p246) target = $region40
      $region39: #{_lambda_.1} parent=11 // pred_region
        _
      $region40: #{_lambda_.1} parent=11 // pred_fallthru
        _
    $region12: #{_lambda_.1} parent=5 // pred_fallthru
      _
    %p249 = scmp.lt.s32.totalorder %s14, 2
    // Predicated region
    $region41: #{_lambda_.1} parent=5 // pred_check
      %p250 = pneg %p249
    $region42: #{_lambda_.1} parent=5 // pred_check_branch
      %252 = sbr.rel (%p250) target = $region44
    $region43: #{_lambda_.1} parent=5 // pred_region
      // Predicated region
      $region45: #{_lambda_.1} parent=43 // pred_check
        %p253 = pneg %p34
      $region46: #{_lambda_.1} parent=43 // pred_check_branch
        %255 = sbr.rel (%p253) target = $region48
      $region47: #{_lambda_.1} parent=43 // pred_region
        %p256 = scmp.lt.s32.totalorder %s14, 1
        %s257 = scalar_select %p256, %s14, 1
        %s258 = smul.addr %s257, 48
        %s259 = smul.addr %s258, 4
        %s260 = scalar_lea.vmem %s0, %s259
      $region48: #{_lambda_.1} parent=43 // pred_fallthru
        _
    $region44: #{_lambda_.1} parent=5 // pred_fallthru
      _
    %p261 = scmp.le.s32.totalorder 1, %s14
    %p262 = scmp.lt.s32.totalorder %s14, 3
    %p263 = pnand %p261, %p262
    %p264 = pneg %p263
    // Predicated region
    $region49: #{_lambda_.1} parent=5 // pred_check
      _
    $region50: #{_lambda_.1} parent=5 // pred_check_branch
      %266 = sbr.rel (%p263) target = $region52
    $region51: #{_lambda_.1} parent=5 // pred_region
      %s267 = ssub.s32 %s14, 1
      %p268 = scmp.lt.s32.totalorder %s19, 1
      %s269 = scalar_select %p268, %s19, 1
      %s270 = smul.addr %s269, 48
      %s271 = smul.addr %s270, 4
      %s272 = scalar_lea.vmem %s0, %s271
      %p273 = pneg %p40
      %p274 = pneg %p37
      %p275 = pneg %p61
      %p276 = pneg %p58
      %p277 = pneg %p82
      %p278 = pneg %p79
      %p279 = pneg %p103
      %p280 = pneg %p100
      %p281 = pneg %p124
      %p282 = pneg %p121
      %p283 = pneg %p145
      %p284 = pneg %p142
      %p285 = pneg %p166
      %p286 = pneg %p163
      %p287 = pneg %p187
      %p288 = pneg %p184
      %p289 = pneg %p213
      %p290 = pneg %p210
      %p291 = scmp.lt.s32.totalorder %s19, 1
      %s292 = scalar_select %p291, %s19, 1
      %s293 = smul.addr %s292, 48
      %s294 = smul.addr %s293, 4
      %s295 = scalar_lea.vmem %s8, %s294
      %p296 = scmp.lt.s32.totalorder %s19, 1
      %s297 = scalar_select %p296, %s19, 1
      %s298 = smul.addr %s297, 48
      %s299 = smul.addr %s298, 4
      %s300 = scalar_lea.vmem %s0, %s299
      %p301 = scmp.lt.s32.totalorder %s19, 1
      %s302 = scalar_select %p301, %s19, 1
      %s303 = smul.addr %s302, 48
      %s304 = smul.addr %s303, 4
      %s305 = scalar_lea.vmem %s8, %s304
      %v307 = vld [vmem:[%s300] sm:$0xf]
      %v308 = vld [vmem:[%s300 + $0x4] sm:$0xf]
      %v309 = vld [vmem:[%s300 + $0x8] sm:$0xf]
      %v310 = vld [vmem:[%s300 + $0xc] sm:$0xf]
      %v311 = vld [vmem:[%s300 + $0x10] sm:$0xf]
      %v312 = vld [vmem:[%s300 + $0x14] sm:$0xf]
      %v313 = vld [vmem:[%s300 + $0x18] sm:$0xf]
      %v314 = vld [vmem:[%s300 + $0x1c] sm:$0xf]
      %v315 = vld [vmem:[%s300 + $0x20] sm:$0xf]
      %v316 = vld [vmem:[%s300 + $0x24] sm:$0xf]
      %v317 = vld [vmem:[%s300 + $0x28] sm:$0xf]
      %v318 = vld [vmem:[%s300 + $0x2c] sm:$0xf]
      %v319 = vld [vmem:[%s300 + $0x30] sm:$0xf]
      %v320 = vld [vmem:[%s300 + $0x34] sm:$0xf]
      %v321 = vld [vmem:[%s300 + $0x38] sm:$0xf]
      %v322 = vld [vmem:[%s300 + $0x3c] sm:$0xf]
      %v323 = vld [vmem:[%s300 + $0x40] sm:$0xf]
      %v324 = vld [vmem:[%s300 + $0x44] sm:$0xf]
      %v325 = vld [vmem:[%s300 + $0x48] sm:$0xf]
      %v326 = vld [vmem:[%s300 + $0x4c] sm:$0xf]
      %v327 = vld [vmem:[%s300 + $0x50] sm:$0xf]
      %v328 = vld [vmem:[%s300 + $0x54] sm:$0xf]
      %v329 = vld [vmem:[%s300 + $0x58] sm:$0xf]
      %v330 = vld [vmem:[%s300 + $0x5c] sm:$0xf]
      %v331 = vld [vmem:[%s300 + $0x60] sm:$0xf]
      %v332 = vld [vmem:[%s300 + $0x64] sm:$0xf]
      %v333 = vld [vmem:[%s300 + $0x68] sm:$0xf]
      %v334 = vld [vmem:[%s300 + $0x6c] sm:$0xf]
      %v335 = vld [vmem:[%s300 + $0x70] sm:$0xf]
      %v336 = vld [vmem:[%s300 + $0x74] sm:$0xf]
      %v337 = vld [vmem:[%s300 + $0x78] sm:$0xf]
      %v338 = vld [vmem:[%s300 + $0x7c] sm:$0xf]
      %v339 = vld [vmem:[%s300 + $0x80] sm:$0xf]
      %v340 = vld [vmem:[%s300 + $0x84] sm:$0xf]
      %v341 = vld [vmem:[%s300 + $0x88] sm:$0xf]
      %v342 = vld [vmem:[%s300 + $0x8c] sm:$0xf]
      %v343 = vld [vmem:[%s300 + $0x90] sm:$0xf]
      %v344 = vld [vmem:[%s300 + $0x94] sm:$0xf]
      %v345 = vld [vmem:[%s300 + $0x98] sm:$0xf]
      %v346 = vld [vmem:[%s300 + $0x9c] sm:$0xf]
      %v347 = vld [vmem:[%s300 + $0xa0] sm:$0xf]
      %v348 = vld [vmem:[%s300 + $0xa4] sm:$0xf]
      %v349 = vld [vmem:[%s300 + $0xa8] sm:$0xf]
      %v350 = vld [vmem:[%s300 + $0xac] sm:$0xf]
      %v351 = vld [vmem:[%s300 + $0xb0] sm:$0xf]
      %v352 = vld [vmem:[%s300 + $0xb4] sm:$0xf]
      %v353 = vld [vmem:[%s300 + $0xb8] sm:$0xf]
      %v354 = vld [vmem:[%s300 + $0xbc] sm:$0xf]
      %v355 = vld [vmem:[%s1] sm:$0xf]
      %v356 = vld [vmem:[%s1 + $0x4] sm:$0xf]
      %v357 = vld [vmem:[%s1 + $0x8] sm:$0xf]
      %v358 = vld [vmem:[%s1 + $0xc] sm:$0xf]
      %v359 = vld [vmem:[%s1 + $0x10] sm:$0x3]
      %v360 = vld [vmem:[%s2] sm:$0x1]
      %v362 = vlaneseq
      %v363 = vshrl.u32 %v362, 7
      %v364 = vsub.s32 0, %v363
      %v365 = vrot.slane %v360, %v364
      %v415 = vunpack.c.l.b16 %v307
      %v416 = vunpack.c.l.b16 %v308
      %v417 = vunpack.c.l.b16 %v309
      %v418 = vunpack.c.l.b16 %v310
      %v419 = vunpack.c.l.b16 %v311
      %v420 = vunpack.c.l.b16 %v312
      %v421 = vunpack.c.l.b16 %v313
      %v422 = vunpack.c.l.b16 %v314
      %v423 = vunpack.c.l.b16 %v315
      %v424 = vunpack.c.l.b16 %v316
      %v425 = vunpack.c.l.b16 %v317
      %v426 = vunpack.c.l.b16 %v318
      %v427 = vunpack.c.l.b16 %v319
      %v428 = vunpack.c.l.b16 %v320
      %v429 = vunpack.c.l.b16 %v321
      %v430 = vunpack.c.l.b16 %v322
      %v431 = vunpack.c.l.b16 %v323
      %v432 = vunpack.c.l.b16 %v324
      %v433 = vunpack.c.l.b16 %v325
      %v434 = vunpack.c.l.b16 %v326
      %v435 = vunpack.c.l.b16 %v327
      %v436 = vunpack.c.l.b16 %v328
      %v437 = vunpack.c.l.b16 %v329
      %v438 = vunpack.c.l.b16 %v330
      %v439 = vunpack.c.l.b16 %v331
      %v440 = vunpack.c.l.b16 %v332
      %v441 = vunpack.c.l.b16 %v333
      %v442 = vunpack.c.l.b16 %v334
      %v443 = vunpack.c.l.b16 %v335
      %v444 = vunpack.c.l.b16 %v336
      %v445 = vunpack.c.l.b16 %v337
      %v446 = vunpack.c.l.b16 %v338
      %v447 = vunpack.c.l.b16 %v339
      %v448 = vunpack.c.l.b16 %v340
      %v449 = vunpack.c.l.b16 %v341
      %v450 = vunpack.c.l.b16 %v342
      %v451 = vunpack.c.l.b16 %v343
      %v452 = vunpack.c.l.b16 %v344
      %v453 = vunpack.c.l.b16 %v345
      %v454 = vunpack.c.l.b16 %v346
      %v455 = vunpack.c.l.b16 %v347
      %v456 = vunpack.c.l.b16 %v348
      %v457 = vunpack.c.l.b16 %v349
      %v458 = vunpack.c.l.b16 %v350
      %v459 = vunpack.c.l.b16 %v351
      %v460 = vunpack.c.l.b16 %v352
      %v461 = vunpack.c.l.b16 %v353
      %v462 = vunpack.c.l.b16 %v354
      %v463 = vpack.c.b16 %v416, %v415
      %v464 = vpack.c.b16 %v418, %v417
      %v465 = vpack.c.b16 %v420, %v419
      %v466 = vpack.c.b16 %v422, %v421
      %v467 = vpack.c.b16 %v424, %v423
      %v468 = vpack.c.b16 %v426, %v425
      %v469 = vpack.c.b16 %v428, %v427
      %v470 = vpack.c.b16 %v430, %v429
      %v471 = vpack.c.b16 %v432, %v431
      %v472 = vpack.c.b16 %v434, %v433
      %v473 = vpack.c.b16 %v436, %v435
      %v474 = vpack.c.b16 %v438, %v437
      %v475 = vpack.c.b16 %v440, %v439
      %v476 = vpack.c.b16 %v442, %v441
      %v477 = vpack.c.b16 %v444, %v443
      %v478 = vpack.c.b16 %v446, %v445
      %v479 = vpack.c.b16 %v448, %v447
      %v480 = vpack.c.b16 %v450, %v449
      %v481 = vpack.c.b16 %v452, %v451
      %v482 = vpack.c.b16 %v454, %v453
      %v483 = vpack.c.b16 %v456, %v455
      %v484 = vpack.c.b16 %v458, %v457
      %v485 = vpack.c.b16 %v460, %v459
      %v486 = vpack.c.b16 %v462, %v461
      %v492 = vunpack.c.l.b16 %v355
      %v493 = vunpack.c.l.b16 %v356
      %v494 = vunpack.c.l.b16 %v357
      %v495 = vunpack.c.l.b16 %v358
      %v496 = vunpack.c.l.b16 %v359
      %v497 = vpack.c.b16 %v493, %v492
      %v498 = vpack.c.b16 %v495, %v494
      %v499 = vpack.c.b16 %v496, %v496
      %vm502 = vcmask 293888
      %v504 = vsel %vm502, %v463, 0
      %v507 = vsel %vm502, %v464, 0
      %v510 = vsel %vm502, %v465, 0
      %v513 = vsel %vm502, %v466, 0
      %v516 = vsel %vm502, %v467, 0
      %v519 = vsel %vm502, %v468, 0
      %v522 = vsel %vm502, %v469, 0
      %v525 = vsel %vm502, %v470, 0
      %v528 = vsel %vm502, %v471, 0
      %v531 = vsel %vm502, %v472, 0
      %v534 = vsel %vm502, %v473, 0
      %v537 = vsel %vm502, %v474, 0
      %v540 = vsel %vm502, %v475, 0
      %v543 = vsel %vm502, %v476, 0
      %v546 = vsel %vm502, %v477, 0
      %v549 = vsel %vm502, %v478, 0
      %v552 = vsel %vm502, %v479, 0
      %v555 = vsel %vm502, %v480, 0
      %v558 = vsel %vm502, %v481, 0
      %v561 = vsel %vm502, %v482, 0
      %v564 = vsel %vm502, %v483, 0
      %v567 = vsel %vm502, %v484, 0
      %v570 = vsel %vm502, %v485, 0
      %v573 = vsel %vm502, %v486, 0
      %vm575 = vcmask 1041408
      %v577 = vsel %vm575, %v499, 0
      %579 = vmatprep.subr.bf16.mxu0 0
      %580 = vmatpush1.bf16.msra.mxu0 %v497
      %581 = vmatprep.subr.bf16.mxu0 0
      %582 = vmatpush1.bf16.msra.mxu0 %v498
      %583 = vmatprep.subr.bf16.mxu0 0
      %584 = vmatpush1.bf16.msra.mxu0 %v577
      %585 = vmatprep.subr.bf16.mxu0 0
      %586 = vmatpush1.bf16.msra.mxu0 0
      %587 = vmatprep.subr.bf16.mxu0 0
      %588 = vmatpush1.bf16.msra.mxu0 0
      %589 = vmatprep.subr.bf16.mxu0 0
      %590 = vmatpush1.bf16.msra.mxu0 0
      %591 = vmatprep.subr.bf16.mxu0 0
      %592 = vmatpush1.bf16.msra.mxu0 0
      %593 = vmatprep.subr.bf16.mxu0 0
      %594 = vmatpush1.bf16.msra.mxu0 0
      %595 = vmatprep.subr.bf16.mxu0 0
      %596 = vmatpush1.bf16.msra.mxu0 0
      %597 = vmatprep.subr.bf16.mxu0 0
      %598 = vmatpush1.bf16.msra.mxu0 0
      %599 = vmatprep.subr.bf16.mxu0 0
      %600 = vmatpush1.bf16.msra.mxu0 0
      %601 = vmatprep.subr.bf16.mxu0 0
      %602 = vmatpush1.bf16.msra.mxu0 0
      %603 = vmatprep.subr.bf16.mxu0 0
      %604 = vmatpush1.bf16.msra.mxu0 0
      %605 = vmatprep.subr.bf16.mxu0 0
      %606 = vmatpush1.bf16.msra.mxu0 0
      %607 = vmatprep.subr.bf16.mxu0 0
      %608 = vmatpush1.bf16.msra.mxu0 0
      %609 = vmatprep.subr.bf16.mxu0 0
      %610 = vmatpush1.bf16.msra.mxu0 0
      %611 = vmatprep.mubr.bf16.mxu0 0
      %612 = vmatmul.mubr.bf16.gmra.mrb[0].mxu0 %v504
      %v613 = vpop.f32.mrb[0].mxu0
      %v614 = vadd.f32 %v365, %v613
      %v615 = vpop.f32.mrb[0].mxu0
      %v616 = vpop.f32.mrb[0].mxu0
      %v617 = vadd.f32 %v365, %v616
      %v618 = vpop.f32.mrb[0].mxu0
      %619 = vmatprep.mubr.bf16.mxu0 0
      %620 = vmatmul.mubr.bf16.gmra.mrb[0].mxu0 %v507
      %v621 = vpop.f32.mrb[0].mxu0
      %v622 = vadd.f32 %v365, %v621
      %v623 = vpop.f32.mrb[0].mxu0
      %v624 = vpop.f32.mrb[0].mxu0
      %v625 = vadd.f32 %v365, %v624
      %v626 = vpop.f32.mrb[0].mxu0
      %627 = vmatprep.mubr.bf16.mxu0 0
      %628 = vmatmul.mubr.bf16.gmra.mrb[0].mxu0 %v510
      %v629 = vpop.f32.mrb[0].mxu0
      %v630 = vadd.f32 %v365, %v629
      %v631 = vpop.f32.mrb[0].mxu0
      %v632 = vpop.f32.mrb[0].mxu0
      %v633 = vadd.f32 %v365, %v632
      %v634 = vpop.f32.mrb[0].mxu0
      %635 = vmatprep.mubr.bf16.mxu0 0
      %636 = vmatmul.mubr.bf16.gmra.mrb[0].mxu0 %v513
      %v637 = vpop.f32.mrb[0].mxu0
      %v638 = vadd.f32 %v365, %v637
      %v639 = vpop.f32.mrb[0].mxu0
      %v640 = vpop.f32.mrb[0].mxu0
      %v641 = vadd.f32 %v365, %v640
      %v642 = vpop.f32.mrb[0].mxu0
      %643 = vmatprep.mubr.bf16.mxu0 0
      %644 = vmatmul.mubr.bf16.gmra.mrb[0].mxu0 %v516
      %v645 = vpop.f32.mrb[0].mxu0
      %v646 = vadd.f32 %v365, %v645
      %v647 = vpop.f32.mrb[0].mxu0
      %v648 = vpop.f32.mrb[0].mxu0
      %v649 = vadd.f32 %v365, %v648
      %v650 = vpop.f32.mrb[0].mxu0
      %651 = vmatprep.mubr.bf16.mxu0 0
      %652 = vmatmul.mubr.bf16.gmra.mrb[0].mxu0 %v519
      %v653 = vpop.f32.mrb[0].mxu0
      %v654 = vadd.f32 %v365, %v653
      %v655 = vpop.f32.mrb[0].mxu0
      %v656 = vpop.f32.mrb[0].mxu0
      %v657 = vadd.f32 %v365, %v656
      %v658 = vpop.f32.mrb[0].mxu0
      %659 = vmatprep.mubr.bf16.mxu0 0
      %660 = vmatmul.mubr.bf16.gmra.mrb[0].mxu0 %v522
      %v661 = vpop.f32.mrb[0].mxu0
      %v662 = vadd.f32 %v365, %v661
      %v663 = vpop.f32.mrb[0].mxu0
      %v664 = vpop.f32.mrb[0].mxu0
      %v665 = vadd.f32 %v365, %v664
      %v666 = vpop.f32.mrb[0].mxu0
      %667 = vmatprep.mubr.bf16.mxu0 0
      %668 = vmatmul.mubr.bf16.gmra.mrb[0].mxu0 %v525
      %v669 = vpop.f32.mrb[0].mxu0
      %v670 = vadd.f32 %v365, %v669
      %v671 = vpop.f32.mrb[0].mxu0
      %v672 = vpop.f32.mrb[0].mxu0
      %v673 = vadd.f32 %v365, %v672
      %v674 = vpop.f32.mrb[0].mxu0
      %675 = vmatprep.mubr.bf16.mxu0 0
      %676 = vmatmul.mubr.bf16.gmra.mrb[0].mxu0 %v528
      %v677 = vpop.f32.mrb[0].mxu0
      %v678 = vadd.f32 %v365, %v677
      %v679 = vpop.f32.mrb[0].mxu0
      %v680 = vpop.f32.mrb[0].mxu0
      %v681 = vadd.f32 %v365, %v680
      %v682 = vpop.f32.mrb[0].mxu0
      %683 = vmatprep.mubr.bf16.mxu0 0
      %684 = vmatmul.mubr.bf16.gmra.mrb[0].mxu0 %v531
      %v685 = vpop.f32.mrb[0].mxu0
      %v686 = vadd.f32 %v365, %v685
      %v687 = vpop.f32.mrb[0].mxu0
      %v688 = vpop.f32.mrb[0].mxu0
      %v689 = vadd.f32 %v365, %v688
      %v690 = vpop.f32.mrb[0].mxu0
      %691 = vmatprep.mubr.bf16.mxu0 0
      %692 = vmatmul.mubr.bf16.gmra.mrb[0].mxu0 %v534
      %v693 = vpop.f32.mrb[0].mxu0
      %v694 = vadd.f32 %v365, %v693
      %v695 = vpop.f32.mrb[0].mxu0
      %v696 = vpop.f32.mrb[0].mxu0
      %v697 = vadd.f32 %v365, %v696
      %v698 = vpop.f32.mrb[0].mxu0
      %699 = vmatprep.mubr.bf16.mxu0 0
      %700 = vmatmul.mubr.bf16.gmra.mrb[0].mxu0 %v537
      %v701 = vpop.f32.mrb[0].mxu0
      %v702 = vadd.f32 %v365, %v701
      %v703 = vpop.f32.mrb[0].mxu0
      %v704 = vpop.f32.mrb[0].mxu0
      %v705 = vadd.f32 %v365, %v704
      %v706 = vpop.f32.mrb[0].mxu0
      %707 = vmatprep.mubr.bf16.mxu0 0
      %708 = vmatmul.mubr.bf16.gmra.mrb[0].mxu0 %v540
      %v709 = vpop.f32.mrb[0].mxu0
      %v710 = vadd.f32 %v365, %v709
      %v711 = vpop.f32.mrb[0].mxu0
      %v712 = vpop.f32.mrb[0].mxu0
      %v713 = vadd.f32 %v365, %v712
      %v714 = vpop.f32.mrb[0].mxu0
      %715 = vmatprep.mubr.bf16.mxu0 0
      %716 = vmatmul.mubr.bf16.gmra.mrb[0].mxu0 %v543
      %v717 = vpop.f32.mrb[0].mxu0
      %v718 = vadd.f32 %v365, %v717
      %v719 = vpop.f32.mrb[0].mxu0
      %v720 = vpop.f32.mrb[0].mxu0
      %v721 = vadd.f32 %v365, %v720
      %v722 = vpop.f32.mrb[0].mxu0
      %723 = vmatprep.mubr.bf16.mxu0 0
      %724 = vmatmul.mubr.bf16.gmra.mrb[0].mxu0 %v546
      %v725 = vpop.f32.mrb[0].mxu0
      %v726 = vadd.f32 %v365, %v725
      %v727 = vpop.f32.mrb[0].mxu0
      %v728 = vpop.f32.mrb[0].mxu0
      %v729 = vadd.f32 %v365, %v728
      %v730 = vpop.f32.mrb[0].mxu0
      %731 = vmatprep.mubr.bf16.mxu0 0
      %732 = vmatmul.mubr.bf16.gmra.mrb[0].mxu0 %v549
      %v733 = vpop.f32.mrb[0].mxu0
      %v734 = vadd.f32 %v365, %v733
      %v735 = vpop.f32.mrb[0].mxu0
      %v736 = vpop.f32.mrb[0].mxu0
      %v737 = vadd.f32 %v365, %v736
      %v738 = vpop.f32.mrb[0].mxu0
      %739 = vmatprep.mubr.bf16.mxu0 0
      %740 = vmatmul.mubr.bf16.gmra.mrb[0].mxu0 %v552
      %v741 = vpop.f32.mrb[0].mxu0
      %v742 = vadd.f32 %v365, %v741
      %v743 = vpop.f32.mrb[0].mxu0
      %v744 = vpop.f32.mrb[0].mxu0
      %v745 = vadd.f32 %v365, %v744
      %v746 = vpop.f32.mrb[0].mxu0
      %747 = vmatprep.mubr.bf16.mxu0 0
      %748 = vmatmul.mubr.bf16.gmra.mrb[0].mxu0 %v555
      %v749 = vpop.f32.mrb[0].mxu0
      %v750 = vadd.f32 %v365, %v749
      %v751 = vpop.f32.mrb[0].mxu0
      %v752 = vpop.f32.mrb[0].mxu0
      %v753 = vadd.f32 %v365, %v752
      %v754 = vpop.f32.mrb[0].mxu0
      %755 = vmatprep.mubr.bf16.mxu0 0
      %756 = vmatmul.mubr.bf16.gmra.mrb[0].mxu0 %v558
      %v757 = vpop.f32.mrb[0].mxu0
      %v758 = vadd.f32 %v365, %v757
      %v759 = vpop.f32.mrb[0].mxu0
      %v760 = vpop.f32.mrb[0].mxu0
      %v761 = vadd.f32 %v365, %v760
      %v762 = vpop.f32.mrb[0].mxu0
      %763 = vmatprep.mubr.bf16.mxu0 0
      %764 = vmatmul.mubr.bf16.gmra.mrb[0].mxu0 %v561
      %v765 = vpop.f32.mrb[0].mxu0
      %v766 = vadd.f32 %v365, %v765
      %v767 = vpop.f32.mrb[0].mxu0
      %v768 = vpop.f32.mrb[0].mxu0
      %v769 = vadd.f32 %v365, %v768
      %v770 = vpop.f32.mrb[0].mxu0
      %771 = vmatprep.mubr.bf16.mxu0 0
      %772 = vmatmul.mubr.bf16.gmra.mrb[0].mxu0 %v564
      %v773 = vpop.f32.mrb[0].mxu0
      %v774 = vadd.f32 %v365, %v773
      %v775 = vpop.f32.mrb[0].mxu0
      %v776 = vpop.f32.mrb[0].mxu0
      %v777 = vadd.f32 %v365, %v776
      %v778 = vpop.f32.mrb[0].mxu0
      %779 = vmatprep.mubr.bf16.mxu0 0
      %780 = vmatmul.mubr.bf16.gmra.mrb[0].mxu0 %v567
      %v781 = vpop.f32.mrb[0].mxu0
      %v782 = vadd.f32 %v365, %v781
      %v783 = vpop.f32.mrb[0].mxu0
      %v784 = vpop.f32.mrb[0].mxu0
      %v785 = vadd.f32 %v365, %v784
      %v786 = vpop.f32.mrb[0].mxu0
      %787 = vmatprep.mubr.bf16.mxu0 0
      %788 = vmatmul.mubr.bf16.gmra.mrb[0].mxu0 %v570
      %v789 = vpop.f32.mrb[0].mxu0
      %v790 = vadd.f32 %v365, %v789
      %v791 = vpop.f32.mrb[0].mxu0
      %v792 = vpop.f32.mrb[0].mxu0
      %v793 = vadd.f32 %v365, %v792
      %v794 = vpop.f32.mrb[0].mxu0
      %795 = vmatprep.mubr.bf16.mxu0 0
      %796 = vmatmul.mubr.bf16.gmra.mrb[0].mxu0 %v573
      %v797 = vpop.f32.mrb[0].mxu0
      %v798 = vadd.f32 %v365, %v797
      %v799 = vpop.f32.mrb[0].mxu0
      %v800 = vpop.f32.mrb[0].mxu0
      %v801 = vadd.f32 %v365, %v800
      %v802 = vpop.f32.mrb[0].mxu0
      %803 = vdwg.mxu0
      %v804 = vmax.f32 %v614, 0.0
      %v805 = vmax.f32 %v617, 0.0
      %v806 = vmax.f32 %v622, 0.0
      %v807 = vmax.f32 %v625, 0.0
      %v808 = vmax.f32 %v630, 0.0
      %v809 = vmax.f32 %v633, 0.0
      %v810 = vmax.f32 %v638, 0.0
      %v811 = vmax.f32 %v641, 0.0
      %v812 = vmax.f32 %v646, 0.0
      %v813 = vmax.f32 %v649, 0.0
      %v814 = vmax.f32 %v654, 0.0
      %v815 = vmax.f32 %v657, 0.0
      %v816 = vmax.f32 %v662, 0.0
      %v817 = vmax.f32 %v665, 0.0
      %v818 = vmax.f32 %v670, 0.0
      %v819 = vmax.f32 %v673, 0.0
      %v820 = vmax.f32 %v678, 0.0
      %v821 = vmax.f32 %v681, 0.0
      %v822 = vmax.f32 %v686, 0.0
      %v823 = vmax.f32 %v689, 0.0
      %v824 = vmax.f32 %v694, 0.0
      %v825 = vmax.f32 %v697, 0.0
      %v826 = vmax.f32 %v702, 0.0
      %v827 = vmax.f32 %v705, 0.0
      %v828 = vmax.f32 %v710, 0.0
      %v829 = vmax.f32 %v713, 0.0
      %v830 = vmax.f32 %v718, 0.0
      %v831 = vmax.f32 %v721, 0.0
      %v832 = vmax.f32 %v726, 0.0
      %v833 = vmax.f32 %v729, 0.0
      %v834 = vmax.f32 %v734, 0.0
      %v835 = vmax.f32 %v737, 0.0
      %v836 = vmax.f32 %v742, 0.0
      %v837 = vmax.f32 %v745, 0.0
      %v838 = vmax.f32 %v750, 0.0
      %v839 = vmax.f32 %v753, 0.0
      %v840 = vmax.f32 %v758, 0.0
      %v841 = vmax.f32 %v761, 0.0
      %v842 = vmax.f32 %v766, 0.0
      %v843 = vmax.f32 %v769, 0.0
      %v844 = vmax.f32 %v774, 0.0
      %v845 = vmax.f32 %v777, 0.0
      %v846 = vmax.f32 %v782, 0.0
      %v847 = vmax.f32 %v785, 0.0
      %v848 = vmax.f32 %v790, 0.0
      %v849 = vmax.f32 %v793, 0.0
      %v850 = vmax.f32 %v798, 0.0
      %v851 = vmax.f32 %v801, 0.0
      %vm852 = vcmask 261120
      %853 = vst.msk [vmem:[#allocation2] sm:$0xff] %vm852, 0.0
      %854 = vst.msk [vmem:[#allocation2 + $0x8] sm:$0xff] %vm852, 0.0
      %855 = vst.msk [vmem:[#allocation2 + $0x10] sm:$0xff] %vm852, 0.0
      %856 = vst.msk [vmem:[#allocation2 + $0x18] sm:$0xff] %vm852, 0.0
      %857 = vst.msk [vmem:[#allocation2 + $0x20] sm:$0xff] %vm852, 0.0
      %858 = vst.msk [vmem:[#allocation2 + $0x28] sm:$0xff] %vm852, 0.0
      %859 = vst.msk [vmem:[#allocation2 + $0x30] sm:$0xff] %vm852, 0.0
      %860 = vst.msk [vmem:[#allocation2 + $0x38] sm:$0xff] %vm852, 0.0
      %861 = vst.msk [vmem:[#allocation2 + $0x40] sm:$0xff] %vm852, 0.0
      %862 = vst.msk [vmem:[#allocation2 + $0x48] sm:$0xff] %vm852, 0.0
      %863 = vst.msk [vmem:[#allocation2 + $0x50] sm:$0xff] %vm852, 0.0
      %864 = vst.msk [vmem:[#allocation2 + $0x58] sm:$0xff] %vm852, 0.0
      %865 = vst.msk [vmem:[#allocation2 + $0x60] sm:$0xff] %vm852, 0.0
      %866 = vst.msk [vmem:[#allocation2 + $0x68] sm:$0xff] %vm852, 0.0
      %867 = vst.msk [vmem:[#allocation2 + $0x70] sm:$0xff] %vm852, 0.0
      %868 = vst.msk [vmem:[#allocation2 + $0x78] sm:$0xff] %vm852, 0.0
      %869 = vst.msk [vmem:[#allocation2 + $0x80] sm:$0xff] %vm852, 0.0
      %870 = vst.msk [vmem:[#allocation2 + $0x88] sm:$0xff] %vm852, 0.0
      %871 = vst.msk [vmem:[#allocation2 + $0x90] sm:$0xff] %vm852, 0.0
      %872 = vst.msk [vmem:[#allocation2 + $0x98] sm:$0xff] %vm852, 0.0
      %873 = vst.msk [vmem:[#allocation2 + $0xa0] sm:$0xff] %vm852, 0.0
      %874 = vst.msk [vmem:[#allocation2 + $0xa8] sm:$0xff] %vm852, 0.0
      %875 = vst.msk [vmem:[#allocation2 + $0xb0] sm:$0xff] %vm852, 0.0
      %876 = vst.msk [vmem:[#allocation2 + $0xb8] sm:$0xff] %vm852, 0.0
      %877 = vst.msk [vmem:[#allocation2 + $0xc0] sm:$0xff] %vm852, 0.0
      %878 = vst.msk [vmem:[#allocation2 + $0xc8] sm:$0xff] %vm852, 0.0
      %879 = vst.msk [vmem:[#allocation2 + $0xd0] sm:$0xff] %vm852, 0.0
      %880 = vst.msk [vmem:[#allocation2 + $0xd8] sm:$0xff] %vm852, 0.0
      %881 = vst.msk [vmem:[#allocation2 + $0xe0] sm:$0xff] %vm852, 0.0
      %882 = vst.msk [vmem:[#allocation2 + $0xe8] sm:$0xff] %vm852, 0.0
      %883 = vst.msk [vmem:[#allocation2 + $0xf0] sm:$0xff] %vm852, 0.0
      %884 = vst.msk [vmem:[#allocation2 + $0xf8] sm:$0xff] %vm852, 0.0
      %885 = vst.msk [vmem:[#allocation2 + $0x100] sm:$0xff] %vm852, 0.0
      %886 = vst.msk [vmem:[#allocation2 + $0x108] sm:$0xff] %vm852, 0.0
      %887 = vst.msk [vmem:[#allocation2 + $0x110] sm:$0xff] %vm852, 0.0
      %888 = vst.msk [vmem:[#allocation2 + $0x118] sm:$0xff] %vm852, 0.0
      %889 = vst.msk [vmem:[#allocation2 + $0x120] sm:$0xff] %vm852, 0.0
      %890 = vst.msk [vmem:[#allocation2 + $0x128] sm:$0xff] %vm852, 0.0
      %891 = vst.msk [vmem:[#allocation2 + $0x130] sm:$0xff] %vm852, 0.0
      %892 = vst.msk [vmem:[#allocation2 + $0x138] sm:$0xff] %vm852, 0.0
      %893 = vst.msk [vmem:[#allocation2 + $0x140] sm:$0xff] %vm852, 0.0
      %894 = vst.msk [vmem:[#allocation2 + $0x148] sm:$0xff] %vm852, 0.0
      %895 = vst.msk [vmem:[#allocation2 + $0x150] sm:$0xff] %vm852, 0.0
      %896 = vst.msk [vmem:[#allocation2 + $0x158] sm:$0xff] %vm852, 0.0
      %897 = vst.msk [vmem:[#allocation2 + $0x160] sm:$0xff] %vm852, 0.0
      %898 = vst.msk [vmem:[#allocation2 + $0x168] sm:$0xff] %vm852, 0.0
      %899 = vst.msk [vmem:[#allocation2 + $0x170] sm:$0xff] %vm852, 0.0
      %900 = vst.msk [vmem:[#allocation2 + $0x178] sm:$0xff] %vm852, 0.0
      %901 = vst.msk [vmem:[#allocation2 + $0x180] sm:$0xff] %vm852, 0.0
      %902 = vst.msk [vmem:[#allocation2 + $0x188] sm:$0xff] %vm852, 0.0
      %903 = vst.msk [vmem:[#allocation2 + $0x190] sm:$0xff] %vm852, 0.0
      %904 = vst.msk [vmem:[#allocation2 + $0x198] sm:$0xff] %vm852, 0.0
      %905 = vst.msk [vmem:[#allocation2 + $0x1a0] sm:$0xff] %vm852, 0.0
      %906 = vst.msk [vmem:[#allocation2 + $0x1a8] sm:$0xff] %vm852, 0.0
      %907 = vst.msk [vmem:[#allocation2 + $0x1b0] sm:$0xff] %vm852, 0.0
      %908 = vst.msk [vmem:[#allocation2 + $0x1b8] sm:$0xff] %vm852, 0.0
      %909 = vst.msk [vmem:[#allocation2 + $0x1c0] sm:$0xff] %vm852, 0.0
      %v910 = vld [vmem:[%s5] sm:$0xff]
      %v911 = vld [vmem:[%s5 + $0x8] sm:$0xff]
      %v912 = vld [vmem:[%s5 + $0x10] sm:$0xff]
      %v913 = vld [vmem:[%s5 + $0x18] sm:$0xff]
      %v914 = vld [vmem:[%s5 + $0x20] sm:$0xff]
      %v915 = vld [vmem:[%s5 + $0x28] sm:$0xff]
      %v916 = vld [vmem:[%s5 + $0x30] sm:$0xff]
      %v917 = vld [vmem:[%s5 + $0x38] sm:$0xff]
      %v918 = vld [vmem:[%s5 + $0x40] sm:$0xff]
      %v919 = vld [vmem:[%s5 + $0x48] sm:$0xff]
      %v920 = vld [vmem:[%s5 + $0x50] sm:$0xff]
      %v921 = vld [vmem:[%s5 + $0x58] sm:$0xff]
      %v922 = vld [vmem:[%s5 + $0x60] sm:$0xff]
      %v923 = vld [vmem:[%s5 + $0x68] sm:$0xff]
      %v924 = vld [vmem:[%s5 + $0x70] sm:$0xff]
      %v925 = vld [vmem:[%s5 + $0x78] sm:$0xff]
      %v926 = vld [vmem:[%s5 + $0x80] sm:$0xff]
      %v927 = vld [vmem:[%s5 + $0x88] sm:$0xff]
      %v928 = vld [vmem:[%s5 + $0x90] sm:$0xff]
      %v929 = vld [vmem:[%s5 + $0x98] sm:$0xff]
      %v930 = vld [vmem:[%s5 + $0xa0] sm:$0xff]
      %v931 = vld [vmem:[%s5 + $0xa8] sm:$0xff]
      %v932 = vld [vmem:[%s5 + $0xb0] sm:$0xff]
      %v933 = vld [vmem:[%s5 + $0xb8] sm:$0xff]
      %v934 = vld [vmem:[%s5 + $0xc0] sm:$0xff]
      %v935 = vld [vmem:[%s5 + $0xc8] sm:$0xff]
      %v936 = vld [vmem:[%s5 + $0xd0] sm:$0xff]
      %v937 = vld [vmem:[%s5 + $0xd8] sm:$0xff]
      %v938 = vld [vmem:[%s5 + $0xe0] sm:$0xff]
      %v939 = vld [vmem:[%s5 + $0xe8] sm:$0xff]
      %v940 = vld [vmem:[%s5 + $0xf0] sm:$0xff]
      %v941 = vld [vmem:[%s5 + $0xf8] sm:$0xff]
      %v942 = vld [vmem:[%s5 + $0x100] sm:$0xff]
      %v943 = vld [vmem:[%s5 + $0x108] sm:$0xff]
      %v944 = vld [vmem:[%s5 + $0x110] sm:$0xff]
      %v945 = vld [vmem:[%s5 + $0x118] sm:$0xff]
      %v946 = vld [vmem:[%s5 + $0x120] sm:$0xff]
      %v947 = vld [vmem:[%s5 + $0x128] sm:$0xff]
      %v948 = vld [vmem:[%s5 + $0x130] sm:$0xff]
      %v949 = vld [vmem:[%s5 + $0x138] sm:$0xff]
      %v950 = vld [vmem:[%s5 + $0x140] sm:$0xff]
      %v951 = vld [vmem:[%s5 + $0x148] sm:$0xff]
      %v952 = vld [vmem:[%s5 + $0x150] sm:$0xff]
      %v953 = vld [vmem:[%s5 + $0x158] sm:$0xff]
      %v954 = vld [vmem:[%s5 + $0x160] sm:$0xff]
      %v955 = vld [vmem:[%s5 + $0x168] sm:$0xff]
      %v956 = vld [vmem:[%s5 + $0x170] sm:$0xff]
      %v957 = vld [vmem:[%s5 + $0x178] sm:$0xff]
      %959 = vset.pattern.permute.xlu0 0
      %960 = vperm.xlu0 %959, %v910
      %v961 = vpop.permute.xlu0 %960
      %964 = vset.pattern.permute.xlu0 0
      %965 = vperm.xlu0 %964, %v911
      %v966 = vpop.permute.xlu0 %965
      %969 = vset.pattern.permute.xlu0 0
      %970 = vperm.xlu0 %969, %v912
      %v971 = vpop.permute.xlu0 %970
      %974 = vset.pattern.permute.xlu0 0
      %975 = vperm.xlu0 %974, %v913
      %v976 = vpop.permute.xlu0 %975
      %979 = vset.pattern.permute.xlu0 0
      %980 = vperm.xlu0 %979, %v914
      %v981 = vpop.permute.xlu0 %980
      %984 = vset.pattern.permute.xlu0 0
      %985 = vperm.xlu0 %984, %v915
      %v986 = vpop.permute.xlu0 %985
      %989 = vset.pattern.permute.xlu0 0
      %990 = vperm.xlu0 %989, %v916
      %v991 = vpop.permute.xlu0 %990
      %994 = vset.pattern.permute.xlu0 0
      %995 = vperm.xlu0 %994, %v917
      %v996 = vpop.permute.xlu0 %995
      %999 = vset.pattern.permute.xlu0 0
      %1000 = vperm.xlu0 %999, %v918
      %v1001 = vpop.permute.xlu0 %1000
      %1004 = vset.pattern.permute.xlu0 0
      %1005 = vperm.xlu0 %1004, %v919
      %v1006 = vpop.permute.xlu0 %1005
      %1009 = vset.pattern.permute.xlu0 0
      %1010 = vperm.xlu0 %1009, %v920
      %v1011 = vpop.permute.xlu0 %1010
      %1014 = vset.pattern.permute.xlu0 0
      %1015 = vperm.xlu0 %1014, %v921
      %v1016 = vpop.permute.xlu0 %1015
      %1019 = vset.pattern.permute.xlu0 0
      %1020 = vperm.xlu0 %1019, %v922
      %v1021 = vpop.permute.xlu0 %1020
      %1024 = vset.pattern.permute.xlu0 0
      %1025 = vperm.xlu0 %1024, %v923
      %v1026 = vpop.permute.xlu0 %1025
      %1029 = vset.pattern.permute.xlu0 0
      %1030 = vperm.xlu0 %1029, %v924
      %v1031 = vpop.permute.xlu0 %1030
      %1034 = vset.pattern.permute.xlu0 0
      %1035 = vperm.xlu0 %1034, %v925
      %v1036 = vpop.permute.xlu0 %1035
      %1039 = vset.pattern.permute.xlu0 0
      %1040 = vperm.xlu0 %1039, %v926
      %v1041 = vpop.permute.xlu0 %1040
      %1044 = vset.pattern.permute.xlu0 0
      %1045 = vperm.xlu0 %1044, %v927
      %v1046 = vpop.permute.xlu0 %1045
      %1049 = vset.pattern.permute.xlu0 0
      %1050 = vperm.xlu0 %1049, %v928
      %v1051 = vpop.permute.xlu0 %1050
      %1054 = vset.pattern.permute.xlu0 0
      %1055 = vperm.xlu0 %1054, %v929
      %v1056 = vpop.permute.xlu0 %1055
      %1059 = vset.pattern.permute.xlu0 0
      %1060 = vperm.xlu0 %1059, %v930
      %v1061 = vpop.permute.xlu0 %1060
      %1064 = vset.pattern.permute.xlu0 0
      %1065 = vperm.xlu0 %1064, %v931
      %v1066 = vpop.permute.xlu0 %1065
      %1069 = vset.pattern.permute.xlu0 0
      %1070 = vperm.xlu0 %1069, %v932
      %v1071 = vpop.permute.xlu0 %1070
      %1074 = vset.pattern.permute.xlu0 0
      %1075 = vperm.xlu0 %1074, %v933
      %v1076 = vpop.permute.xlu0 %1075
      %1079 = vset.pattern.permute.xlu0 0
      %1080 = vperm.xlu0 %1079, %v934
      %v1081 = vpop.permute.xlu0 %1080
      %1084 = vset.pattern.permute.xlu0 0
      %1085 = vperm.xlu0 %1084, %v935
      %v1086 = vpop.permute.xlu0 %1085
      %1089 = vset.pattern.permute.xlu0 0
      %1090 = vperm.xlu0 %1089, %v936
      %v1091 = vpop.permute.xlu0 %1090
      %1094 = vset.pattern.permute.xlu0 0
      %1095 = vperm.xlu0 %1094, %v937
      %v1096 = vpop.permute.xlu0 %1095
      %1099 = vset.pattern.permute.xlu0 0
      %1100 = vperm.xlu0 %1099, %v938
      %v1101 = vpop.permute.xlu0 %1100
      %1104 = vset.pattern.permute.xlu0 0
      %1105 = vperm.xlu0 %1104, %v939
      %v1106 = vpop.permute.xlu0 %1105
      %1109 = vset.pattern.permute.xlu0 0
      %1110 = vperm.xlu0 %1109, %v940
      %v1111 = vpop.permute.xlu0 %1110
      %1114 = vset.pattern.permute.xlu0 0
      %1115 = vperm.xlu0 %1114, %v941
      %v1116 = vpop.permute.xlu0 %1115
      %1119 = vset.pattern.permute.xlu0 0
      %1120 = vperm.xlu0 %1119, %v942
      %v1121 = vpop.permute.xlu0 %1120
      %1124 = vset.pattern.permute.xlu0 0
      %1125 = vperm.xlu0 %1124, %v943
      %v1126 = vpop.permute.xlu0 %1125
      %1129 = vset.pattern.permute.xlu0 0
      %1130 = vperm.xlu0 %1129, %v944
      %v1131 = vpop.permute.xlu0 %1130
      %1134 = vset.pattern.permute.xlu0 0
      %1135 = vperm.xlu0 %1134, %v945
      %v1136 = vpop.permute.xlu0 %1135
      %1139 = vset.pattern.permute.xlu0 0
      %1140 = vperm.xlu0 %1139, %v946
      %v1141 = vpop.permute.xlu0 %1140
      %1144 = vset.pattern.permute.xlu0 0
      %1145 = vperm.xlu0 %1144, %v947
      %v1146 = vpop.permute.xlu0 %1145
      %1149 = vset.pattern.permute.xlu0 0
      %1150 = vperm.xlu0 %1149, %v948
      %v1151 = vpop.permute.xlu0 %1150
      %1154 = vset.pattern.permute.xlu0 0
      %1155 = vperm.xlu0 %1154, %v949
      %v1156 = vpop.permute.xlu0 %1155
      %1159 = vset.pattern.permute.xlu0 0
      %1160 = vperm.xlu0 %1159, %v950
      %v1161 = vpop.permute.xlu0 %1160
      %1164 = vset.pattern.permute.xlu0 0
      %1165 = vperm.xlu0 %1164, %v951
      %v1166 = vpop.permute.xlu0 %1165
      %1169 = vset.pattern.permute.xlu0 0
      %1170 = vperm.xlu0 %1169, %v952
      %v1171 = vpop.permute.xlu0 %1170
      %1174 = vset.pattern.permute.xlu0 0
      %1175 = vperm.xlu0 %1174, %v953
      %v1176 = vpop.permute.xlu0 %1175
      %1179 = vset.pattern.permute.xlu0 0
      %1180 = vperm.xlu0 %1179, %v954
      %v1181 = vpop.permute.xlu0 %1180
      %1184 = vset.pattern.permute.xlu0 0
      %1185 = vperm.xlu0 %1184, %v955
      %v1186 = vpop.permute.xlu0 %1185
      %1189 = vset.pattern.permute.xlu0 0
      %1190 = vperm.xlu0 %1189, %v956
      %v1191 = vpop.permute.xlu0 %1190
      %1194 = vset.pattern.permute.xlu0 0
      %1195 = vperm.xlu0 %1194, %v957
      %v1196 = vpop.permute.xlu0 %1195
      %v1198 = vmul.f32 %v804, %v961
      %v1199 = vmul.f32 %v805, %v966
      %v1200 = vmul.f32 %v806, %v971
      %v1201 = vmul.f32 %v807, %v976
      %v1202 = vmul.f32 %v808, %v981
      %v1203 = vmul.f32 %v809, %v986
      %v1204 = vmul.f32 %v810, %v991
      %v1205 = vmul.f32 %v811, %v996
      %v1206 = vmul.f32 %v812, %v1001
      %v1207 = vmul.f32 %v813, %v1006
      %v1208 = vmul.f32 %v814, %v1011
      %v1209 = vmul.f32 %v815, %v1016
      %v1210 = vmul.f32 %v816, %v1021
      %v1211 = vmul.f32 %v817, %v1026
      %v1212 = vmul.f32 %v818, %v1031
      %v1213 = vmul.f32 %v819, %v1036
      %v1214 = vmul.f32 %v820, %v1041
      %v1215 = vmul.f32 %v821, %v1046
      %v1216 = vmul.f32 %v822, %v1051
      %v1217 = vmul.f32 %v823, %v1056
      %v1218 = vmul.f32 %v824, %v1061
      %v1219 = vmul.f32 %v825, %v1066
      %v1220 = vmul.f32 %v826, %v1071
      %v1221 = vmul.f32 %v827, %v1076
      %v1222 = vmul.f32 %v828, %v1081
      %v1223 = vmul.f32 %v829, %v1086
      %v1224 = vmul.f32 %v830, %v1091
      %v1225 = vmul.f32 %v831, %v1096
      %v1226 = vmul.f32 %v832, %v1101
      %v1227 = vmul.f32 %v833, %v1106
      %v1228 = vmul.f32 %v834, %v1111
      %v1229 = vmul.f32 %v835, %v1116
      %v1230 = vmul.f32 %v836, %v1121
      %v1231 = vmul.f32 %v837, %v1126
      %v1232 = vmul.f32 %v838, %v1131
      %v1233 = vmul.f32 %v839, %v1136
      %v1234 = vmul.f32 %v840, %v1141
      %v1235 = vmul.f32 %v841, %v1146
      %v1236 = vmul.f32 %v842, %v1151
      %v1237 = vmul.f32 %v843, %v1156
      %v1238 = vmul.f32 %v844, %v1161
      %v1239 = vmul.f32 %v845, %v1166
      %v1240 = vmul.f32 %v846, %v1171
      %v1241 = vmul.f32 %v847, %v1176
      %v1242 = vmul.f32 %v848, %v1181
      %v1243 = vmul.f32 %v849, %v1186
      %v1244 = vmul.f32 %v850, %v1191
      %v1245 = vmul.f32 %v851, %v1196
      %1246 = vst.msk [vmem:[#allocation2 + $0x19] sm:$0xff] %vm852, %v1198
      %1247 = vst.msk [vmem:[#allocation2 + $0x21] sm:$0xff] %vm852, %v1199
      %1248 = vst.msk [vmem:[#allocation2 + $0x29] sm:$0xff] %vm852, %v1200
      %1249 = vst.msk [vmem:[#allocation2 + $0x31] sm:$0xff] %vm852, %v1201
      %1250 = vst.msk [vmem:[#allocation2 + $0x39] sm:$0xff] %vm852, %v1202
      %1251 = vst.msk [vmem:[#allocation2 + $0x41] sm:$0xff] %vm852, %v1203
      %1252 = vst.msk [vmem:[#allocation2 + $0x49] sm:$0xff] %vm852, %v1204
      %1253 = vst.msk [vmem:[#allocation2 + $0x51] sm:$0xff] %vm852, %v1205
      %1254 = vst.msk [vmem:[#allocation2 + $0x59] sm:$0xff] %vm852, %v1206
      %1255 = vst.msk [vmem:[#allocation2 + $0x61] sm:$0xff] %vm852, %v1207
      %1256 = vst.msk [vmem:[#allocation2 + $0x69] sm:$0xff] %vm852, %v1208
      %1257 = vst.msk [vmem:[#allocation2 + $0x71] sm:$0xff] %vm852, %v1209
      %1258 = vst.msk [vmem:[#allocation2 + $0x79] sm:$0xff] %vm852, %v1210
      %1259 = vst.msk [vmem:[#allocation2 + $0x81] sm:$0xff] %vm852, %v1211
      %1260 = vst.msk [vmem:[#allocation2 + $0x89] sm:$0xff] %vm852, %v1212
      %1261 = vst.msk [vmem:[#allocation2 + $0x91] sm:$0xff] %vm852, %v1213
      %1262 = vst.msk [vmem:[#allocation2 + $0x99] sm:$0xff] %vm852, %v1214
      %1263 = vst.msk [vmem:[#allocation2 + $0xa1] sm:$0xff] %vm852, %v1215
      %1264 = vst.msk [vmem:[#allocation2 + $0xa9] sm:$0xff] %vm852, %v1216
      %1265 = vst.msk [vmem:[#allocation2 + $0xb1] sm:$0xff] %vm852, %v1217
      %1266 = vst.msk [vmem:[#allocation2 + $0xb9] sm:$0xff] %vm852, %v1218
      %1267 = vst.msk [vmem:[#allocation2 + $0xc1] sm:$0xff] %vm852, %v1219
      %1268 = vst.msk [vmem:[#allocation2 + $0xc9] sm:$0xff] %vm852, %v1220
      %1269 = vst.msk [vmem:[#allocation2 + $0xd1] sm:$0xff] %vm852, %v1221
      %1270 = vst.msk [vmem:[#allocation2 + $0xd9] sm:$0xff] %vm852, %v1222
      %1271 = vst.msk [vmem:[#allocation2 + $0xe1] sm:$0xff] %vm852, %v1223
      %1272 = vst.msk [vmem:[#allocation2 + $0xe9] sm:$0xff] %vm852, %v1224
      %1273 = vst.msk [vmem:[#allocation2 + $0xf1] sm:$0xff] %vm852, %v1225
      %1274 = vst.msk [vmem:[#allocation2 + $0xf9] sm:$0xff] %vm852, %v1226
      %1275 = vst.msk [vmem:[#allocation2 + $0x101] sm:$0xff] %vm852, %v1227
      %1276 = vst.msk [vmem:[#allocation2 + $0x109] sm:$0xff] %vm852, %v1228
      %1277 = vst.msk [vmem:[#allocation2 + $0x111] sm:$0xff] %vm852, %v1229
      %1278 = vst.msk [vmem:[#allocation2 + $0x119] sm:$0xff] %vm852, %v1230
      %1279 = vst.msk [vmem:[#allocation2 + $0x121] sm:$0xff] %vm852, %v1231
      %1280 = vst.msk [vmem:[#allocation2 + $0x129] sm:$0xff] %vm852, %v1232
      %1281 = vst.msk [vmem:[#allocation2 + $0x131] sm:$0xff] %vm852, %v1233
      %1282 = vst.msk [vmem:[#allocation2 + $0x139] sm:$0xff] %vm852, %v1234
      %1283 = vst.msk [vmem:[#allocation2 + $0x141] sm:$0xff] %vm852, %v1235
      %1284 = vst.msk [vmem:[#allocation2 + $0x149] sm:$0xff] %vm852, %v1236
      %1285 = vst.msk [vmem:[#allocation2 + $0x151] sm:$0xff] %vm852, %v1237
      %1286 = vst.msk [vmem:[#allocation2 + $0x159] sm:$0xff] %vm852, %v1238
      %1287 = vst.msk [vmem:[#allocation2 + $0x161] sm:$0xff] %vm852, %v1239
      %1288 = vst.msk [vmem:[#allocation2 + $0x169] sm:$0xff] %vm852, %v1240
      %1289 = vst.msk [vmem:[#allocation2 + $0x171] sm:$0xff] %vm852, %v1241
      %1290 = vst.msk [vmem:[#allocation2 + $0x179] sm:$0xff] %vm852, %v1242
      %1291 = vst.msk [vmem:[#allocation2 + $0x181] sm:$0xff] %vm852, %v1243
      %1292 = vst.msk [vmem:[#allocation2 + $0x189] sm:$0xff] %vm852, %v1244
      %1293 = vst.msk [vmem:[#allocation2 + $0x191] sm:$0xff] %vm852, %v1245
      %v1294 = vld [vmem:[#allocation2] sm:$0xff]
      %v1295 = vld [vmem:[#allocation2 + $0x8] sm:$0xff]
      %v1296 = vld [vmem:[#allocation2 + $0x10] sm:$0xff]
      %v1297 = vld [vmem:[#allocation2 + $0x18] sm:$0xff]
      %v1298 = vld [vmem:[#allocation2 + $0x20] sm:$0xff]
      %v1299 = vld [vmem:[#allocation2 + $0x28] sm:$0xff]
      %v1300 = vld [vmem:[#allocation2 + $0x30] sm:$0xff]
      %v1301 = vld [vmem:[#allocation2 + $0x38] sm:$0xff]
      %v1302 = vld [vmem:[#allocation2 + $0x40] sm:$0xff]
      %v1303 = vld [vmem:[#allocation2 + $0x48] sm:$0xff]
      %v1304 = vld [vmem:[#allocation2 + $0x50] sm:$0xff]
      %v1305 = vld [vmem:[#allocation2 + $0x58] sm:$0xff]
      %v1306 = vld [vmem:[#allocation2 + $0x60] sm:$0xff]
      %v1307 = vld [vmem:[#allocation2 + $0x68] sm:$0xff]
      %v1308 = vld [vmem:[#allocation2 + $0x70] sm:$0xff]
      %v1309 = vld [vmem:[#allocation2 + $0x78] sm:$0xff]
      %v1310 = vld [vmem:[#allocation2 + $0x80] sm:$0xff]
      %v1311 = vld [vmem:[#allocation2 + $0x88] sm:$0xff]
      %v1312 = vld [vmem:[#allocation2 + $0x90] sm:$0xff]
      %v1313 = vld [vmem:[#allocation2 + $0x98] sm:$0xff]
      %v1314 = vld [vmem:[#allocation2 + $0xa0] sm:$0xff]
      %v1315 = vld [vmem:[#allocation2 + $0xa8] sm:$0xff]
      %v1316 = vld [vmem:[#allocation2 + $0xb0] sm:$0xff]
      %v1317 = vld [vmem:[#allocation2 + $0xb8] sm:$0xff]
      %v1318 = vld [vmem:[#allocation2 + $0xc0] sm:$0xff]
      %v1319 = vld [vmem:[#allocation2 + $0xc8] sm:$0xff]
      %v1320 = vld [vmem:[#allocation2 + $0xd0] sm:$0xff]
      %v1321 = vld [vmem:[#allocation2 + $0xd8] sm:$0xff]
      %v1322 = vld [vmem:[#allocation2 + $0xe0] sm:$0xff]
      %v1323 = vld [vmem:[#allocation2 + $0xe8] sm:$0xff]
      %v1324 = vld [vmem:[#allocation2 + $0xf0] sm:$0xff]
      %v1325 = vld [vmem:[#allocation2 + $0xf8] sm:$0xff]
      %v1326 = vld [vmem:[#allocation2 + $0x100] sm:$0xff]
      %v1327 = vld [vmem:[#allocation2 + $0x108] sm:$0xff]
      %v1328 = vld [vmem:[#allocation2 + $0x110] sm:$0xff]
      %v1329 = vld [vmem:[#allocation2 + $0x118] sm:$0xff]
      %v1330 = vld [vmem:[#allocation2 + $0x120] sm:$0xff]
      %v1331 = vld [vmem:[#allocation2 + $0x128] sm:$0xff]
      %v1332 = vld [vmem:[#allocation2 + $0x130] sm:$0xff]
      %v1333 = vld [vmem:[#allocation2 + $0x138] sm:$0xff]
      %v1334 = vld [vmem:[#allocation2 + $0x140] sm:$0xff]
      %v1335 = vld [vmem:[#allocation2 + $0x148] sm:$0xff]
      %v1336 = vld [vmem:[#allocation2 + $0x150] sm:$0xff]
      %v1337 = vld [vmem:[#allocation2 + $0x158] sm:$0xff]
      %v1338 = vld [vmem:[#allocation2 + $0x160] sm:$0xff]
      %v1339 = vld [vmem:[#allocation2 + $0x168] sm:$0xff]
      %v1340 = vld [vmem:[#allocation2 + $0x170] sm:$0xff]
      %v1341 = vld [vmem:[#allocation2 + $0x178] sm:$0xff]
      %v1342 = vpack.c.bf16 %v1295, %v1294
      %v1343 = vpack.c.bf16 %v1297, %v1296
      %v1344 = vpack.c.bf16 %v1299, %v1298
      %v1345 = vpack.c.bf16 %v1301, %v1300
      %v1346 = vpack.c.bf16 %v1303, %v1302
      %v1347 = vpack.c.bf16 %v1305, %v1304
      %v1348 = vpack.c.bf16 %v1307, %v1306
      %v1349 = vpack.c.bf16 %v1309, %v1308
      %v1350 = vpack.c.bf16 %v1311, %v1310
      %v1351 = vpack.c.bf16 %v1313, %v1312
      %v1352 = vpack.c.bf16 %v1315, %v1314
      %v1353 = vpack.c.bf16 %v1317, %v1316
      %v1354 = vpack.c.bf16 %v1319, %v1318
      %v1355 = vpack.c.bf16 %v1321, %v1320
      %v1356 = vpack.c.bf16 %v1323, %v1322
      %v1357 = vpack.c.bf16 %v1325, %v1324
      %v1358 = vpack.c.bf16 %v1327, %v1326
      %v1359 = vpack.c.bf16 %v1329, %v1328
      %v1360 = vpack.c.bf16 %v1331, %v1330
      %v1361 = vpack.c.bf16 %v1333, %v1332
      %v1362 = vpack.c.bf16 %v1335, %v1334
      %v1363 = vpack.c.bf16 %v1337, %v1336
      %v1364 = vpack.c.bf16 %v1339, %v1338
      %v1365 = vpack.c.bf16 %v1341, %v1340
      %v1366 = vld [vmem:[#allocation2 + $0x1] sm:$0xff]
      %v1367 = vld [vmem:[#allocation2 + $0x9] sm:$0xff]
      %v1368 = vld [vmem:[#allocation2 + $0x11] sm:$0xff]
      %v1369 = vld [vmem:[#allocation2 + $0x19] sm:$0xff]
      %v1370 = vld [vmem:[#allocation2 + $0x21] sm:$0xff]
      %v1371 = vld [vmem:[#allocation2 + $0x29] sm:$0xff]
      %v1372 = vld [vmem:[#allocation2 + $0x31] sm:$0xff]
      %v1373 = vld [vmem:[#allocation2 + $0x39] sm:$0xff]
      %v1374 = vld [vmem:[#allocation2 + $0x41] sm:$0xff]
      %v1375 = vld [vmem:[#allocation2 + $0x49] sm:$0xff]
      %v1376 = vld [vmem:[#allocation2 + $0x51] sm:$0xff]
      %v1377 = vld [vmem:[#allocation2 + $0x59] sm:$0xff]
      %v1378 = vld [vmem:[#allocation2 + $0x61] sm:$0xff]
      %v1379 = vld [vmem:[#allocation2 + $0x69] sm:$0xff]
      %v1380 = vld [vmem:[#allocation2 + $0x71] sm:$0xff]
      %v1381 = vld [vmem:[#allocation2 + $0x79] sm:$0xff]
      %v1382 = vld [vmem:[#allocation2 + $0x81] sm:$0xff]
      %v1383 = vld [vmem:[#allocation2 + $0x89] sm:$0xff]
      %v1384 = vld [vmem:[#allocation2 + $0x91] sm:$0xff]
      %v1385 = vld [vmem:[#allocation2 + $0x99] sm:$0xff]
      %v1386 = vld [vmem:[#allocation2 + $0xa1] sm:$0xff]
      %v1387 = vld [vmem:[#allocation2 + $0xa9] sm:$0xff]
      %v1388 = vld [vmem:[#allocation2 + $0xb1] sm:$0xff]
      %v1389 = vld [vmem:[#allocation2 + $0xb9] sm:$0xff]
      %v1390 = vld [vmem:[#allocation2 + $0xc1] sm:$0xff]
      %v1391 = vld [vmem:[#allocation2 + $0xc9] sm:$0xff]
      %v1392 = vld [vmem:[#allocation2 + $0xd1] sm:$0xff]
      %v1393 = vld [vmem:[#allocation2 + $0xd9] sm:$0xff]
      %v1394 = vld [vmem:[#allocation2 + $0xe1] sm:$0xff]
      %v1395 = vld [vmem:[#allocation2 + $0xe9] sm:$0xff]
      %v1396 = vld [vmem:[#allocation2 + $0xf1] sm:$0xff]
      %v1397 = vld [vmem:[#allocation2 + $0xf9] sm:$0xff]
      %v1398 = vld [vmem:[#allocation2 + $0x101] sm:$0xff]
      %v1399 = vld [vmem:[#allocation2 + $0x109] sm:$0xff]
      %v1400 = vld [vmem:[#allocation2 + $0x111] sm:$0xff]
      %v1401 = vld [vmem:[#allocation2 + $0x119] sm:$0xff]
      %v1402 = vld [vmem:[#allocation2 + $0x121] sm:$0xff]
      %v1403 = vld [vmem:[#allocation2 + $0x129] sm:$0xff]
      %v1404 = vld [vmem:[#allocation2 + $0x131] sm:$0xff]
      %v1405 = vld [vmem:[#allocation2 + $0x139] sm:$0xff]
      %v1406 = vld [vmem:[#allocation2 + $0x141] sm:$0xff]
      %v1407 = vld [vmem:[#allocation2 + $0x149] sm:$0xff]
      %v1408 = vld [vmem:[#allocation2 + $0x151] sm:$0xff]
      %v1409 = vld [vmem:[#allocation2 + $0x159] sm:$0xff]
      %v1410 = vld [vmem:[#allocation2 + $0x161] sm:$0xff]
      %v1411 = vld [vmem:[#allocation2 + $0x169] sm:$0xff]
      %v1412 = vld [vmem:[#allocation2 + $0x171] sm:$0xff]
      %v1413 = vld [vmem:[#allocation2 + $0x179] sm:$0xff]
      %v1414 = vpack.c.bf16 %v1367, %v1366
      %v1415 = vpack.c.bf16 %v1369, %v1368
      %v1416 = vpack.c.bf16 %v1371, %v1370
      %v1417 = vpack.c.bf16 %v1373, %v1372
      %v1418 = vpack.c.bf16 %v1375, %v1374
      %v1419 = vpack.c.bf16 %v1377, %v1376
      %v1420 = vpack.c.bf16 %v1379, %v1378
      %v1421 = vpack.c.bf16 %v1381, %v1380
      %v1422 = vpack.c.bf16 %v1383, %v1382
      %v1423 = vpack.c.bf16 %v1385, %v1384
      %v1424 = vpack.c.bf16 %v1387, %v1386
      %v1425 = vpack.c.bf16 %v1389, %v1388
      %v1426 = vpack.c.bf16 %v1391, %v1390
      %v1427 = vpack.c.bf16 %v1393, %v1392
      %v1428 = vpack.c.bf16 %v1395, %v1394
      %v1429 = vpack.c.bf16 %v1397, %v1396
      %v1430 = vpack.c.bf16 %v1399, %v1398
      %v1431 = vpack.c.bf16 %v1401, %v1400
      %v1432 = vpack.c.bf16 %v1403, %v1402
      %v1433 = vpack.c.bf16 %v1405, %v1404
      %v1434 = vpack.c.bf16 %v1407, %v1406
      %v1435 = vpack.c.bf16 %v1409, %v1408
      %v1436 = vpack.c.bf16 %v1411, %v1410
      %v1437 = vpack.c.bf16 %v1413, %v1412
      %v1438 = vld [vmem:[#allocation2 + $0x2] sm:$0xff]
      %v1439 = vld [vmem:[#allocation2 + $0xa] sm:$0xff]
      %v1440 = vld [vmem:[#allocation2 + $0x12] sm:$0xff]
      %v1441 = vld [vmem:[#allocation2 + $0x1a] sm:$0xff]
      %v1442 = vld [vmem:[#allocation2 + $0x22] sm:$0xff]
      %v1443 = vld [vmem:[#allocation2 + $0x2a] sm:$0xff]
      %v1444 = vld [vmem:[#allocation2 + $0x32] sm:$0xff]
      %v1445 = vld [vmem:[#allocation2 + $0x3a] sm:$0xff]
      %v1446 = vld [vmem:[#allocation2 + $0x42] sm:$0xff]
      %v1447 = vld [vmem:[#allocation2 + $0x4a] sm:$0xff]
      %v1448 = vld [vmem:[#allocation2 + $0x52] sm:$0xff]
      %v1449 = vld [vmem:[#allocation2 + $0x5a] sm:$0xff]
      %v1450 = vld [vmem:[#allocation2 + $0x62] sm:$0xff]
      %v1451 = vld [vmem:[#allocation2 + $0x6a] sm:$0xff]
      %v1452 = vld [vmem:[#allocation2 + $0x72] sm:$0xff]
      %v1453 = vld [vmem:[#allocation2 + $0x7a] sm:$0xff]
      %v1454 = vld [vmem:[#allocation2 + $0x82] sm:$0xff]
      %v1455 = vld [vmem:[#allocation2 + $0x8a] sm:$0xff]
      %v1456 = vld [vmem:[#allocation2 + $0x92] sm:$0xff]
      %v1457 = vld [vmem:[#allocation2 + $0x9a] sm:$0xff]
      %v1458 = vld [vmem:[#allocation2 + $0xa2] sm:$0xff]
      %v1459 = vld [vmem:[#allocation2 + $0xaa] sm:$0xff]
      %v1460 = vld [vmem:[#allocation2 + $0xb2] sm:$0xff]
      %v1461 = vld [vmem:[#allocation2 + $0xba] sm:$0xff]
      %v1462 = vld [vmem:[#allocation2 + $0xc2] sm:$0xff]
      %v1463 = vld [vmem:[#allocation2 + $0xca] sm:$0xff]
      %v1464 = vld [vmem:[#allocation2 + $0xd2] sm:$0xff]
      %v1465 = vld [vmem:[#allocation2 + $0xda] sm:$0xff]
      %v1466 = vld [vmem:[#allocation2 + $0xe2] sm:$0xff]
      %v1467 = vld [vmem:[#allocation2 + $0xea] sm:$0xff]
      %v1468 = vld [vmem:[#allocation2 + $0xf2] sm:$0xff]
      %v1469 = vld [vmem:[#allocation2 + $0xfa] sm:$0xff]
      %v1470 = vld [vmem:[#allocation2 + $0x102] sm:$0xff]
      %v1471 = vld [vmem:[#allocation2 + $0x10a] sm:$0xff]
      %v1472 = vld [vmem:[#allocation2 + $0x112] sm:$0xff]
      %v1473 = vld [vmem:[#allocation2 + $0x11a] sm:$0xff]
      %v1474 = vld [vmem:[#allocation2 + $0x122] sm:$0xff]
      %v1475 = vld [vmem:[#allocation2 + $0x12a] sm:$0xff]
      %v1476 = vld [vmem:[#allocation2 + $0x132] sm:$0xff]
      %v1477 = vld [vmem:[#allocation2 + $0x13a] sm:$0xff]
      %v1478 = vld [vmem:[#allocation2 + $0x142] sm:$0xff]
      %v1479 = vld [vmem:[#allocation2 + $0x14a] sm:$0xff]
      %v1480 = vld [vmem:[#allocation2 + $0x152] sm:$0xff]
      %v1481 = vld [vmem:[#allocation2 + $0x15a] sm:$0xff]
      %v1482 = vld [vmem:[#allocation2 + $0x162] sm:$0xff]
      %v1483 = vld [vmem:[#allocation2 + $0x16a] sm:$0xff]
      %v1484 = vld [vmem:[#allocation2 + $0x172] sm:$0xff]
      %v1485 = vld [vmem:[#allocation2 + $0x17a] sm:$0xff]
      %v1486 = vpack.c.bf16 %v1439, %v1438
      %v1487 = vpack.c.bf16 %v1441, %v1440
      %v1488 = vpack.c.bf16 %v1443, %v1442
      %v1489 = vpack.c.bf16 %v1445, %v1444
      %v1490 = vpack.c.bf16 %v1447, %v1446
      %v1491 = vpack.c.bf16 %v1449, %v1448
      %v1492 = vpack.c.bf16 %v1451, %v1450
      %v1493 = vpack.c.bf16 %v1453, %v1452
      %v1494 = vpack.c.bf16 %v1455, %v1454
      %v1495 = vpack.c.bf16 %v1457, %v1456
      %v1496 = vpack.c.bf16 %v1459, %v1458
      %v1497 = vpack.c.bf16 %v1461, %v1460
      %v1498 = vpack.c.bf16 %v1463, %v1462
      %v1499 = vpack.c.bf16 %v1465, %v1464
      %v1500 = vpack.c.bf16 %v1467, %v1466
      %v1501 = vpack.c.bf16 %v1469, %v1468
      %v1502 = vpack.c.bf16 %v1471, %v1470
      %v1503 = vpack.c.bf16 %v1473, %v1472
      %v1504 = vpack.c.bf16 %v1475, %v1474
      %v1505 = vpack.c.bf16 %v1477, %v1476
      %v1506 = vpack.c.bf16 %v1479, %v1478
      %v1507 = vpack.c.bf16 %v1481, %v1480
      %v1508 = vpack.c.bf16 %v1483, %v1482
      %v1509 = vpack.c.bf16 %v1485, %v1484
      %v1510 = vld [vmem:[#allocation2 + $0x180] sm:$0xff]
      %v1511 = vld [vmem:[#allocation2 + $0x188] sm:$0xff]
      %v1512 = vld [vmem:[#allocation2 + $0x190] sm:$0xff]
      %v1513 = vpack.c.bf16 %v1298, %v1297
      %v1514 = vpack.c.bf16 %v1300, %v1299
      %v1515 = vpack.c.bf16 %v1302, %v1301
      %v1516 = vpack.c.bf16 %v1304, %v1303
      %v1517 = vpack.c.bf16 %v1306, %v1305
      %v1518 = vpack.c.bf16 %v1308, %v1307
      %v1519 = vpack.c.bf16 %v1310, %v1309
      %v1520 = vpack.c.bf16 %v1312, %v1311
      %v1521 = vpack.c.bf16 %v1314, %v1313
      %v1522 = vpack.c.bf16 %v1316, %v1315
      %v1523 = vpack.c.bf16 %v1318, %v1317
      %v1524 = vpack.c.bf16 %v1320, %v1319
      %v1525 = vpack.c.bf16 %v1322, %v1321
      %v1526 = vpack.c.bf16 %v1324, %v1323
      %v1527 = vpack.c.bf16 %v1326, %v1325
      %v1528 = vpack.c.bf16 %v1328, %v1327
      %v1529 = vpack.c.bf16 %v1330, %v1329
      %v1530 = vpack.c.bf16 %v1332, %v1331
      %v1531 = vpack.c.bf16 %v1334, %v1333
      %v1532 = vpack.c.bf16 %v1336, %v1335
      %v1533 = vpack.c.bf16 %v1338, %v1337
      %v1534 = vpack.c.bf16 %v1340, %v1339
      %v1535 = vpack.c.bf16 %v1510, %v1341
      %v1536 = vpack.c.bf16 %v1512, %v1511
      %v1537 = vld [vmem:[#allocation2 + $0x181] sm:$0xff]
      %v1538 = vld [vmem:[#allocation2 + $0x189] sm:$0xff]
      %v1539 = vld [vmem:[#allocation2 + $0x191] sm:$0xff]
      %v1540 = vpack.c.bf16 %v1370, %v1369
      %v1541 = vpack.c.bf16 %v1372, %v1371
      %v1542 = vpack.c.bf16 %v1374, %v1373
      %v1543 = vpack.c.bf16 %v1376, %v1375
      %v1544 = vpack.c.bf16 %v1378, %v1377
      %v1545 = vpack.c.bf16 %v1380, %v1379
      %v1546 = vpack.c.bf16 %v1382, %v1381
      %v1547 = vpack.c.bf16 %v1384, %v1383
      %v1548 = vpack.c.bf16 %v1386, %v1385
      %v1549 = vpack.c.bf16 %v1388, %v1387
      %v1550 = vpack.c.bf16 %v1390, %v1389
      %v1551 = vpack.c.bf16 %v1392, %v1391
      %v1552 = vpack.c.bf16 %v1394, %v1393
      %v1553 = vpack.c.bf16 %v1396, %v1395
      %v1554 = vpack.c.bf16 %v1398, %v1397
      %v1555 = vpack.c.bf16 %v1400, %v1399
      %v1556 = vpack.c.bf16 %v1402, %v1401
      %v1557 = vpack.c.bf16 %v1404, %v1403
      %v1558 = vpack.c.bf16 %v1406, %v1405
      %v1559 = vpack.c.bf16 %v1408, %v1407
      %v1560 = vpack.c.bf16 %v1410, %v1409
      %v1561 = vpack.c.bf16 %v1412, %v1411
      %v1562 = vpack.c.bf16 %v1537, %v1413
      %v1563 = vpack.c.bf16 %v1539, %v1538
      %v1564 = vld [vmem:[#allocation2 + $0x182] sm:$0xff]
      %v1565 = vld [vmem:[#allocation2 + $0x18a] sm:$0xff]
      %v1566 = vld [vmem:[#allocation2 + $0x192] sm:$0xff]
      %v1567 = vpack.c.bf16 %v1442, %v1441
      %v1568 = vpack.c.bf16 %v1444, %v1443
      %v1569 = vpack.c.bf16 %v1446, %v1445
      %v1570 = vpack.c.bf16 %v1448, %v1447
      %v1571 = vpack.c.bf16 %v1450, %v1449
      %v1572 = vpack.c.bf16 %v1452, %v1451
      %v1573 = vpack.c.bf16 %v1454, %v1453
      %v1574 = vpack.c.bf16 %v1456, %v1455
      %v1575 = vpack.c.bf16 %v1458, %v1457
      %v1576 = vpack.c.bf16 %v1460, %v1459
      %v1577 = vpack.c.bf16 %v1462, %v1461
      %v1578 = vpack.c.bf16 %v1464, %v1463
      %v1579 = vpack.c.bf16 %v1466, %v1465
      %v1580 = vpack.c.bf16 %v1468, %v1467
      %v1581 = vpack.c.bf16 %v1470, %v1469
      %v1582 = vpack.c.bf16 %v1472, %v1471
      %v1583 = vpack.c.bf16 %v1474, %v1473
      %v1584 = vpack.c.bf16 %v1476, %v1475
      %v1585 = vpack.c.bf16 %v1478, %v1477
      %v1586 = vpack.c.bf16 %v1480, %v1479
      %v1587 = vpack.c.bf16 %v1482, %v1481
      %v1588 = vpack.c.bf16 %v1484, %v1483
      %v1589 = vpack.c.bf16 %v1564, %v1485
      %v1590 = vpack.c.bf16 %v1566, %v1565
      %v1591 = vld [vmem:[#allocation2 + $0x198] sm:$0xff]
      %v1592 = vld [vmem:[#allocation2 + $0x1a0] sm:$0xff]
      %v1593 = vld [vmem:[#allocation2 + $0x1a8] sm:$0xff]
      %v1594 = vpack.c.bf16 %v1511, %v1510
      %v1595 = vpack.c.bf16 %v1591, %v1512
      %v1596 = vpack.c.bf16 %v1593, %v1592
      %v1597 = vld [vmem:[#allocation2 + $0x199] sm:$0xff]
      %v1598 = vld [vmem:[#allocation2 + $0x1a1] sm:$0xff]
      %v1599 = vld [vmem:[#allocation2 + $0x1a9] sm:$0xff]
      %v1600 = vpack.c.bf16 %v1538, %v1537
      %v1601 = vpack.c.bf16 %v1597, %v1539
      %v1602 = vpack.c.bf16 %v1599, %v1598
      %v1603 = vld [vmem:[#allocation2 + $0x19a] sm:$0xff]
      %v1604 = vld [vmem:[#allocation2 + $0x1a2] sm:$0xff]
      %v1605 = vld [vmem:[#allocation2 + $0x1aa] sm:$0xff]
      %v1606 = vpack.c.bf16 %v1565, %v1564
      %v1607 = vpack.c.bf16 %v1603, %v1566
      %v1608 = vpack.c.bf16 %v1605, %v1604
      %1633 = vrot.lane.b32.xlu0 %v1414, 32
      %v1634 = vpop.permute.xlu0 %1633
      %1635 = vrot.lane.b32.xlu0 %v1415, 32
      %v1636 = vpop.permute.xlu0 %1635
      %1637 = vrot.lane.b32.xlu0 %v1416, 32
      %v1638 = vpop.permute.xlu0 %1637
      %1639 = vrot.lane.b32.xlu0 %v1417, 32
      %v1640 = vpop.permute.xlu0 %1639
      %1641 = vrot.lane.b32.xlu0 %v1418, 32
      %v1642 = vpop.permute.xlu0 %1641
      %1643 = vrot.lane.b32.xlu0 %v1419, 32
      %v1644 = vpop.permute.xlu0 %1643
      %1645 = vrot.lane.b32.xlu0 %v1420, 32
      %v1646 = vpop.permute.xlu0 %1645
      %1647 = vrot.lane.b32.xlu0 %v1421, 32
      %v1648 = vpop.permute.xlu0 %1647
      %1649 = vrot.lane.b32.xlu0 %v1422, 32
      %v1650 = vpop.permute.xlu0 %1649
      %1651 = vrot.lane.b32.xlu0 %v1423, 32
      %v1652 = vpop.permute.xlu0 %1651
      %1653 = vrot.lane.b32.xlu0 %v1424, 32
      %v1654 = vpop.permute.xlu0 %1653
      %1655 = vrot.lane.b32.xlu0 %v1425, 32
      %v1656 = vpop.permute.xlu0 %1655
      %1657 = vrot.lane.b32.xlu0 %v1426, 32
      %v1658 = vpop.permute.xlu0 %1657
      %1659 = vrot.lane.b32.xlu0 %v1427, 32
      %v1660 = vpop.permute.xlu0 %1659
      %1661 = vrot.lane.b32.xlu0 %v1428, 32
      %v1662 = vpop.permute.xlu0 %1661
      %1663 = vrot.lane.b32.xlu0 %v1429, 32
      %v1664 = vpop.permute.xlu0 %1663
      %1665 = vrot.lane.b32.xlu0 %v1430, 32
      %v1666 = vpop.permute.xlu0 %1665
      %1667 = vrot.lane.b32.xlu0 %v1431, 32
      %v1668 = vpop.permute.xlu0 %1667
      %1669 = vrot.lane.b32.xlu0 %v1432, 32
      %v1670 = vpop.permute.xlu0 %1669
      %1671 = vrot.lane.b32.xlu0 %v1433, 32
      %v1672 = vpop.permute.xlu0 %1671
      %1673 = vrot.lane.b32.xlu0 %v1434, 32
      %v1674 = vpop.permute.xlu0 %1673
      %1675 = vrot.lane.b32.xlu0 %v1435, 32
      %v1676 = vpop.permute.xlu0 %1675
      %1677 = vrot.lane.b32.xlu0 %v1436, 32
      %v1678 = vpop.permute.xlu0 %1677
      %1679 = vrot.lane.b32.xlu0 %v1437, 32
      %v1680 = vpop.permute.xlu0 %1679
      %1705 = vrot.lane.b32.xlu0 %v1486, 64
      %v1706 = vpop.permute.xlu0 %1705
      %1707 = vrot.lane.b32.xlu0 %v1487, 64
      %v1708 = vpop.permute.xlu0 %1707
      %1709 = vrot.lane.b32.xlu0 %v1488, 64
      %v1710 = vpop.permute.xlu0 %1709
      %1711 = vrot.lane.b32.xlu0 %v1489, 64
      %v1712 = vpop.permute.xlu0 %1711
      %1713 = vrot.lane.b32.xlu0 %v1490, 64
      %v1714 = vpop.permute.xlu0 %1713
      %1715 = vrot.lane.b32.xlu0 %v1491, 64
      %v1716 = vpop.permute.xlu0 %1715
      %1717 = vrot.lane.b32.xlu0 %v1492, 64
      %v1718 = vpop.permute.xlu0 %1717
      %1719 = vrot.lane.b32.xlu0 %v1493, 64
      %v1720 = vpop.permute.xlu0 %1719
      %1721 = vrot.lane.b32.xlu0 %v1494, 64
      %v1722 = vpop.permute.xlu0 %1721
      %1723 = vrot.lane.b32.xlu0 %v1495, 64
      %v1724 = vpop.permute.xlu0 %1723
      %1725 = vrot.lane.b32.xlu0 %v1496, 64
      %v1726 = vpop.permute.xlu0 %1725
      %1727 = vrot.lane.b32.xlu0 %v1497, 64
      %v1728 = vpop.permute.xlu0 %1727
      %1729 = vrot.lane.b32.xlu0 %v1498, 64
      %v1730 = vpop.permute.xlu0 %1729
      %1731 = vrot.lane.b32.xlu0 %v1499, 64
      %v1732 = vpop.permute.xlu0 %1731
      %1733 = vrot.lane.b32.xlu0 %v1500, 64
      %v1734 = vpop.permute.xlu0 %1733
      %1735 = vrot.lane.b32.xlu0 %v1501, 64
      %v1736 = vpop.permute.xlu0 %1735
      %1737 = vrot.lane.b32.xlu0 %v1502, 64
      %v1738 = vpop.permute.xlu0 %1737
      %1739 = vrot.lane.b32.xlu0 %v1503, 64
      %v1740 = vpop.permute.xlu0 %1739
      %1741 = vrot.lane.b32.xlu0 %v1504, 64
      %v1742 = vpop.permute.xlu0 %1741
      %1743 = vrot.lane.b32.xlu0 %v1505, 64
      %v1744 = vpop.permute.xlu0 %1743
      %1745 = vrot.lane.b32.xlu0 %v1506, 64
      %v1746 = vpop.permute.xlu0 %1745
      %1747 = vrot.lane.b32.xlu0 %v1507, 64
      %v1748 = vpop.permute.xlu0 %1747
      %1749 = vrot.lane.b32.xlu0 %v1508, 64
      %v1750 = vpop.permute.xlu0 %1749
      %1751 = vrot.lane.b32.xlu0 %v1509, 64
      %v1752 = vpop.permute.xlu0 %1751
      %1777 = vrot.lane.b32.xlu0 %v1513, 96
      %v1778 = vpop.permute.xlu0 %1777
      %1779 = vrot.lane.b32.xlu0 %v1514, 96
      %v1780 = vpop.permute.xlu0 %1779
      %1781 = vrot.lane.b32.xlu0 %v1515, 96
      %v1782 = vpop.permute.xlu0 %1781
      %1783 = vrot.lane.b32.xlu0 %v1516, 96
      %v1784 = vpop.permute.xlu0 %1783
      %1785 = vrot.lane.b32.xlu0 %v1517, 96
      %v1786 = vpop.permute.xlu0 %1785
      %1787 = vrot.lane.b32.xlu0 %v1518, 96
      %v1788 = vpop.permute.xlu0 %1787
      %1789 = vrot.lane.b32.xlu0 %v1519, 96
      %v1790 = vpop.permute.xlu0 %1789
      %1791 = vrot.lane.b32.xlu0 %v1520, 96
      %v1792 = vpop.permute.xlu0 %1791
      %1793 = vrot.lane.b32.xlu0 %v1521, 96
      %v1794 = vpop.permute.xlu0 %1793
      %1795 = vrot.lane.b32.xlu0 %v1522, 96
      %v1796 = vpop.permute.xlu0 %1795
      %1797 = vrot.lane.b32.xlu0 %v1523, 96
      %v1798 = vpop.permute.xlu0 %1797
      %1799 = vrot.lane.b32.xlu0 %v1524, 96
      %v1800 = vpop.permute.xlu0 %1799
      %1801 = vrot.lane.b32.xlu0 %v1525, 96
      %v1802 = vpop.permute.xlu0 %1801
      %1803 = vrot.lane.b32.xlu0 %v1526, 96
      %v1804 = vpop.permute.xlu0 %1803
      %1805 = vrot.lane.b32.xlu0 %v1527, 96
      %v1806 = vpop.permute.xlu0 %1805
      %1807 = vrot.lane.b32.xlu0 %v1528, 96
      %v1808 = vpop.permute.xlu0 %1807
      %1809 = vrot.lane.b32.xlu0 %v1529, 96
      %v1810 = vpop.permute.xlu0 %1809
      %1811 = vrot.lane.b32.xlu0 %v1530, 96
      %v1812 = vpop.permute.xlu0 %1811
      %1813 = vrot.lane.b32.xlu0 %v1531, 96
      %v1814 = vpop.permute.xlu0 %1813
      %1815 = vrot.lane.b32.xlu0 %v1532, 96
      %v1816 = vpop.permute.xlu0 %1815
      %1817 = vrot.lane.b32.xlu0 %v1533, 96
      %v1818 = vpop.permute.xlu0 %1817
      %1819 = vrot.lane.b32.xlu0 %v1534, 96
      %v1820 = vpop.permute.xlu0 %1819
      %1821 = vrot.lane.b32.xlu0 %v1535, 96
      %v1822 = vpop.permute.xlu0 %1821
      %1823 = vrot.lane.b32.xlu0 %v1536, 96
      %v1824 = vpop.permute.xlu0 %1823
      %1849 = vrot.lane.b32.xlu0 %v1567, 32
      %v1850 = vpop.permute.xlu0 %1849
      %1851 = vrot.lane.b32.xlu0 %v1568, 32
      %v1852 = vpop.permute.xlu0 %1851
      %1853 = vrot.lane.b32.xlu0 %v1569, 32
      %v1854 = vpop.permute.xlu0 %1853
      %1855 = vrot.lane.b32.xlu0 %v1570, 32
      %v1856 = vpop.permute.xlu0 %1855
      %1857 = vrot.lane.b32.xlu0 %v1571, 32
      %v1858 = vpop.permute.xlu0 %1857
      %1859 = vrot.lane.b32.xlu0 %v1572, 32
      %v1860 = vpop.permute.xlu0 %1859
      %1861 = vrot.lane.b32.xlu0 %v1573, 32
      %v1862 = vpop.permute.xlu0 %1861
      %1863 = vrot.lane.b32.xlu0 %v1574, 32
      %v1864 = vpop.permute.xlu0 %1863
      %1865 = vrot.lane.b32.xlu0 %v1575, 32
      %v1866 = vpop.permute.xlu0 %1865
      %1867 = vrot.lane.b32.xlu0 %v1576, 32
      %v1868 = vpop.permute.xlu0 %1867
      %1869 = vrot.lane.b32.xlu0 %v1577, 32
      %v1870 = vpop.permute.xlu0 %1869
      %1871 = vrot.lane.b32.xlu0 %v1578, 32
      %v1872 = vpop.permute.xlu0 %1871
      %1873 = vrot.lane.b32.xlu0 %v1579, 32
      %v1874 = vpop.permute.xlu0 %1873
      %1875 = vrot.lane.b32.xlu0 %v1580, 32
      %v1876 = vpop.permute.xlu0 %1875
      %1877 = vrot.lane.b32.xlu0 %v1581, 32
      %v1878 = vpop.permute.xlu0 %1877
      %1879 = vrot.lane.b32.xlu0 %v1582, 32
      %v1880 = vpop.permute.xlu0 %1879
      %1881 = vrot.lane.b32.xlu0 %v1583, 32
      %v1882 = vpop.permute.xlu0 %1881
      %1883 = vrot.lane.b32.xlu0 %v1584, 32
      %v1884 = vpop.permute.xlu0 %1883
      %1885 = vrot.lane.b32.xlu0 %v1585, 32
      %v1886 = vpop.permute.xlu0 %1885
      %1887 = vrot.lane.b32.xlu0 %v1586, 32
      %v1888 = vpop.permute.xlu0 %1887
      %1889 = vrot.lane.b32.xlu0 %v1587, 32
      %v1890 = vpop.permute.xlu0 %1889
      %1891 = vrot.lane.b32.xlu0 %v1588, 32
      %v1892 = vpop.permute.xlu0 %1891
      %1893 = vrot.lane.b32.xlu0 %v1589, 32
      %v1894 = vpop.permute.xlu0 %1893
      %1895 = vrot.lane.b32.xlu0 %v1590, 32
      %v1896 = vpop.permute.xlu0 %1895
      %1921 = vrot.lane.b32.xlu0 %v1345, 64
      %v1922 = vpop.permute.xlu0 %1921
      %1923 = vrot.lane.b32.xlu0 %v1346, 64
      %v1924 = vpop.permute.xlu0 %1923
      %1925 = vrot.lane.b32.xlu0 %v1347, 64
      %v1926 = vpop.permute.xlu0 %1925
      %1927 = vrot.lane.b32.xlu0 %v1348, 64
      %v1928 = vpop.permute.xlu0 %1927
      %1929 = vrot.lane.b32.xlu0 %v1349, 64
      %v1930 = vpop.permute.xlu0 %1929
      %1931 = vrot.lane.b32.xlu0 %v1350, 64
      %v1932 = vpop.permute.xlu0 %1931
      %1933 = vrot.lane.b32.xlu0 %v1351, 64
      %v1934 = vpop.permute.xlu0 %1933
      %1935 = vrot.lane.b32.xlu0 %v1352, 64
      %v1936 = vpop.permute.xlu0 %1935
      %1937 = vrot.lane.b32.xlu0 %v1353, 64
      %v1938 = vpop.permute.xlu0 %1937
      %1939 = vrot.lane.b32.xlu0 %v1354, 64
      %v1940 = vpop.permute.xlu0 %1939
      %1941 = vrot.lane.b32.xlu0 %v1355, 64
      %v1942 = vpop.permute.xlu0 %1941
      %1943 = vrot.lane.b32.xlu0 %v1356, 64
      %v1944 = vpop.permute.xlu0 %1943
      %1945 = vrot.lane.b32.xlu0 %v1357, 64
      %v1946 = vpop.permute.xlu0 %1945
      %1947 = vrot.lane.b32.xlu0 %v1358, 64
      %v1948 = vpop.permute.xlu0 %1947
      %1949 = vrot.lane.b32.xlu0 %v1359, 64
      %v1950 = vpop.permute.xlu0 %1949
      %1951 = vrot.lane.b32.xlu0 %v1360, 64
      %v1952 = vpop.permute.xlu0 %1951
      %1953 = vrot.lane.b32.xlu0 %v1361, 64
      %v1954 = vpop.permute.xlu0 %1953
      %1955 = vrot.lane.b32.xlu0 %v1362, 64
      %v1956 = vpop.permute.xlu0 %1955
      %1957 = vrot.lane.b32.xlu0 %v1363, 64
      %v1958 = vpop.permute.xlu0 %1957
      %1959 = vrot.lane.b32.xlu0 %v1364, 64
      %v1960 = vpop.permute.xlu0 %1959
      %1961 = vrot.lane.b32.xlu0 %v1365, 64
      %v1962 = vpop.permute.xlu0 %1961
      %1963 = vrot.lane.b32.xlu0 %v1594, 64
      %v1964 = vpop.permute.xlu0 %1963
      %1965 = vrot.lane.b32.xlu0 %v1595, 64
      %v1966 = vpop.permute.xlu0 %1965
      %1967 = vrot.lane.b32.xlu0 %v1596, 64
      %v1968 = vpop.permute.xlu0 %1967
      %1972 = vrot.lane.b32.xlu0 %v1417, 96
      %v1973 = vpop.permute.xlu0 %1972
      %1974 = vrot.lane.b32.xlu0 %v1418, 96
      %v1975 = vpop.permute.xlu0 %1974
      %1976 = vrot.lane.b32.xlu0 %v1419, 96
      %v1977 = vpop.permute.xlu0 %1976
      %1978 = vrot.lane.b32.xlu0 %v1420, 96
      %v1979 = vpop.permute.xlu0 %1978
      %1980 = vrot.lane.b32.xlu0 %v1421, 96
      %v1981 = vpop.permute.xlu0 %1980
      %1982 = vrot.lane.b32.xlu0 %v1422, 96
      %v1983 = vpop.permute.xlu0 %1982
      %1984 = vrot.lane.b32.xlu0 %v1423, 96
      %v1985 = vpop.permute.xlu0 %1984
      %1986 = vrot.lane.b32.xlu0 %v1424, 96
      %v1987 = vpop.permute.xlu0 %1986
      %1988 = vrot.lane.b32.xlu0 %v1425, 96
      %v1989 = vpop.permute.xlu0 %1988
      %1990 = vrot.lane.b32.xlu0 %v1426, 96
      %v1991 = vpop.permute.xlu0 %1990
      %1992 = vrot.lane.b32.xlu0 %v1427, 96
      %v1993 = vpop.permute.xlu0 %1992
      %1994 = vrot.lane.b32.xlu0 %v1428, 96
      %v1995 = vpop.permute.xlu0 %1994
      %1996 = vrot.lane.b32.xlu0 %v1429, 96
      %v1997 = vpop.permute.xlu0 %1996
      %1998 = vrot.lane.b32.xlu0 %v1430, 96
      %v1999 = vpop.permute.xlu0 %1998
      %2000 = vrot.lane.b32.xlu0 %v1431, 96
      %v2001 = vpop.permute.xlu0 %2000
      %2002 = vrot.lane.b32.xlu0 %v1432, 96
      %v2003 = vpop.permute.xlu0 %2002
      %2004 = vrot.lane.b32.xlu0 %v1433, 96
      %v2005 = vpop.permute.xlu0 %2004
      %2006 = vrot.lane.b32.xlu0 %v1434, 96
      %v2007 = vpop.permute.xlu0 %2006
      %2008 = vrot.lane.b32.xlu0 %v1435, 96
      %v2009 = vpop.permute.xlu0 %2008
      %2010 = vrot.lane.b32.xlu0 %v1436, 96
      %v2011 = vpop.permute.xlu0 %2010
      %2012 = vrot.lane.b32.xlu0 %v1437, 96
      %v2013 = vpop.permute.xlu0 %2012
      %2014 = vrot.lane.b32.xlu0 %v1600, 96
      %v2015 = vpop.permute.xlu0 %2014
      %2016 = vrot.lane.b32.xlu0 %v1601, 96
      %v2017 = vpop.permute.xlu0 %2016
      %2018 = vrot.lane.b32.xlu0 %v1602, 96
      %v2019 = vpop.permute.xlu0 %2018
      %v2022 = vsel %vm852, %v1342, %v1634
      %v2025 = vsel %vm852, %v1343, %v1636
      %v2028 = vsel %vm852, %v1344, %v1638
      %v2031 = vsel %vm852, %v1345, %v1640
      %v2034 = vsel %vm852, %v1346, %v1642
      %v2037 = vsel %vm852, %v1347, %v1644
      %v2040 = vsel %vm852, %v1348, %v1646
      %v2043 = vsel %vm852, %v1349, %v1648
      %v2046 = vsel %vm852, %v1350, %v1650
      %v2049 = vsel %vm852, %v1351, %v1652
      %v2052 = vsel %vm852, %v1352, %v1654
      %v2055 = vsel %vm852, %v1353, %v1656
      %v2058 = vsel %vm852, %v1354, %v1658
      %v2061 = vsel %vm852, %v1355, %v1660
      %v2064 = vsel %vm852, %v1356, %v1662
      %v2067 = vsel %vm852, %v1357, %v1664
      %v2070 = vsel %vm852, %v1358, %v1666
      %v2073 = vsel %vm852, %v1359, %v1668
      %v2076 = vsel %vm852, %v1360, %v1670
      %v2079 = vsel %vm852, %v1361, %v1672
      %v2082 = vsel %vm852, %v1362, %v1674
      %v2085 = vsel %vm852, %v1363, %v1676
      %v2088 = vsel %vm852, %v1364, %v1678
      %v2091 = vsel %vm852, %v1365, %v1680
      %vm2092 = vcmask 523264
      %v2094 = vsel %vm2092, %v2022, %v1706
      %v2096 = vsel %vm2092, %v2025, %v1708
      %v2098 = vsel %vm2092, %v2028, %v1710
      %v2100 = vsel %vm2092, %v2031, %v1712
      %v2102 = vsel %vm2092, %v2034, %v1714
      %v2104 = vsel %vm2092, %v2037, %v1716
      %v2106 = vsel %vm2092, %v2040, %v1718
      %v2108 = vsel %vm2092, %v2043, %v1720
      %v2110 = vsel %vm2092, %v2046, %v1722
      %v2112 = vsel %vm2092, %v2049, %v1724
      %v2114 = vsel %vm2092, %v2052, %v1726
      %v2116 = vsel %vm2092, %v2055, %v1728
      %v2118 = vsel %vm2092, %v2058, %v1730
      %v2120 = vsel %vm2092, %v2061, %v1732
      %v2122 = vsel %vm2092, %v2064, %v1734
      %v2124 = vsel %vm2092, %v2067, %v1736
      %v2126 = vsel %vm2092, %v2070, %v1738
      %v2128 = vsel %vm2092, %v2073, %v1740
      %v2130 = vsel %vm2092, %v2076, %v1742
      %v2132 = vsel %vm2092, %v2079, %v1744
      %v2134 = vsel %vm2092, %v2082, %v1746
      %v2136 = vsel %vm2092, %v2085, %v1748
      %v2138 = vsel %vm2092, %v2088, %v1750
      %v2140 = vsel %vm2092, %v2091, %v1752
      %vm2141 = vcmask 785408
      %v2143 = vsel %vm2141, %v2094, %v1778
      %v2146 = vsel %vm2141, %v2096, %v1780
      %v2149 = vsel %vm2141, %v2098, %v1782
      %v2152 = vsel %vm2141, %v2100, %v1784
      %v2155 = vsel %vm2141, %v2102, %v1786
      %v2158 = vsel %vm2141, %v2104, %v1788
      %v2161 = vsel %vm2141, %v2106, %v1790
      %v2164 = vsel %vm2141, %v2108, %v1792
      %v2167 = vsel %vm2141, %v2110, %v1794
      %v2170 = vsel %vm2141, %v2112, %v1796
      %v2173 = vsel %vm2141, %v2114, %v1798
      %v2176 = vsel %vm2141, %v2116, %v1800
      %v2179 = vsel %vm2141, %v2118, %v1802
      %v2182 = vsel %vm2141, %v2120, %v1804
      %v2185 = vsel %vm2141, %v2122, %v1806
      %v2188 = vsel %vm2141, %v2124, %v1808
      %v2191 = vsel %vm2141, %v2126, %v1810
      %v2194 = vsel %vm2141, %v2128, %v1812
      %v2197 = vsel %vm2141, %v2130, %v1814
      %v2200 = vsel %vm2141, %v2132, %v1816
      %v2203 = vsel %vm2141, %v2134, %v1818
      %v2206 = vsel %vm2141, %v2136, %v1820
      %v2209 = vsel %vm2141, %v2138, %v1822
      %v2212 = vsel %vm2141, %v2140, %v1824
      %v2216 = vsel %vm852, %v1540, %v1850
      %v2219 = vsel %vm852, %v1541, %v1852
      %v2222 = vsel %vm852, %v1542, %v1854
      %v2225 = vsel %vm852, %v1543, %v1856
      %v2228 = vsel %vm852, %v1544, %v1858
      %v2231 = vsel %vm852, %v1545, %v1860
      %v2234 = vsel %vm852, %v1546, %v1862
      %v2237 = vsel %vm852, %v1547, %v1864
      %v2240 = vsel %vm852, %v1548, %v1866
      %v2243 = vsel %vm852, %v1549, %v1868
      %v2246 = vsel %vm852, %v1550, %v1870
      %v2249 = vsel %vm852, %v1551, %v1872
      %v2252 = vsel %vm852, %v1552, %v1874
      %v2255 = vsel %vm852, %v1553, %v1876
      %v2258 = vsel %vm852, %v1554, %v1878
      %v2261 = vsel %vm852, %v1555, %v1880
      %v2264 = vsel %vm852, %v1556, %v1882
      %v2267 = vsel %vm852, %v1557, %v1884
      %v2270 = vsel %vm852, %v1558, %v1886
      %v2273 = vsel %vm852, %v1559, %v1888
      %v2276 = vsel %vm852, %v1560, %v1890
      %v2279 = vsel %vm852, %v1561, %v1892
      %v2282 = vsel %vm852, %v1562, %v1894
      %v2285 = vsel %vm852, %v1563, %v1896
      %v2287 = vsel %vm2092, %v2216, %v1922
      %v2289 = vsel %vm2092, %v2219, %v1924
      %v2291 = vsel %vm2092, %v2222, %v1926
      %v2293 = vsel %vm2092, %v2225, %v1928
      %v2295 = vsel %vm2092, %v2228, %v1930
      %v2297 = vsel %vm2092, %v2231, %v1932
      %v2299 = vsel %vm2092, %v2234, %v1934
      %v2301 = vsel %vm2092, %v2237, %v1936
      %v2303 = vsel %vm2092, %v2240, %v1938
      %v2305 = vsel %vm2092, %v2243, %v1940
      %v2307 = vsel %vm2092, %v2246, %v1942
      %v2309 = vsel %vm2092, %v2249, %v1944
      %v2311 = vsel %vm2092, %v2252, %v1946
      %v2313 = vsel %vm2092, %v2255, %v1948
      %v2315 = vsel %vm2092, %v2258, %v1950
      %v2317 = vsel %vm2092, %v2261, %v1952
      %v2319 = vsel %vm2092, %v2264, %v1954
      %v2321 = vsel %vm2092, %v2267, %v1956
      %v2323 = vsel %vm2092, %v2270, %v1958
      %v2325 = vsel %vm2092, %v2273, %v1960
      %v2327 = vsel %vm2092, %v2276, %v1962
      %v2329 = vsel %vm2092, %v2279, %v1964
      %v2331 = vsel %vm2092, %v2282, %v1966
      %v2333 = vsel %vm2092, %v2285, %v1968
      %v2335 = vsel %vm2141, %v2287, %v1973
      %v2338 = vsel %vm2141, %v2289, %v1975
      %v2341 = vsel %vm2141, %v2291, %v1977
      %v2344 = vsel %vm2141, %v2293, %v1979
      %v2347 = vsel %vm2141, %v2295, %v1981
      %v2350 = vsel %vm2141, %v2297, %v1983
      %v2353 = vsel %vm2141, %v2299, %v1985
      %v2356 = vsel %vm2141, %v2301, %v1987
      %v2359 = vsel %vm2141, %v2303, %v1989
      %v2362 = vsel %vm2141, %v2305, %v1991
      %v2365 = vsel %vm2141, %v2307, %v1993
      %v2368 = vsel %vm2141, %v2309, %v1995
      %v2371 = vsel %vm2141, %v2311, %v1997
      %v2374 = vsel %vm2141, %v2313, %v1999
      %v2377 = vsel %vm2141, %v2315, %v2001
      %v2380 = vsel %vm2141, %v2317, %v2003
      %v2383 = vsel %vm2141, %v2319, %v2005
      %v2386 = vsel %vm2141, %v2321, %v2007
      %v2389 = vsel %vm2141, %v2323, %v2009
      %v2392 = vsel %vm2141, %v2325, %v2011
      %v2395 = vsel %vm2141, %v2327, %v2013
      %v2398 = vsel %vm2141, %v2329, %v2015
      %v2401 = vsel %vm2141, %v2331, %v2017
      %v2404 = vsel %vm2141, %v2333, %v2019
      %v2406 = vld [vmem:[%s3] sm:$0xf]
      %v2407 = vld [vmem:[%s3 + $0x4] sm:$0xf]
      %v2408 = vld [vmem:[%s3 + $0x8] sm:$0xf]
      %v2409 = vld [vmem:[%s3 + $0xc] sm:$0xf]
      %v2410 = vld [vmem:[%s3 + $0x10] sm:$0xf]
      %v2411 = vld [vmem:[%s3 + $0x14] sm:$0xf]
      %v2412 = vld [vmem:[%s3 + $0x18] sm:$0xf]
      %v2413 = vld [vmem:[%s3 + $0x1c] sm:$0xf]
      %v2414 = vld [vmem:[%s3 + $0x20] sm:$0xf]
      %v2415 = vld [vmem:[%s3 + $0x24] sm:$0xf]
      %v2416 = vld [vmem:[%s3 + $0x28] sm:$0xf]
      %v2417 = vld [vmem:[%s3 + $0x2c] sm:$0xf]
      %v2418 = vld [vmem:[%s3 + $0x30] sm:$0xf]
      %v2419 = vld [vmem:[%s3 + $0x34] sm:$0xf]
      %v2420 = vld [vmem:[%s3 + $0x38] sm:$0xf]
      %v2421 = vld [vmem:[%s3 + $0x3c] sm:$0xf]
      %v2422 = vld [vmem:[%s3 + $0x40] sm:$0xf]
      %v2423 = vld [vmem:[%s3 + $0x44] sm:$0xf]
      %v2424 = vld [vmem:[%s3 + $0x48] sm:$0xf]
      %v2425 = vld [vmem:[%s3 + $0x4c] sm:$0xf]
      %v2426 = vld [vmem:[%s3 + $0x50] sm:$0xf]
      %v2427 = vld [vmem:[%s3 + $0x54] sm:$0xf]
      %v2428 = vld [vmem:[%s3 + $0x58] sm:$0xf]
      %v2429 = vld [vmem:[%s3 + $0x5c] sm:$0xf]
      %v2430 = vld [vmem:[%s3 + $0x60] sm:$0xf]
      %v2431 = vld [vmem:[%s3 + $0x64] sm:$0xf]
      %v2432 = vld [vmem:[%s3 + $0x68] sm:$0xf]
      %v2433 = vld [vmem:[%s3 + $0x6c] sm:$0xf]
      %v2434 = vld [vmem:[%s3 + $0x70] sm:$0xf]
      %v2435 = vld [vmem:[%s3 + $0x74] sm:$0xf]
      %v2436 = vld [vmem:[%s3 + $0x78] sm:$0xf]
      %v2437 = vld [vmem:[%s3 + $0x7c] sm:$0xf]
      %v2438 = vld [vmem:[%s3 + $0x80] sm:$0xf]
      %v2439 = vld [vmem:[%s3 + $0x84] sm:$0xf]
      %v2440 = vld [vmem:[%s3 + $0x88] sm:$0xf]
      %v2441 = vld [vmem:[%s3 + $0x8c] sm:$0xf]
      %v2442 = vld [vmem:[%s4] sm:$0x1]
      %v2444 = vlaneseq
      %v2445 = vshrl.u32 %v2444, 7
      %v2446 = vsub.s32 0, %v2445
      %v2447 = vrot.slane %v2442, %v2446
      %v2485 = vunpack.c.l.b16 %v2406
      %v2486 = vunpack.c.l.b16 %v2407
      %v2487 = vunpack.c.l.b16 %v2408
      %v2488 = vunpack.c.l.b16 %v2409
      %v2489 = vunpack.c.l.b16 %v2410
      %v2490 = vunpack.c.l.b16 %v2411
      %v2491 = vunpack.c.l.b16 %v2412
      %v2492 = vunpack.c.l.b16 %v2413
      %v2493 = vunpack.c.l.b16 %v2414
      %v2494 = vunpack.c.l.b16 %v2415
      %v2495 = vunpack.c.l.b16 %v2416
      %v2496 = vunpack.c.l.b16 %v2417
      %v2497 = vunpack.c.l.b16 %v2418
      %v2498 = vunpack.c.l.b16 %v2419
      %v2499 = vunpack.c.l.b16 %v2420
      %v2500 = vunpack.c.l.b16 %v2421
      %v2501 = vunpack.c.l.b16 %v2422
      %v2502 = vunpack.c.l.b16 %v2423
      %v2503 = vunpack.c.l.b16 %v2424
      %v2504 = vunpack.c.l.b16 %v2425
      %v2505 = vunpack.c.l.b16 %v2426
      %v2506 = vunpack.c.l.b16 %v2427
      %v2507 = vunpack.c.l.b16 %v2428
      %v2508 = vunpack.c.l.b16 %v2429
      %v2509 = vunpack.c.l.b16 %v2430
      %v2510 = vunpack.c.l.b16 %v2431
      %v2511 = vunpack.c.l.b16 %v2432
      %v2512 = vunpack.c.l.b16 %v2433
      %v2513 = vunpack.c.l.b16 %v2434
      %v2514 = vunpack.c.l.b16 %v2435
      %v2515 = vunpack.c.l.b16 %v2436
      %v2516 = vunpack.c.l.b16 %v2437
      %v2517 = vunpack.c.l.b16 %v2438
      %v2518 = vunpack.c.l.b16 %v2439
      %v2519 = vunpack.c.l.b16 %v2440
      %v2520 = vunpack.c.l.b16 %v2441
      %v2521 = vpack.c.b16 %v2486, %v2485
      %v2522 = vpack.c.b16 %v2488, %v2487
      %v2523 = vpack.c.b16 %v2490, %v2489
      %v2524 = vpack.c.b16 %v2492, %v2491
      %v2525 = vpack.c.b16 %v2494, %v2493
      %v2526 = vpack.c.b16 %v2496, %v2495
      %v2527 = vpack.c.b16 %v2498, %v2497
      %v2528 = vpack.c.b16 %v2500, %v2499
      %v2529 = vpack.c.b16 %v2502, %v2501
      %v2530 = vpack.c.b16 %v2504, %v2503
      %v2531 = vpack.c.b16 %v2506, %v2505
      %v2532 = vpack.c.b16 %v2508, %v2507
      %v2533 = vpack.c.b16 %v2510, %v2509
      %v2534 = vpack.c.b16 %v2512, %v2511
      %v2535 = vpack.c.b16 %v2514, %v2513
      %v2536 = vpack.c.b16 %v2516, %v2515
      %v2537 = vpack.c.b16 %v2518, %v2517
      %v2538 = vpack.c.b16 %v2520, %v2519
      %v2558 = vsel %vm852, %v1489, 0
      %v2561 = vsel %vm852, %v1490, 0
      %v2564 = vsel %vm852, %v1491, 0
      %v2567 = vsel %vm852, %v1492, 0
      %v2570 = vsel %vm852, %v1493, 0
      %v2573 = vsel %vm852, %v1494, 0
      %v2576 = vsel %vm852, %v1495, 0
      %v2579 = vsel %vm852, %v1496, 0
      %v2582 = vsel %vm852, %v1497, 0
      %v2585 = vsel %vm852, %v1498, 0
      %v2588 = vsel %vm852, %v1499, 0
      %v2591 = vsel %vm852, %v1500, 0
      %v2594 = vsel %vm852, %v1501, 0
      %v2597 = vsel %vm852, %v1502, 0
      %v2600 = vsel %vm852, %v1503, 0
      %v2603 = vsel %vm852, %v1504, 0
      %v2606 = vsel %vm852, %v1505, 0
      %v2609 = vsel %vm852, %v1506, 0
      %v2612 = vsel %vm852, %v1507, 0
      %v2615 = vsel %vm852, %v1508, 0
      %v2618 = vsel %vm852, %v1509, 0
      %v2621 = vsel %vm852, %v1606, 0
      %v2624 = vsel %vm852, %v1607, 0
      %v2627 = vsel %vm852, %v1608, 0
      %2629 = vmatprep.subr.bf16.mxu0 0
      %2630 = vmatpush1.bf16.msra.mxu0 %v2521
      %2631 = vmatprep.subr.bf16.mxu0 0
      %2632 = vmatpush1.bf16.msra.mxu0 %v2522
      %2633 = vmatprep.subr.bf16.mxu0 0
      %2634 = vmatpush1.bf16.msra.mxu0 %v2523
      %2635 = vmatprep.subr.bf16.mxu0 0
      %2636 = vmatpush1.bf16.msra.mxu0 %v2524
      %2637 = vmatprep.subr.bf16.mxu0 0
      %2638 = vmatpush1.bf16.msra.mxu0 %v2525
      %2639 = vmatprep.subr.bf16.mxu0 0
      %2640 = vmatpush1.bf16.msra.mxu0 %v2526
      %2641 = vmatprep.subr.bf16.mxu0 0
      %2642 = vmatpush1.bf16.msra.mxu0 %v2527
      %2643 = vmatprep.subr.bf16.mxu0 0
      %2644 = vmatpush1.bf16.msra.mxu0 %v2528
      %2645 = vmatprep.subr.bf16.mxu0 0
      %2646 = vmatpush1.bf16.msra.mxu0 %v2529
      %2647 = vmatprep.subr.bf16.mxu0 0
      %2648 = vmatpush1.bf16.msra.mxu0 %v2530
      %2649 = vmatprep.subr.bf16.mxu0 0
      %2650 = vmatpush1.bf16.msra.mxu0 %v2531
      %2651 = vmatprep.subr.bf16.mxu0 0
      %2652 = vmatpush1.bf16.msra.mxu0 %v2532
      %2653 = vmatprep.subr.bf16.mxu0 0
      %2654 = vmatpush1.bf16.msra.mxu0 %v2533
      %2655 = vmatprep.subr.bf16.mxu0 0
      %2656 = vmatpush1.bf16.msra.mxu0 %v2534
      %2657 = vmatprep.subr.bf16.mxu0 0
      %2658 = vmatpush1.bf16.msra.mxu0 %v2535
      %2659 = vmatprep.subr.bf16.mxu0 0
      %2660 = vmatpush1.bf16.msra.mxu0 %v2536
      %2661 = vmatprep.mubr.bf16.mxu0 %v2335
      %2662 = vmatmul.mubr.bf16.gmra.mrb[0].mxu0 %v2143
      %v2663 = vpop.f32.mrb[0].mxu0
      %v2664 = vadd.f32 %v2447, %v2663
      %v2665 = vpop.f32.mrb[0].mxu0
      %v2666 = vpop.f32.mrb[0].mxu0
      %v2667 = vadd.f32 %v2447, %v2666
      %v2668 = vpop.f32.mrb[0].mxu0
      %2669 = vmatprep.mubr.bf16.mxu0 %v2338
      %2670 = vmatmul.mubr.bf16.gmra.mrb[0].mxu0 %v2146
      %v2671 = vpop.f32.mrb[0].mxu0
      %v2672 = vadd.f32 %v2447, %v2671
      %v2673 = vpop.f32.mrb[0].mxu0
      %v2674 = vpop.f32.mrb[0].mxu0
      %v2675 = vadd.f32 %v2447, %v2674
      %v2676 = vpop.f32.mrb[0].mxu0
      %2677 = vmatprep.mubr.bf16.mxu0 %v2341
      %2678 = vmatmul.mubr.bf16.gmra.mrb[0].mxu0 %v2149
      %v2679 = vpop.f32.mrb[0].mxu0
      %v2680 = vadd.f32 %v2447, %v2679
      %v2681 = vpop.f32.mrb[0].mxu0
      %v2682 = vpop.f32.mrb[0].mxu0
      %v2683 = vadd.f32 %v2447, %v2682
      %v2684 = vpop.f32.mrb[0].mxu0
      %2685 = vmatprep.mubr.bf16.mxu0 %v2344
      %2686 = vmatmul.mubr.bf16.gmra.mrb[0].mxu0 %v2152
      %v2687 = vpop.f32.mrb[0].mxu0
      %v2688 = vadd.f32 %v2447, %v2687
      %v2689 = vpop.f32.mrb[0].mxu0
      %v2690 = vpop.f32.mrb[0].mxu0
      %v2691 = vadd.f32 %v2447, %v2690
      %v2692 = vpop.f32.mrb[0].mxu0
      %2693 = vmatprep.mubr.bf16.mxu0 %v2347
      %2694 = vmatmul.mubr.bf16.gmra.mrb[0].mxu0 %v2155
      %v2695 = vpop.f32.mrb[0].mxu0
      %v2696 = vadd.f32 %v2447, %v2695
      %v2697 = vpop.f32.mrb[0].mxu0
      %v2698 = vpop.f32.mrb[0].mxu0
      %v2699 = vadd.f32 %v2447, %v2698
      %v2700 = vpop.f32.mrb[0].mxu0
      %2701 = vmatprep.mubr.bf16.mxu0 %v2350
      %2702 = vmatmul.mubr.bf16.gmra.mrb[0].mxu0 %v2158
      %v2703 = vpop.f32.mrb[0].mxu0
      %v2704 = vadd.f32 %v2447, %v2703
      %v2705 = vpop.f32.mrb[0].mxu0
      %v2706 = vpop.f32.mrb[0].mxu0
      %v2707 = vadd.f32 %v2447, %v2706
      %v2708 = vpop.f32.mrb[0].mxu0
      %2709 = vmatprep.mubr.bf16.mxu0 %v2353
      %2710 = vmatmul.mubr.bf16.gmra.mrb[0].mxu0 %v2161
      %v2711 = vpop.f32.mrb[0].mxu0
      %v2712 = vadd.f32 %v2447, %v2711
      %v2713 = vpop.f32.mrb[0].mxu0
      %v2714 = vpop.f32.mrb[0].mxu0
      %v2715 = vadd.f32 %v2447, %v2714
      %v2716 = vpop.f32.mrb[0].mxu0
      %2717 = vmatprep.mubr.bf16.mxu0 %v2356
      %2718 = vmatmul.mubr.bf16.gmra.mrb[0].mxu0 %v2164
      %v2719 = vpop.f32.mrb[0].mxu0
      %v2720 = vadd.f32 %v2447, %v2719
      %v2721 = vpop.f32.mrb[0].mxu0
      %v2722 = vpop.f32.mrb[0].mxu0
      %v2723 = vadd.f32 %v2447, %v2722
      %v2724 = vpop.f32.mrb[0].mxu0
      %2725 = vmatprep.mubr.bf16.mxu0 %v2359
      %2726 = vmatmul.mubr.bf16.gmra.mrb[0].mxu0 %v2167
      %v2727 = vpop.f32.mrb[0].mxu0
      %v2728 = vadd.f32 %v2447, %v2727
      %v2729 = vpop.f32.mrb[0].mxu0
      %v2730 = vpop.f32.mrb[0].mxu0
      %v2731 = vadd.f32 %v2447, %v2730
      %v2732 = vpop.f32.mrb[0].mxu0
      %2733 = vmatprep.mubr.bf16.mxu0 %v2362
      %2734 = vmatmul.mubr.bf16.gmra.mrb[0].mxu0 %v2170
      %v2735 = vpop.f32.mrb[0].mxu0
      %v2736 = vadd.f32 %v2447, %v2735
      %v2737 = vpop.f32.mrb[0].mxu0
      %v2738 = vpop.f32.mrb[0].mxu0
      %v2739 = vadd.f32 %v2447, %v2738
      %v2740 = vpop.f32.mrb[0].mxu0
      %2741 = vmatprep.mubr.bf16.mxu0 %v2365
      %2742 = vmatmul.mubr.bf16.gmra.mrb[0].mxu0 %v2173
      %v2743 = vpop.f32.mrb[0].mxu0
      %v2744 = vadd.f32 %v2447, %v2743
      %v2745 = vpop.f32.mrb[0].mxu0
      %v2746 = vpop.f32.mrb[0].mxu0
      %v2747 = vadd.f32 %v2447, %v2746
      %v2748 = vpop.f32.mrb[0].mxu0
      %2749 = vmatprep.mubr.bf16.mxu0 %v2368
      %2750 = vmatmul.mubr.bf16.gmra.mrb[0].mxu0 %v2176
      %v2751 = vpop.f32.mrb[0].mxu0
      %v2752 = vadd.f32 %v2447, %v2751
      %v2753 = vpop.f32.mrb[0].mxu0
      %v2754 = vpop.f32.mrb[0].mxu0
      %v2755 = vadd.f32 %v2447, %v2754
      %v2756 = vpop.f32.mrb[0].mxu0
      %2757 = vmatprep.mubr.bf16.mxu0 %v2371
      %2758 = vmatmul.mubr.bf16.gmra.mrb[0].mxu0 %v2179
      %v2759 = vpop.f32.mrb[0].mxu0
      %v2760 = vadd.f32 %v2447, %v2759
      %v2761 = vpop.f32.mrb[0].mxu0
      %v2762 = vpop.f32.mrb[0].mxu0
      %v2763 = vadd.f32 %v2447, %v2762
      %v2764 = vpop.f32.mrb[0].mxu0
      %2765 = vmatprep.mubr.bf16.mxu0 %v2374
      %2766 = vmatmul.mubr.bf16.gmra.mrb[0].mxu0 %v2182
      %v2767 = vpop.f32.mrb[0].mxu0
      %v2768 = vadd.f32 %v2447, %v2767
      %v2769 = vpop.f32.mrb[0].mxu0
      %v2770 = vpop.f32.mrb[0].mxu0
      %v2771 = vadd.f32 %v2447, %v2770
      %v2772 = vpop.f32.mrb[0].mxu0
      %2773 = vmatprep.mubr.bf16.mxu0 %v2377
      %2774 = vmatmul.mubr.bf16.gmra.mrb[0].mxu0 %v2185
      %v2775 = vpop.f32.mrb[0].mxu0
      %v2776 = vadd.f32 %v2447, %v2775
      %v2777 = vpop.f32.mrb[0].mxu0
      %v2778 = vpop.f32.mrb[0].mxu0
      %v2779 = vadd.f32 %v2447, %v2778
      %v2780 = vpop.f32.mrb[0].mxu0
      %2781 = vmatprep.mubr.bf16.mxu0 %v2380
      %2782 = vmatmul.mubr.bf16.gmra.mrb[0].mxu0 %v2188
      %v2783 = vpop.f32.mrb[0].mxu0
      %v2784 = vadd.f32 %v2447, %v2783
      %v2785 = vpop.f32.mrb[0].mxu0
      %v2786 = vpop.f32.mrb[0].mxu0
      %v2787 = vadd.f32 %v2447, %v2786
      %v2788 = vpop.f32.mrb[0].mxu0
      %2789 = vmatprep.mubr.bf16.mxu0 %v2383
      %2790 = vmatmul.mubr.bf16.gmra.mrb[0].mxu0 %v2191
      %v2791 = vpop.f32.mrb[0].mxu0
      %v2792 = vadd.f32 %v2447, %v2791
      %v2793 = vpop.f32.mrb[0].mxu0
      %v2794 = vpop.f32.mrb[0].mxu0
      %v2795 = vadd.f32 %v2447, %v2794
      %v2796 = vpop.f32.mrb[0].mxu0
      %2797 = vmatprep.mubr.bf16.mxu0 %v2386
      %2798 = vmatmul.mubr.bf16.gmra.mrb[0].mxu0 %v2194
      %v2799 = vpop.f32.mrb[0].mxu0
      %v2800 = vadd.f32 %v2447, %v2799
      %v2801 = vpop.f32.mrb[0].mxu0
      %v2802 = vpop.f32.mrb[0].mxu0
      %v2803 = vadd.f32 %v2447, %v2802
      %v2804 = vpop.f32.mrb[0].mxu0
      %2805 = vmatprep.mubr.bf16.mxu0 %v2389
      %2806 = vmatmul.mubr.bf16.gmra.mrb[0].mxu0 %v2197
      %v2807 = vpop.f32.mrb[0].mxu0
      %v2808 = vadd.f32 %v2447, %v2807
      %v2809 = vpop.f32.mrb[0].mxu0
      %v2810 = vpop.f32.mrb[0].mxu0
      %v2811 = vadd.f32 %v2447, %v2810
      %v2812 = vpop.f32.mrb[0].mxu0
      %2813 = vmatprep.mubr.bf16.mxu0 %v2392
      %2814 = vmatmul.mubr.bf16.gmra.mrb[0].mxu0 %v2200
      %v2815 = vpop.f32.mrb[0].mxu0
      %v2816 = vadd.f32 %v2447, %v2815
      %v2817 = vpop.f32.mrb[0].mxu0
      %v2818 = vpop.f32.mrb[0].mxu0
      %v2819 = vadd.f32 %v2447, %v2818
      %v2820 = vpop.f32.mrb[0].mxu0
      %2821 = vmatprep.mubr.bf16.mxu0 %v2395
      %2822 = vmatmul.mubr.bf16.gmra.mrb[0].mxu0 %v2203
      %v2823 = vpop.f32.mrb[0].mxu0
      %v2824 = vadd.f32 %v2447, %v2823
      %v2825 = vpop.f32.mrb[0].mxu0
      %v2826 = vpop.f32.mrb[0].mxu0
      %v2827 = vadd.f32 %v2447, %v2826
      %v2828 = vpop.f32.mrb[0].mxu0
      %2829 = vmatprep.mubr.bf16.mxu0 %v2398
      %2830 = vmatmul.mubr.bf16.gmra.mrb[0].mxu0 %v2206
      %v2831 = vpop.f32.mrb[0].mxu0
      %v2832 = vadd.f32 %v2447, %v2831
      %v2833 = vpop.f32.mrb[0].mxu0
      %v2834 = vpop.f32.mrb[0].mxu0
      %v2835 = vadd.f32 %v2447, %v2834
      %v2836 = vpop.f32.mrb[0].mxu0
      %2837 = vmatprep.mubr.bf16.mxu0 %v2401
      %2838 = vmatmul.mubr.bf16.gmra.mrb[0].mxu0 %v2209
      %v2839 = vpop.f32.mrb[0].mxu0
      %v2840 = vadd.f32 %v2447, %v2839
      %v2841 = vpop.f32.mrb[0].mxu0
      %v2842 = vpop.f32.mrb[0].mxu0
      %v2843 = vadd.f32 %v2447, %v2842
      %v2844 = vpop.f32.mrb[0].mxu0
      %2845 = vmatprep.mubr.bf16.mxu0 %v2404
      %2846 = vmatmul.mubr.bf16.gmra.mrb[0].mxu0 %v2212
      %v2847 = vpop.f32.mrb[0].mxu0
      %v2848 = vadd.f32 %v2447, %v2847
      %v2849 = vpop.f32.mrb[0].mxu0
      %v2850 = vpop.f32.mrb[0].mxu0
      %v2851 = vadd.f32 %v2447, %v2850
      %v2852 = vpop.f32.mrb[0].mxu0
      %2853 = vdwg.mxu0
      %2854 = vmatprep.subr.bf16.mxu0 0
      %2855 = vmatpush1.bf16.msra.mxu0 %v2537
      %2856 = vmatprep.subr.bf16.mxu0 0
      %2857 = vmatpush1.bf16.msra.mxu0 %v2538
      %2858 = vmatprep.subr.bf16.mxu0 0
      %2859 = vmatpush1.bf16.msra.mxu0 0
      %2860 = vmatprep.subr.bf16.mxu0 0
      %2861 = vmatpush1.bf16.msra.mxu0 0
      %2862 = vmatprep.subr.bf16.mxu0 0
      %2863 = vmatpush1.bf16.msra.mxu0 0
      %2864 = vmatprep.subr.bf16.mxu0 0
      %2865 = vmatpush1.bf16.msra.mxu0 0
      %2866 = vmatprep.subr.bf16.mxu0 0
      %2867 = vmatpush1.bf16.msra.mxu0 0
      %2868 = vmatprep.subr.bf16.mxu0 0
      %2869 = vmatpush1.bf16.msra.mxu0 0
      %2870 = vmatprep.subr.bf16.mxu0 0
      %2871 = vmatpush1.bf16.msra.mxu0 0
      %2872 = vmatprep.subr.bf16.mxu0 0
      %2873 = vmatpush1.bf16.msra.mxu0 0
      %2874 = vmatprep.subr.bf16.mxu0 0
      %2875 = vmatpush1.bf16.msra.mxu0 0
      %2876 = vmatprep.subr.bf16.mxu0 0
      %2877 = vmatpush1.bf16.msra.mxu0 0
      %2878 = vmatprep.subr.bf16.mxu0 0
      %2879 = vmatpush1.bf16.msra.mxu0 0
      %2880 = vmatprep.subr.bf16.mxu0 0
      %2881 = vmatpush1.bf16.msra.mxu0 0
      %2882 = vmatprep.subr.bf16.mxu0 0
      %2883 = vmatpush1.bf16.msra.mxu0 0
      %2884 = vmatprep.subr.bf16.mxu0 0
      %2885 = vmatpush1.bf16.msra.mxu0 0
      %2886 = vmatprep.mubr.bf16.mxu0 0
      %2887 = vmatmul.mubr.bf16.gmra.mrb[0].mxu0 %v2558
      %v2888 = vpop.f32.mrb[0].mxu0
      %v2889 = vadd.f32 %v2664, %v2888
      %v2890 = vpop.f32.mrb[0].mxu0
      %v2891 = vpop.f32.mrb[0].mxu0
      %v2892 = vadd.f32 %v2667, %v2891
      %v2893 = vpop.f32.mrb[0].mxu0
      %2894 = vmatprep.mubr.bf16.mxu0 0
      %2895 = vmatmul.mubr.bf16.gmra.mrb[0].mxu0 %v2561
      %v2896 = vpop.f32.mrb[0].mxu0
      %v2897 = vadd.f32 %v2672, %v2896
      %v2898 = vpop.f32.mrb[0].mxu0
      %v2899 = vpop.f32.mrb[0].mxu0
      %v2900 = vadd.f32 %v2675, %v2899
      %v2901 = vpop.f32.mrb[0].mxu0
      %2902 = vmatprep.mubr.bf16.mxu0 0
      %2903 = vmatmul.mubr.bf16.gmra.mrb[0].mxu0 %v2564
      %v2904 = vpop.f32.mrb[0].mxu0
      %v2905 = vadd.f32 %v2680, %v2904
      %v2906 = vpop.f32.mrb[0].mxu0
      %v2907 = vpop.f32.mrb[0].mxu0
      %v2908 = vadd.f32 %v2683, %v2907
      %v2909 = vpop.f32.mrb[0].mxu0
      %2910 = vmatprep.mubr.bf16.mxu0 0
      %2911 = vmatmul.mubr.bf16.gmra.mrb[0].mxu0 %v2567
      %v2912 = vpop.f32.mrb[0].mxu0
      %v2913 = vadd.f32 %v2688, %v2912
      %v2914 = vpop.f32.mrb[0].mxu0
      %v2915 = vpop.f32.mrb[0].mxu0
      %v2916 = vadd.f32 %v2691, %v2915
      %v2917 = vpop.f32.mrb[0].mxu0
      %2918 = vmatprep.mubr.bf16.mxu0 0
      %2919 = vmatmul.mubr.bf16.gmra.mrb[0].mxu0 %v2570
      %v2920 = vpop.f32.mrb[0].mxu0
      %v2921 = vadd.f32 %v2696, %v2920
      %v2922 = vpop.f32.mrb[0].mxu0
      %v2923 = vpop.f32.mrb[0].mxu0
      %v2924 = vadd.f32 %v2699, %v2923
      %v2925 = vpop.f32.mrb[0].mxu0
      %2926 = vmatprep.mubr.bf16.mxu0 0
      %2927 = vmatmul.mubr.bf16.gmra.mrb[0].mxu0 %v2573
      %v2928 = vpop.f32.mrb[0].mxu0
      %v2929 = vadd.f32 %v2704, %v2928
      %v2930 = vpop.f32.mrb[0].mxu0
      %v2931 = vpop.f32.mrb[0].mxu0
      %v2932 = vadd.f32 %v2707, %v2931
      %v2933 = vpop.f32.mrb[0].mxu0
      %2934 = vmatprep.mubr.bf16.mxu0 0
      %2935 = vmatmul.mubr.bf16.gmra.mrb[0].mxu0 %v2576
      %v2936 = vpop.f32.mrb[0].mxu0
      %v2937 = vadd.f32 %v2712, %v2936
      %v2938 = vpop.f32.mrb[0].mxu0
      %v2939 = vpop.f32.mrb[0].mxu0
      %v2940 = vadd.f32 %v2715, %v2939
      %v2941 = vpop.f32.mrb[0].mxu0
      %2942 = vmatprep.mubr.bf16.mxu0 0
      %2943 = vmatmul.mubr.bf16.gmra.mrb[0].mxu0 %v2579
      %v2944 = vpop.f32.mrb[0].mxu0
      %v2945 = vadd.f32 %v2720, %v2944
      %v2946 = vpop.f32.mrb[0].mxu0
      %v2947 = vpop.f32.mrb[0].mxu0
      %v2948 = vadd.f32 %v2723, %v2947
      %v2949 = vpop.f32.mrb[0].mxu0
      %2950 = vmatprep.mubr.bf16.mxu0 0
      %2951 = vmatmul.mubr.bf16.gmra.mrb[0].mxu0 %v2582
      %v2952 = vpop.f32.mrb[0].mxu0
      %v2953 = vadd.f32 %v2728, %v2952
      %v2954 = vpop.f32.mrb[0].mxu0
      %v2955 = vpop.f32.mrb[0].mxu0
      %v2956 = vadd.f32 %v2731, %v2955
      %v2957 = vpop.f32.mrb[0].mxu0
      %2958 = vmatprep.mubr.bf16.mxu0 0
      %2959 = vmatmul.mubr.bf16.gmra.mrb[0].mxu0 %v2585
      %v2960 = vpop.f32.mrb[0].mxu0
      %v2961 = vadd.f32 %v2736, %v2960
      %v2962 = vpop.f32.mrb[0].mxu0
      %v2963 = vpop.f32.mrb[0].mxu0
      %v2964 = vadd.f32 %v2739, %v2963
      %v2965 = vpop.f32.mrb[0].mxu0
      %2966 = vmatprep.mubr.bf16.mxu0 0
      %2967 = vmatmul.mubr.bf16.gmra.mrb[0].mxu0 %v2588
      %v2968 = vpop.f32.mrb[0].mxu0
      %v2969 = vadd.f32 %v2744, %v2968
      %v2970 = vpop.f32.mrb[0].mxu0
      %v2971 = vpop.f32.mrb[0].mxu0
      %v2972 = vadd.f32 %v2747, %v2971
      %v2973 = vpop.f32.mrb[0].mxu0
      %2974 = vmatprep.mubr.bf16.mxu0 0
      %2975 = vmatmul.mubr.bf16.gmra.mrb[0].mxu0 %v2591
      %v2976 = vpop.f32.mrb[0].mxu0
      %v2977 = vadd.f32 %v2752, %v2976
      %v2978 = vpop.f32.mrb[0].mxu0
      %v2979 = vpop.f32.mrb[0].mxu0
      %v2980 = vadd.f32 %v2755, %v2979
      %v2981 = vpop.f32.mrb[0].mxu0
      %2982 = vmatprep.mubr.bf16.mxu0 0
      %2983 = vmatmul.mubr.bf16.gmra.mrb[0].mxu0 %v2594
      %v2984 = vpop.f32.mrb[0].mxu0
      %v2985 = vadd.f32 %v2760, %v2984
      %v2986 = vpop.f32.mrb[0].mxu0
      %v2987 = vpop.f32.mrb[0].mxu0
      %v2988 = vadd.f32 %v2763, %v2987
      %v2989 = vpop.f32.mrb[0].mxu0
      %2990 = vmatprep.mubr.bf16.mxu0 0
      %2991 = vmatmul.mubr.bf16.gmra.mrb[0].mxu0 %v2597
      %v2992 = vpop.f32.mrb[0].mxu0
      %v2993 = vadd.f32 %v2768, %v2992
      %v2994 = vpop.f32.mrb[0].mxu0
      %v2995 = vpop.f32.mrb[0].mxu0
      %v2996 = vadd.f32 %v2771, %v2995
      %v2997 = vpop.f32.mrb[0].mxu0
      %2998 = vmatprep.mubr.bf16.mxu0 0
      %2999 = vmatmul.mubr.bf16.gmra.mrb[0].mxu0 %v2600
      %v3000 = vpop.f32.mrb[0].mxu0
      %v3001 = vadd.f32 %v2776, %v3000
      %v3002 = vpop.f32.mrb[0].mxu0
      %v3003 = vpop.f32.mrb[0].mxu0
      %v3004 = vadd.f32 %v2779, %v3003
      %v3005 = vpop.f32.mrb[0].mxu0
      %3006 = vmatprep.mubr.bf16.mxu0 0
      %3007 = vmatmul.mubr.bf16.gmra.mrb[0].mxu0 %v2603
      %v3008 = vpop.f32.mrb[0].mxu0
      %v3009 = vadd.f32 %v2784, %v3008
      %v3010 = vpop.f32.mrb[0].mxu0
      %v3011 = vpop.f32.mrb[0].mxu0
      %v3012 = vadd.f32 %v2787, %v3011
      %v3013 = vpop.f32.mrb[0].mxu0
      %3014 = vmatprep.mubr.bf16.mxu0 0
      %3015 = vmatmul.mubr.bf16.gmra.mrb[0].mxu0 %v2606
      %v3016 = vpop.f32.mrb[0].mxu0
      %v3017 = vadd.f32 %v2792, %v3016
      %v3018 = vpop.f32.mrb[0].mxu0
      %v3019 = vpop.f32.mrb[0].mxu0
      %v3020 = vadd.f32 %v2795, %v3019
      %v3021 = vpop.f32.mrb[0].mxu0
      %3022 = vmatprep.mubr.bf16.mxu0 0
      %3023 = vmatmul.mubr.bf16.gmra.mrb[0].mxu0 %v2609
      %v3024 = vpop.f32.mrb[0].mxu0
      %v3025 = vadd.f32 %v2800, %v3024
      %v3026 = vpop.f32.mrb[0].mxu0
      %v3027 = vpop.f32.mrb[0].mxu0
      %v3028 = vadd.f32 %v2803, %v3027
      %v3029 = vpop.f32.mrb[0].mxu0
      %3030 = vmatprep.mubr.bf16.mxu0 0
      %3031 = vmatmul.mubr.bf16.gmra.mrb[0].mxu0 %v2612
      %v3032 = vpop.f32.mrb[0].mxu0
      %v3033 = vadd.f32 %v2808, %v3032
      %v3034 = vpop.f32.mrb[0].mxu0
      %v3035 = vpop.f32.mrb[0].mxu0
      %v3036 = vadd.f32 %v2811, %v3035
      %v3037 = vpop.f32.mrb[0].mxu0
      %3038 = vmatprep.mubr.bf16.mxu0 0
      %3039 = vmatmul.mubr.bf16.gmra.mrb[0].mxu0 %v2615
      %v3040 = vpop.f32.mrb[0].mxu0
      %v3041 = vadd.f32 %v2816, %v3040
      %v3042 = vpop.f32.mrb[0].mxu0
      %v3043 = vpop.f32.mrb[0].mxu0
      %v3044 = vadd.f32 %v2819, %v3043
      %v3045 = vpop.f32.mrb[0].mxu0
      %3046 = vmatprep.mubr.bf16.mxu0 0
      %3047 = vmatmul.mubr.bf16.gmra.mrb[0].mxu0 %v2618
      %v3048 = vpop.f32.mrb[0].mxu0
      %v3049 = vadd.f32 %v2824, %v3048
      %v3050 = vpop.f32.mrb[0].mxu0
      %v3051 = vpop.f32.mrb[0].mxu0
      %v3052 = vadd.f32 %v2827, %v3051
      %v3053 = vpop.f32.mrb[0].mxu0
      %3054 = vmatprep.mubr.bf16.mxu0 0
      %3055 = vmatmul.mubr.bf16.gmra.mrb[0].mxu0 %v2621
      %v3056 = vpop.f32.mrb[0].mxu0
      %v3057 = vadd.f32 %v2832, %v3056
      %v3058 = vpop.f32.mrb[0].mxu0
      %v3059 = vpop.f32.mrb[0].mxu0
      %v3060 = vadd.f32 %v2835, %v3059
      %v3061 = vpop.f32.mrb[0].mxu0
      %3062 = vmatprep.mubr.bf16.mxu0 0
      %3063 = vmatmul.mubr.bf16.gmra.mrb[0].mxu0 %v2624
      %v3064 = vpop.f32.mrb[0].mxu0
      %v3065 = vadd.f32 %v2840, %v3064
      %v3066 = vpop.f32.mrb[0].mxu0
      %v3067 = vpop.f32.mrb[0].mxu0
      %v3068 = vadd.f32 %v2843, %v3067
      %v3069 = vpop.f32.mrb[0].mxu0
      %3070 = vmatprep.mubr.bf16.mxu0 0
      %3071 = vmatmul.mubr.bf16.gmra.mrb[0].mxu0 %v2627
      %v3072 = vpop.f32.mrb[0].mxu0
      %v3073 = vadd.f32 %v2848, %v3072
      %v3074 = vpop.f32.mrb[0].mxu0
      %v3075 = vpop.f32.mrb[0].mxu0
      %v3076 = vadd.f32 %v2851, %v3075
      %v3077 = vpop.f32.mrb[0].mxu0
      %3078 = vdwg.mxu0
      %v3079 = vmax.f32 %v2889, 0.0
      %v3080 = vmax.f32 %v2892, 0.0
      %v3081 = vmax.f32 %v2897, 0.0
      %v3082 = vmax.f32 %v2900, 0.0
      %v3083 = vmax.f32 %v2905, 0.0
      %v3084 = vmax.f32 %v2908, 0.0
      %v3085 = vmax.f32 %v2913, 0.0
      %v3086 = vmax.f32 %v2916, 0.0
      %v3087 = vmax.f32 %v2921, 0.0
      %v3088 = vmax.f32 %v2924, 0.0
      %v3089 = vmax.f32 %v2929, 0.0
      %v3090 = vmax.f32 %v2932, 0.0
      %v3091 = vmax.f32 %v2937, 0.0
      %v3092 = vmax.f32 %v2940, 0.0
      %v3093 = vmax.f32 %v2945, 0.0
      %v3094 = vmax.f32 %v2948, 0.0
      %v3095 = vmax.f32 %v2953, 0.0
      %v3096 = vmax.f32 %v2956, 0.0
      %v3097 = vmax.f32 %v2961, 0.0
      %v3098 = vmax.f32 %v2964, 0.0
      %v3099 = vmax.f32 %v2969, 0.0
      %v3100 = vmax.f32 %v2972, 0.0
      %v3101 = vmax.f32 %v2977, 0.0
      %v3102 = vmax.f32 %v2980, 0.0
      %v3103 = vmax.f32 %v2985, 0.0
      %v3104 = vmax.f32 %v2988, 0.0
      %v3105 = vmax.f32 %v2993, 0.0
      %v3106 = vmax.f32 %v2996, 0.0
      %v3107 = vmax.f32 %v3001, 0.0
      %v3108 = vmax.f32 %v3004, 0.0
      %v3109 = vmax.f32 %v3009, 0.0
      %v3110 = vmax.f32 %v3012, 0.0
      %v3111 = vmax.f32 %v3017, 0.0
      %v3112 = vmax.f32 %v3020, 0.0
      %v3113 = vmax.f32 %v3025, 0.0
      %v3114 = vmax.f32 %v3028, 0.0
      %v3115 = vmax.f32 %v3033, 0.0
      %v3116 = vmax.f32 %v3036, 0.0
      %v3117 = vmax.f32 %v3041, 0.0
      %v3118 = vmax.f32 %v3044, 0.0
      %v3119 = vmax.f32 %v3049, 0.0
      %v3120 = vmax.f32 %v3052, 0.0
      %v3121 = vmax.f32 %v3057, 0.0
      %v3122 = vmax.f32 %v3060, 0.0
      %v3123 = vmax.f32 %v3065, 0.0
      %v3124 = vmax.f32 %v3068, 0.0
      %v3125 = vmax.f32 %v3073, 0.0
      %v3126 = vmax.f32 %v3076, 0.0
      %v3127 = vpack.c.bf16 %v3080, %v3079
      %v3128 = vpack.c.bf16 %v3082, %v3081
      %v3129 = vpack.c.bf16 %v3084, %v3083
      %v3130 = vpack.c.bf16 %v3086, %v3085
      %v3131 = vpack.c.bf16 %v3088, %v3087
      %v3132 = vpack.c.bf16 %v3090, %v3089
      %v3133 = vpack.c.bf16 %v3092, %v3091
      %v3134 = vpack.c.bf16 %v3094, %v3093
      %v3135 = vpack.c.bf16 %v3096, %v3095
      %v3136 = vpack.c.bf16 %v3098, %v3097
      %v3137 = vpack.c.bf16 %v3100, %v3099
      %v3138 = vpack.c.bf16 %v3102, %v3101
      %v3139 = vpack.c.bf16 %v3104, %v3103
      %v3140 = vpack.c.bf16 %v3106, %v3105
      %v3141 = vpack.c.bf16 %v3108, %v3107
      %v3142 = vpack.c.bf16 %v3110, %v3109
      %v3143 = vpack.c.bf16 %v3112, %v3111
      %v3144 = vpack.c.bf16 %v3114, %v3113
      %v3145 = vpack.c.bf16 %v3116, %v3115
      %v3146 = vpack.c.bf16 %v3118, %v3117
      %v3147 = vpack.c.bf16 %v3120, %v3119
      %v3148 = vpack.c.bf16 %v3122, %v3121
      %v3149 = vpack.c.bf16 %v3124, %v3123
      %v3150 = vpack.c.bf16 %v3126, %v3125
      %v3151 = vld [vmem:[%s6] sm:$0xf]
      %v3152 = vld [vmem:[%s6 + $0x4] sm:$0xf]
      %v3153 = vld [vmem:[%s6 + $0x8] sm:$0xf]
      %v3154 = vld [vmem:[%s6 + $0xc] sm:$0xf]
      %v3155 = vld [vmem:[%s6 + $0x10] sm:$0xf]
      %v3156 = vld [vmem:[%s6 + $0x14] sm:$0xf]
      %v3157 = vld [vmem:[%s6 + $0x18] sm:$0xf]
      %v3158 = vld [vmem:[%s6 + $0x1c] sm:$0xf]
      %v3159 = vld [vmem:[%s6 + $0x20] sm:$0xf]
      %v3160 = vld [vmem:[%s6 + $0x24] sm:$0xf]
      %v3161 = vld [vmem:[%s6 + $0x28] sm:$0xf]
      %v3162 = vld [vmem:[%s6 + $0x2c] sm:$0xf]
      %v3163 = vld [vmem:[%s6 + $0x30] sm:$0xf]
      %v3164 = vld [vmem:[%s6 + $0x34] sm:$0xf]
      %v3165 = vld [vmem:[%s6 + $0x38] sm:$0xf]
      %v3166 = vld [vmem:[%s6 + $0x3c] sm:$0xf]
      %v3167 = vld [vmem:[%s7] sm:$0x1]
      %v3169 = vlaneseq
      %v3170 = vshrl.u32 %v3169, 7
      %v3171 = vsub.s32 0, %v3170
      %v3172 = vrot.slane %v3167, %v3171
      %v3190 = vunpack.c.l.b16 %v3151
      %v3191 = vunpack.c.l.b16 %v3152
      %v3192 = vunpack.c.l.b16 %v3153
      %v3193 = vunpack.c.l.b16 %v3154
      %v3194 = vunpack.c.l.b16 %v3155
      %v3195 = vunpack.c.l.b16 %v3156
      %v3196 = vunpack.c.l.b16 %v3157
      %v3197 = vunpack.c.l.b16 %v3158
      %v3198 = vunpack.c.l.b16 %v3159
      %v3199 = vunpack.c.l.b16 %v3160
      %v3200 = vunpack.c.l.b16 %v3161
      %v3201 = vunpack.c.l.b16 %v3162
      %v3202 = vunpack.c.l.b16 %v3163
      %v3203 = vunpack.c.l.b16 %v3164
      %v3204 = vunpack.c.l.b16 %v3165
      %v3205 = vunpack.c.l.b16 %v3166
      %v3206 = vpack.c.b16 %v3191, %v3190
      %v3207 = vpack.c.b16 %v3193, %v3192
      %v3208 = vpack.c.b16 %v3195, %v3194
      %v3209 = vpack.c.b16 %v3197, %v3196
      %v3210 = vpack.c.b16 %v3199, %v3198
      %v3211 = vpack.c.b16 %v3201, %v3200
      %v3212 = vpack.c.b16 %v3203, %v3202
      %v3213 = vpack.c.b16 %v3205, %v3204
      %3222 = vmatprep.subr.bf16.mxu0 0
      %3223 = vmatpush1.bf16.msra.mxu0 %v3206
      %3224 = vmatprep.subr.bf16.mxu0 0
      %3225 = vmatpush1.bf16.msra.mxu0 %v3207
      %3226 = vmatprep.subr.bf16.mxu0 0
      %3227 = vmatpush1.bf16.msra.mxu0 %v3208
      %3228 = vmatprep.subr.bf16.mxu0 0
      %3229 = vmatpush1.bf16.msra.mxu0 %v3209
      %3230 = vmatprep.subr.bf16.mxu0 0
      %3231 = vmatpush1.bf16.msra.mxu0 %v3210
      %3232 = vmatprep.subr.bf16.mxu0 0
      %3233 = vmatpush1.bf16.msra.mxu0 %v3211
      %3234 = vmatprep.subr.bf16.mxu0 0
      %3235 = vmatpush1.bf16.msra.mxu0 %v3212
      %3236 = vmatprep.subr.bf16.mxu0 0
      %3237 = vmatpush1.bf16.msra.mxu0 %v3213
      %3238 = vmatprep.subr.bf16.mxu0 0
      %3239 = vmatpush1.bf16.msra.mxu0 0
      %3240 = vmatprep.subr.bf16.mxu0 0
      %3241 = vmatpush1.bf16.msra.mxu0 0
      %3242 = vmatprep.subr.bf16.mxu0 0
      %3243 = vmatpush1.bf16.msra.mxu0 0
      %3244 = vmatprep.subr.bf16.mxu0 0
      %3245 = vmatpush1.bf16.msra.mxu0 0
      %3246 = vmatprep.subr.bf16.mxu0 0
      %3247 = vmatpush1.bf16.msra.mxu0 0
      %3248 = vmatprep.subr.bf16.mxu0 0
      %3249 = vmatpush1.bf16.msra.mxu0 0
      %3250 = vmatprep.subr.bf16.mxu0 0
      %3251 = vmatpush1.bf16.msra.mxu0 0
      %3252 = vmatprep.subr.bf16.mxu0 0
      %3253 = vmatpush1.bf16.msra.mxu0 0
      %3254 = vmatprep.mubr.bf16.mxu0 0
      %3255 = vmatmul.mubr.bf16.gmra.mrb[0].mxu0 %v3127
      %v3256 = vpop.f32.mrb[0].mxu0
      %v3257 = vadd.f32 %v3172, %v3256
      %v3258 = vpop.f32.mrb[0].mxu0
      %v3259 = vpop.f32.mrb[0].mxu0
      %v3260 = vadd.f32 %v3172, %v3259
      %v3261 = vpop.f32.mrb[0].mxu0
      %3262 = vmatprep.mubr.bf16.mxu0 0
      %3263 = vmatmul.mubr.bf16.gmra.mrb[0].mxu0 %v3128
      %v3264 = vpop.f32.mrb[0].mxu0
      %v3265 = vadd.f32 %v3172, %v3264
      %v3266 = vpop.f32.mrb[0].mxu0
      %v3267 = vpop.f32.mrb[0].mxu0
      %v3268 = vadd.f32 %v3172, %v3267
      %v3269 = vpop.f32.mrb[0].mxu0
      %3270 = vmatprep.mubr.bf16.mxu0 0
      %3271 = vmatmul.mubr.bf16.gmra.mrb[0].mxu0 %v3129
      %v3272 = vpop.f32.mrb[0].mxu0
      %v3273 = vadd.f32 %v3172, %v3272
      %v3274 = vpop.f32.mrb[0].mxu0
      %v3275 = vpop.f32.mrb[0].mxu0
      %v3276 = vadd.f32 %v3172, %v3275
      %v3277 = vpop.f32.mrb[0].mxu0
      %3278 = vmatprep.mubr.bf16.mxu0 0
      %3279 = vmatmul.mubr.bf16.gmra.mrb[0].mxu0 %v3130
      %v3280 = vpop.f32.mrb[0].mxu0
      %v3281 = vadd.f32 %v3172, %v3280
      %v3282 = vpop.f32.mrb[0].mxu0
      %v3283 = vpop.f32.mrb[0].mxu0
      %v3284 = vadd.f32 %v3172, %v3283
      %v3285 = vpop.f32.mrb[0].mxu0
      %3286 = vmatprep.mubr.bf16.mxu0 0
      %3287 = vmatmul.mubr.bf16.gmra.mrb[0].mxu0 %v3131
      %v3288 = vpop.f32.mrb[0].mxu0
      %v3289 = vadd.f32 %v3172, %v3288
      %v3290 = vpop.f32.mrb[0].mxu0
      %v3291 = vpop.f32.mrb[0].mxu0
      %v3292 = vadd.f32 %v3172, %v3291
      %v3293 = vpop.f32.mrb[0].mxu0
      %3294 = vmatprep.mubr.bf16.mxu0 0
      %3295 = vmatmul.mubr.bf16.gmra.mrb[0].mxu0 %v3132
      %v3296 = vpop.f32.mrb[0].mxu0
      %v3297 = vadd.f32 %v3172, %v3296
      %v3298 = vpop.f32.mrb[0].mxu0
      %v3299 = vpop.f32.mrb[0].mxu0
      %v3300 = vadd.f32 %v3172, %v3299
      %v3301 = vpop.f32.mrb[0].mxu0
      %3302 = vmatprep.mubr.bf16.mxu0 0
      %3303 = vmatmul.mubr.bf16.gmra.mrb[0].mxu0 %v3133
      %v3304 = vpop.f32.mrb[0].mxu0
      %v3305 = vadd.f32 %v3172, %v3304
      %v3306 = vpop.f32.mrb[0].mxu0
      %v3307 = vpop.f32.mrb[0].mxu0
      %v3308 = vadd.f32 %v3172, %v3307
      %v3309 = vpop.f32.mrb[0].mxu0
      %3310 = vmatprep.mubr.bf16.mxu0 0
      %3311 = vmatmul.mubr.bf16.gmra.mrb[0].mxu0 %v3134
      %v3312 = vpop.f32.mrb[0].mxu0
      %v3313 = vadd.f32 %v3172, %v3312
      %v3314 = vpop.f32.mrb[0].mxu0
      %v3315 = vpop.f32.mrb[0].mxu0
      %v3316 = vadd.f32 %v3172, %v3315
      %v3317 = vpop.f32.mrb[0].mxu0
      %3318 = vmatprep.mubr.bf16.mxu0 0
      %3319 = vmatmul.mubr.bf16.gmra.mrb[0].mxu0 %v3135
      %v3320 = vpop.f32.mrb[0].mxu0
      %v3321 = vadd.f32 %v3172, %v3320
      %v3322 = vpop.f32.mrb[0].mxu0
      %v3323 = vpop.f32.mrb[0].mxu0
      %v3324 = vadd.f32 %v3172, %v3323
      %v3325 = vpop.f32.mrb[0].mxu0
      %3326 = vmatprep.mubr.bf16.mxu0 0
      %3327 = vmatmul.mubr.bf16.gmra.mrb[0].mxu0 %v3136
      %v3328 = vpop.f32.mrb[0].mxu0
      %v3329 = vadd.f32 %v3172, %v3328
      %v3330 = vpop.f32.mrb[0].mxu0
      %v3331 = vpop.f32.mrb[0].mxu0
      %v3332 = vadd.f32 %v3172, %v3331
      %v3333 = vpop.f32.mrb[0].mxu0
      %3334 = vmatprep.mubr.bf16.mxu0 0
      %3335 = vmatmul.mubr.bf16.gmra.mrb[0].mxu0 %v3137
      %v3336 = vpop.f32.mrb[0].mxu0
      %v3337 = vadd.f32 %v3172, %v3336
      %v3338 = vpop.f32.mrb[0].mxu0
      %v3339 = vpop.f32.mrb[0].mxu0
      %v3340 = vadd.f32 %v3172, %v3339
      %v3341 = vpop.f32.mrb[0].mxu0
      %3342 = vmatprep.mubr.bf16.mxu0 0
      %3343 = vmatmul.mubr.bf16.gmra.mrb[0].mxu0 %v3138
      %v3344 = vpop.f32.mrb[0].mxu0
      %v3345 = vadd.f32 %v3172, %v3344
      %v3346 = vpop.f32.mrb[0].mxu0
      %v3347 = vpop.f32.mrb[0].mxu0
      %v3348 = vadd.f32 %v3172, %v3347
      %v3349 = vpop.f32.mrb[0].mxu0
      %3350 = vmatprep.mubr.bf16.mxu0 0
      %3351 = vmatmul.mubr.bf16.gmra.mrb[0].mxu0 %v3139
      %v3352 = vpop.f32.mrb[0].mxu0
      %v3353 = vadd.f32 %v3172, %v3352
      %v3354 = vpop.f32.mrb[0].mxu0
      %v3355 = vpop.f32.mrb[0].mxu0
      %v3356 = vadd.f32 %v3172, %v3355
      %v3357 = vpop.f32.mrb[0].mxu0
      %3358 = vmatprep.mubr.bf16.mxu0 0
      %3359 = vmatmul.mubr.bf16.gmra.mrb[0].mxu0 %v3140
      %v3360 = vpop.f32.mrb[0].mxu0
      %v3361 = vadd.f32 %v3172, %v3360
      %v3362 = vpop.f32.mrb[0].mxu0
      %v3363 = vpop.f32.mrb[0].mxu0
      %v3364 = vadd.f32 %v3172, %v3363
      %v3365 = vpop.f32.mrb[0].mxu0
      %3366 = vmatprep.mubr.bf16.mxu0 0
      %3367 = vmatmul.mubr.bf16.gmra.mrb[0].mxu0 %v3141
      %v3368 = vpop.f32.mrb[0].mxu0
      %v3369 = vadd.f32 %v3172, %v3368
      %v3370 = vpop.f32.mrb[0].mxu0
      %v3371 = vpop.f32.mrb[0].mxu0
      %v3372 = vadd.f32 %v3172, %v3371
      %v3373 = vpop.f32.mrb[0].mxu0
      %3374 = vmatprep.mubr.bf16.mxu0 0
      %3375 = vmatmul.mubr.bf16.gmra.mrb[0].mxu0 %v3142
      %v3376 = vpop.f32.mrb[0].mxu0
      %v3377 = vadd.f32 %v3172, %v3376
      %v3378 = vpop.f32.mrb[0].mxu0
      %v3379 = vpop.f32.mrb[0].mxu0
      %v3380 = vadd.f32 %v3172, %v3379
      %v3381 = vpop.f32.mrb[0].mxu0
      %3382 = vmatprep.mubr.bf16.mxu0 0
      %3383 = vmatmul.mubr.bf16.gmra.mrb[0].mxu0 %v3143
      %v3384 = vpop.f32.mrb[0].mxu0
      %v3385 = vadd.f32 %v3172, %v3384
      %v3386 = vpop.f32.mrb[0].mxu0
      %v3387 = vpop.f32.mrb[0].mxu0
      %v3388 = vadd.f32 %v3172, %v3387
      %v3389 = vpop.f32.mrb[0].mxu0
      %3390 = vmatprep.mubr.bf16.mxu0 0
      %3391 = vmatmul.mubr.bf16.gmra.mrb[0].mxu0 %v3144
      %v3392 = vpop.f32.mrb[0].mxu0
      %v3393 = vadd.f32 %v3172, %v3392
      %v3394 = vpop.f32.mrb[0].mxu0
      %v3395 = vpop.f32.mrb[0].mxu0
      %v3396 = vadd.f32 %v3172, %v3395
      %v3397 = vpop.f32.mrb[0].mxu0
      %3398 = vmatprep.mubr.bf16.mxu0 0
      %3399 = vmatmul.mubr.bf16.gmra.mrb[0].mxu0 %v3145
      %v3400 = vpop.f32.mrb[0].mxu0
      %v3401 = vadd.f32 %v3172, %v3400
      %v3402 = vpop.f32.mrb[0].mxu0
      %v3403 = vpop.f32.mrb[0].mxu0
      %v3404 = vadd.f32 %v3172, %v3403
      %v3405 = vpop.f32.mrb[0].mxu0
      %3406 = vmatprep.mubr.bf16.mxu0 0
      %3407 = vmatmul.mubr.bf16.gmra.mrb[0].mxu0 %v3146
      %v3408 = vpop.f32.mrb[0].mxu0
      %v3409 = vadd.f32 %v3172, %v3408
      %v3410 = vpop.f32.mrb[0].mxu0
      %v3411 = vpop.f32.mrb[0].mxu0
      %v3412 = vadd.f32 %v3172, %v3411
      %v3413 = vpop.f32.mrb[0].mxu0
      %3414 = vmatprep.mubr.bf16.mxu0 0
      %3415 = vmatmul.mubr.bf16.gmra.mrb[0].mxu0 %v3147
      %v3416 = vpop.f32.mrb[0].mxu0
      %v3417 = vadd.f32 %v3172, %v3416
      %v3418 = vpop.f32.mrb[0].mxu0
      %v3419 = vpop.f32.mrb[0].mxu0
      %v3420 = vadd.f32 %v3172, %v3419
      %v3421 = vpop.f32.mrb[0].mxu0
      %3422 = vmatprep.mubr.bf16.mxu0 0
      %3423 = vmatmul.mubr.bf16.gmra.mrb[0].mxu0 %v3148
      %v3424 = vpop.f32.mrb[0].mxu0
      %v3425 = vadd.f32 %v3172, %v3424
      %v3426 = vpop.f32.mrb[0].mxu0
      %v3427 = vpop.f32.mrb[0].mxu0
      %v3428 = vadd.f32 %v3172, %v3427
      %v3429 = vpop.f32.mrb[0].mxu0
      %3430 = vmatprep.mubr.bf16.mxu0 0
      %3431 = vmatmul.mubr.bf16.gmra.mrb[0].mxu0 %v3149
      %v3432 = vpop.f32.mrb[0].mxu0
      %v3433 = vadd.f32 %v3172, %v3432
      %v3434 = vpop.f32.mrb[0].mxu0
      %v3435 = vpop.f32.mrb[0].mxu0
      %v3436 = vadd.f32 %v3172, %v3435
      %v3437 = vpop.f32.mrb[0].mxu0
      %3438 = vmatprep.mubr.bf16.mxu0 0
      %3439 = vmatmul.mubr.bf16.gmra.mrb[0].mxu0 %v3150
      %v3440 = vpop.f32.mrb[0].mxu0
      %v3441 = vadd.f32 %v3172, %v3440
      %v3442 = vpop.f32.mrb[0].mxu0
      %v3443 = vpop.f32.mrb[0].mxu0
      %v3444 = vadd.f32 %v3172, %v3443
      %v3445 = vpop.f32.mrb[0].mxu0
      %3446 = vdwg.mxu0
      %v3447 = vpack.c.bf16 %v3260, %v3257
      %v3448 = vpack.c.bf16 %v3268, %v3265
      %v3449 = vpack.c.bf16 %v3276, %v3273
      %v3450 = vpack.c.bf16 %v3284, %v3281
      %v3451 = vpack.c.bf16 %v3292, %v3289
      %v3452 = vpack.c.bf16 %v3300, %v3297
      %v3453 = vpack.c.bf16 %v3308, %v3305
      %v3454 = vpack.c.bf16 %v3316, %v3313
      %v3455 = vpack.c.bf16 %v3324, %v3321
      %v3456 = vpack.c.bf16 %v3332, %v3329
      %v3457 = vpack.c.bf16 %v3340, %v3337
      %v3458 = vpack.c.bf16 %v3348, %v3345
      %v3459 = vpack.c.bf16 %v3356, %v3353
      %v3460 = vpack.c.bf16 %v3364, %v3361
      %v3461 = vpack.c.bf16 %v3372, %v3369
      %v3462 = vpack.c.bf16 %v3380, %v3377
      %v3463 = vpack.c.bf16 %v3388, %v3385
      %v3464 = vpack.c.bf16 %v3396, %v3393
      %v3465 = vpack.c.bf16 %v3404, %v3401
      %v3466 = vpack.c.bf16 %v3412, %v3409
      %v3467 = vpack.c.bf16 %v3420, %v3417
      %v3468 = vpack.c.bf16 %v3428, %v3425
      %v3469 = vpack.c.bf16 %v3436, %v3433
      %v3470 = vpack.c.bf16 %v3444, %v3441
      %v3495 = vunpack.c.l.b16 %v3447
      %v3496 = vunpack.c.h.b16 %v3447
      %v3497 = vunpack.c.l.b16 %v3448
      %v3498 = vunpack.c.h.b16 %v3448
      %v3499 = vunpack.c.l.b16 %v3449
      %v3500 = vunpack.c.h.b16 %v3449
      %v3501 = vunpack.c.l.b16 %v3450
      %v3502 = vunpack.c.h.b16 %v3450
      %v3503 = vunpack.c.l.b16 %v3451
      %v3504 = vunpack.c.h.b16 %v3451
      %v3505 = vunpack.c.l.b16 %v3452
      %v3506 = vunpack.c.h.b16 %v3452
      %v3507 = vunpack.c.l.b16 %v3453
      %v3508 = vunpack.c.h.b16 %v3453
      %v3509 = vunpack.c.l.b16 %v3454
      %v3510 = vunpack.c.h.b16 %v3454
      %v3511 = vunpack.c.l.b16 %v3455
      %v3512 = vunpack.c.h.b16 %v3455
      %v3513 = vunpack.c.l.b16 %v3456
      %v3514 = vunpack.c.h.b16 %v3456
      %v3515 = vunpack.c.l.b16 %v3457
      %v3516 = vunpack.c.h.b16 %v3457
      %v3517 = vunpack.c.l.b16 %v3458
      %v3518 = vunpack.c.h.b16 %v3458
      %v3519 = vunpack.c.l.b16 %v3459
      %v3520 = vunpack.c.h.b16 %v3459
      %v3521 = vunpack.c.l.b16 %v3460
      %v3522 = vunpack.c.h.b16 %v3460
      %v3523 = vunpack.c.l.b16 %v3461
      %v3524 = vunpack.c.h.b16 %v3461
      %v3525 = vunpack.c.l.b16 %v3462
      %v3526 = vunpack.c.h.b16 %v3462
      %v3527 = vunpack.c.l.b16 %v3463
      %v3528 = vunpack.c.h.b16 %v3463
      %v3529 = vunpack.c.l.b16 %v3464
      %v3530 = vunpack.c.h.b16 %v3464
      %v3531 = vunpack.c.l.b16 %v3465
      %v3532 = vunpack.c.h.b16 %v3465
      %v3533 = vunpack.c.l.b16 %v3466
      %v3534 = vunpack.c.h.b16 %v3466
      %v3535 = vunpack.c.l.b16 %v3467
      %v3536 = vunpack.c.h.b16 %v3467
      %v3537 = vunpack.c.l.b16 %v3468
      %v3538 = vunpack.c.h.b16 %v3468
      %v3539 = vunpack.c.l.b16 %v3469
      %v3540 = vunpack.c.h.b16 %v3469
      %v3541 = vunpack.c.l.b16 %v3470
      %v3542 = vunpack.c.h.b16 %v3470
      %v3543 = vpack.c.b16 %v3495, %v3495
      %v3544 = vpack.c.b16 %v3496, %v3496
      %v3545 = vpack.c.b16 %v3497, %v3497
      %v3546 = vpack.c.b16 %v3498, %v3498
      %v3547 = vpack.c.b16 %v3499, %v3499
      %v3548 = vpack.c.b16 %v3500, %v3500
      %v3549 = vpack.c.b16 %v3501, %v3501
      %v3550 = vpack.c.b16 %v3502, %v3502
      %v3551 = vpack.c.b16 %v3503, %v3503
      %v3552 = vpack.c.b16 %v3504, %v3504
      %v3553 = vpack.c.b16 %v3505, %v3505
      %v3554 = vpack.c.b16 %v3506, %v3506
      %v3555 = vpack.c.b16 %v3507, %v3507
      %v3556 = vpack.c.b16 %v3508, %v3508
      %v3557 = vpack.c.b16 %v3509, %v3509
      %v3558 = vpack.c.b16 %v3510, %v3510
      %v3559 = vpack.c.b16 %v3511, %v3511
      %v3560 = vpack.c.b16 %v3512, %v3512
      %v3561 = vpack.c.b16 %v3513, %v3513
      %v3562 = vpack.c.b16 %v3514, %v3514
      %v3563 = vpack.c.b16 %v3515, %v3515
      %v3564 = vpack.c.b16 %v3516, %v3516
      %v3565 = vpack.c.b16 %v3517, %v3517
      %v3566 = vpack.c.b16 %v3518, %v3518
      %v3567 = vpack.c.b16 %v3519, %v3519
      %v3568 = vpack.c.b16 %v3520, %v3520
      %v3569 = vpack.c.b16 %v3521, %v3521
      %v3570 = vpack.c.b16 %v3522, %v3522
      %v3571 = vpack.c.b16 %v3523, %v3523
      %v3572 = vpack.c.b16 %v3524, %v3524
      %v3573 = vpack.c.b16 %v3525, %v3525
      %v3574 = vpack.c.b16 %v3526, %v3526
      %v3575 = vpack.c.b16 %v3527, %v3527
      %v3576 = vpack.c.b16 %v3528, %v3528
      %v3577 = vpack.c.b16 %v3529, %v3529
      %v3578 = vpack.c.b16 %v3530, %v3530
      %v3579 = vpack.c.b16 %v3531, %v3531
      %v3580 = vpack.c.b16 %v3532, %v3532
      %v3581 = vpack.c.b16 %v3533, %v3533
      %v3582 = vpack.c.b16 %v3534, %v3534
      %v3583 = vpack.c.b16 %v3535, %v3535
      %v3584 = vpack.c.b16 %v3536, %v3536
      %v3585 = vpack.c.b16 %v3537, %v3537
      %v3586 = vpack.c.b16 %v3538, %v3538
      %v3587 = vpack.c.b16 %v3539, %v3539
      %v3588 = vpack.c.b16 %v3540, %v3540
      %v3589 = vpack.c.b16 %v3541, %v3541
      %v3590 = vpack.c.b16 %v3542, %v3542
      %3639 = vst [vmem:[%s305] sm:$0xf] %v3543
      %3640 = vst [vmem:[%s305 + $0x4] sm:$0xf] %v3544
      %3641 = vst [vmem:[%s305 + $0x8] sm:$0xf] %v3545
      %3642 = vst [vmem:[%s305 + $0xc] sm:$0xf] %v3546
      %3643 = vst [vmem:[%s305 + $0x10] sm:$0xf] %v3547
      %3644 = vst [vmem:[%s305 + $0x14] sm:$0xf] %v3548
      %3645 = vst [vmem:[%s305 + $0x18] sm:$0xf] %v3549
      %3646 = vst [vmem:[%s305 + $0x1c] sm:$0xf] %v3550
      %3647 = vst [vmem:[%s305 + $0x20] sm:$0xf] %v3551
      %3648 = vst [vmem:[%s305 + $0x24] sm:$0xf] %v3552
      %3649 = vst [vmem:[%s305 + $0x28] sm:$0xf] %v3553
      %3650 = vst [vmem:[%s305 + $0x2c] sm:$0xf] %v3554
      %3651 = vst [vmem:[%s305 + $0x30] sm:$0xf] %v3555
      %3652 = vst [vmem:[%s305 + $0x34] sm:$0xf] %v3556
      %3653 = vst [vmem:[%s305 + $0x38] sm:$0xf] %v3557
      %3654 = vst [vmem:[%s305 + $0x3c] sm:$0xf] %v3558
      %3655 = vst [vmem:[%s305 + $0x40] sm:$0xf] %v3559
      %3656 = vst [vmem:[%s305 + $0x44] sm:$0xf] %v3560
      %3657 = vst [vmem:[%s305 + $0x48] sm:$0xf] %v3561
      %3658 = vst [vmem:[%s305 + $0x4c] sm:$0xf] %v3562
      %3659 = vst [vmem:[%s305 + $0x50] sm:$0xf] %v3563
      %3660 = vst [vmem:[%s305 + $0x54] sm:$0xf] %v3564
      %3661 = vst [vmem:[%s305 + $0x58] sm:$0xf] %v3565
      %3662 = vst [vmem:[%s305 + $0x5c] sm:$0xf] %v3566
      %3663 = vst [vmem:[%s305 + $0x60] sm:$0xf] %v3567
      %3664 = vst [vmem:[%s305 + $0x64] sm:$0xf] %v3568
      %3665 = vst [vmem:[%s305 + $0x68] sm:$0xf] %v3569
      %3666 = vst [vmem:[%s305 + $0x6c] sm:$0xf] %v3570
      %3667 = vst [vmem:[%s305 + $0x70] sm:$0xf] %v3571
      %3668 = vst [vmem:[%s305 + $0x74] sm:$0xf] %v3572
      %3669 = vst [vmem:[%s305 + $0x78] sm:$0xf] %v3573
      %3670 = vst [vmem:[%s305 + $0x7c] sm:$0xf] %v3574
      %3671 = vst [vmem:[%s305 + $0x80] sm:$0xf] %v3575
      %3672 = vst [vmem:[%s305 + $0x84] sm:$0xf] %v3576
      %3673 = vst [vmem:[%s305 + $0x88] sm:$0xf] %v3577
      %3674 = vst [vmem:[%s305 + $0x8c] sm:$0xf] %v3578
      %3675 = vst [vmem:[%s305 + $0x90] sm:$0xf] %v3579
      %3676 = vst [vmem:[%s305 + $0x94] sm:$0xf] %v3580
      %3677 = vst [vmem:[%s305 + $0x98] sm:$0xf] %v3581
      %3678 = vst [vmem:[%s305 + $0x9c] sm:$0xf] %v3582
      %3679 = vst [vmem:[%s305 + $0xa0] sm:$0xf] %v3583
      %3680 = vst [vmem:[%s305 + $0xa4] sm:$0xf] %v3584
      %3681 = vst [vmem:[%s305 + $0xa8] sm:$0xf] %v3585
      %3682 = vst [vmem:[%s305 + $0xac] sm:$0xf] %v3586
      %3683 = vst [vmem:[%s305 + $0xb0] sm:$0xf] %v3587
      %3684 = vst [vmem:[%s305 + $0xb4] sm:$0xf] %v3588
      %3685 = vst [vmem:[%s305 + $0xb8] sm:$0xf] %v3589
      %3686 = vst [vmem:[%s305 + $0xbc] sm:$0xf] %v3590
      %p3687 = scmp.lt.s32.totalorder %s19, 1
      %s3688 = scalar_select %p3687, %s19, 1
      %s3689 = smul.addr %s3688, 48
      %s3690 = smul.addr %s3689, 4
      %s3691 = scalar_lea.vmem %s8, %s3690
      // Predicated region
      $region53: #{_lambda_.1} parent=51 // pred_check
        %p3692 = pneg %p210
      $region54: #{_lambda_.1} parent=51 // pred_check_branch
        %3694 = sbr.rel (%p3692) target = $region56
      $region55: #{_lambda_.1} parent=51 // pred_region
        _
      $region56: #{_lambda_.1} parent=51 // pred_fallthru
        _
    $region52: #{_lambda_.1} parent=5 // pred_fallthru
      _
    %p3695 = scmp.le.s32.totalorder 2, %s14
    // Predicated region
    $region57: #{_lambda_.1} parent=5 // pred_check
      %p3696 = pneg %p3695
    $region58: #{_lambda_.1} parent=5 // pred_check_branch
      %3698 = sbr.rel (%p3696) target = $region60
    $region59: #{_lambda_.1} parent=5 // pred_region
      %s3699 = ssub.s32 %s14, 2
      // Predicated region
      $region61: #{_lambda_.1} parent=59 // pred_check
        %p3700 = pneg %p216
      $region62: #{_lambda_.1} parent=59 // pred_check_branch
        %3702 = sbr.rel (%p3700) target = $region64
      $region63: #{_lambda_.1} parent=59 // pred_region
        %p3703 = scmp.lt.s32.totalorder %s20, 1
        %s3704 = scalar_select %p3703, %s20, 1
        %s3705 = smul.addr %s3704, 48
        %s3706 = smul.addr %s3705, 4
        %s3707 = scalar_lea.vmem %s8, %s3706
      $region64: #{_lambda_.1} parent=59 // pred_fallthru
        _
    $region60: #{_lambda_.1} parent=5 // pred_fallthru
      _
  $region6: #{_lambda_.1} parent=0 // loop_footer
    %s18 = sadd.s32 1, %s14
  $region7: #{_lambda_.1} parent=0 // loop_footer_branch
    %13 = sbr.rel target = $region3
  $region8: #{_lambda_.1} parent=0 // loop_exit
    _

</llo_original>
